<compile_context>
chip_gen: v5e
topology: v5e:2x2
jax: 0.10.0
libtpu: 0.0.40
codegen_flags: <defaults>
</compile_context>

<pallas_src>
import math

import jax
import jax.numpy as jnp
from jax.experimental import pallas as pl
from jax.experimental.pallas import tpu as pltpu

# ---- small (but structurally faithful) config ----
D_MODEL    = 128
NHEAD      = 4
HEAD_DIM   = D_MODEL // NHEAD
NUM_LAYERS = 2
DIM_FF     = 256
VOCAB      = 512
MAX_LEN    = 128
LN_EPS     = 1e-5
ATTN_SCALE = 1.0 / math.sqrt(HEAD_DIM)


# ---------------- in-kernel helpers (plain jnp, traced inside Pallas) --------

def _bf16_dot(a_f32, w_bf16):
    """MXU matmul: bf16 operands (weights already bf16), f32 accumulation."""
    return jnp.dot(a_f32.astype(jnp.bfloat16), w_bf16,
                   preferred_element_type=jnp.float32)


def _layer_norm(x, g, b):
    """LayerNorm over last axis (eps=1e-5, affine). x:(M,D), g/b:(1,D), f32."""
    mean = jnp.mean(x, axis=-1, keepdims=True)
    xc = x - mean
    var = jnp.mean(xc * xc, axis=-1, keepdims=True)
    return xc * jax.lax.rsqrt(var + LN_EPS) * g + b


# ---------------- fully fused forward kernel ----------------

def _make_fwd_kernel(batch, seq):
    """Whole forward (embedding -> 2 encoder layers -> vocab proj), one call."""

    def kernel(ids_ref,                      # SMEM (S, B) int32 (scalar prefetch)
               emb_ref, pe_ref,              # f32 (VOCAB, D), (MAX_LEN, D)
               wqkv_ref, bqkv_ref,           # (L, D, 3D) bf16, (L, 1, 3D) f32
               wo_ref, bo_ref,               # (L, D, D)  bf16, (L, 1, D)  f32
               g1_ref, beta1_ref,            # (L, 1, D) f32
               w1_ref, bf1_ref,              # (L, D, FF) bf16, (L, 1, FF) f32
               w2_ref, bf2_ref,              # (L, FF, D) bf16, (L, 1, D)  f32
               g2_ref, beta2_ref,            # (L, 1, D) f32
               fcw_ref, fcb_ref,             # (D, V) bf16, (1, V) f32
               out_ref,                      # (B, S, V) f32
               x_scr):                       # VMEM scratch (B*S, D) f32
        # ---- embedding gather (sqrt(D) pre-folded) + positional encoding ----
        for b in range(batch):
            for s in range(seq):
                tok = ids_ref[s, b]
                x_scr[pl.ds(b * seq + s, 1), :] = (
                    emb_ref[pl.ds(tok, 1), :] + pe_ref[pl.ds(s, 1), :])
        x = x_scr[...]                                            # (B*S, D) f32

        # ---- encoder layers (post-norm, ReLU FF; dropout = identity) ----
        for l in range(NUM_LAYERS):
            qkv = _bf16_dot(x, wqkv_ref[l]) + bqkv_ref[l]         # (B*S, 3D)
            q = qkv[:, 0:D_MODEL]            # attention scale pre-folded in W
            k = qkv[:, D_MODEL:2 * D_MODEL]
            v = qkv[:, 2 * D_MODEL:3 * D_MODEL]
            wo = wo_ref[l]                                        # (D, D) bf16

            # Per-head attention, batched over the batch dim; out-projection
            # folded into the head loop -> each partial is a lane-dense
            # (B*S, 128) tile.
            proj = jnp.zeros((batch * seq, D_MODEL), jnp.float32)
            for h in range(NHEAD):
                c0 = h * HEAD_DIM
                qh = q[:, c0:c0 + HEAD_DIM].reshape(
                    batch, seq, HEAD_DIM).astype(jnp.bfloat16)
                kh = k[:, c0:c0 + HEAD_DIM].reshape(
                    batch, seq, HEAD_DIM).astype(jnp.bfloat16)
                vh = v[:, c0:c0 + HEAD_DIM].reshape(
                    batch, seq, HEAD_DIM).astype(jnp.bfloat16)
                sc = jnp.einsum('bqd,bkd->bqk', qh, kh,
                                preferred_element_type=jnp.float32)  # (B,S,S)
                m = jnp.max(sc, axis=-1, keepdims=True)
                p = jnp.exp(sc - m)
                p = p * pl.reciprocal(jnp.sum(p, axis=-1, keepdims=True),
                                      approx=True)
                oh = jnp.einsum('bqk,bkd->bqd', p.astype(jnp.bfloat16), vh,
                                preferred_element_type=jnp.float32)  # (B,S,Dh)
                proj = proj + _bf16_dot(oh.reshape(batch * seq, HEAD_DIM),
                                        wo[c0:c0 + HEAD_DIM, :])
            attn = proj + bo_ref[l]

            # residual + LN1
            h1 = _layer_norm(x + attn, g1_ref[l], beta1_ref[l])

            # feed-forward
            f = _bf16_dot(h1, w1_ref[l]) + bf1_ref[l]
            f = jnp.maximum(f, 0.0)
            f = _bf16_dot(f, w2_ref[l]) + bf2_ref[l]

            # residual + LN2
            x = _layer_norm(h1 + f, g2_ref[l], beta2_ref[l])

        # ---- final vocab projection ----
        logits = _bf16_dot(x, fcw_ref[...]) + fcb_ref[...]        # (B*S, V)
        out_ref[...] = logits.reshape(batch, seq, VOCAB).astype(out_ref.dtype)

    return kernel


def transformer_forward(params, src):
    """src: (S, B) int32 token ids -> logits (S, B, VOCAB)."""
    S, B = src.shape
    D, L = D_MODEL, NUM_LAYERS
    assert S <= MAX_LEN and S % 8 == 0, "seq must be a multiple of 8 sublanes"

    kernel = _make_fwd_kernel(B, S)

    def rep2(shape):
        return pl.BlockSpec(shape, lambda i, ids: (0, 0))

    def rep3(shape):
        return pl.BlockSpec(shape, lambda i, ids: (0, 0, 0))

    out = pl.pallas_call(
        kernel,
        out_shape=jax.ShapeDtypeStruct((B, S, VOCAB), jnp.float32),
        grid_spec=pltpu.PrefetchScalarGridSpec(
            num_scalar_prefetch=1,               # token ids -> SMEM
            grid=(1,),                           # whole forward in one step
            in_specs=[
                rep2((VOCAB, D)),                # embedding (pre-scaled)
                rep2((MAX_LEN, D)),              # positional encoding
                rep3((L, D, 3 * D)), rep3((L, 1, 3 * D)),   # in_proj w/b
                rep3((L, D, D)), rep3((L, 1, D)),           # out_proj w/b
                rep3((L, 1, D)), rep3((L, 1, D)),           # ln1 g/b
                rep3((L, D, DIM_FF)), rep3((L, 1, DIM_FF)), # ff1 w/b
                rep3((L, DIM_FF, D)), rep3((L, 1, D)),      # ff2 w/b
                rep3((L, 1, D)), rep3((L, 1, D)),           # ln2 g/b
                rep2((D, VOCAB)), rep2((1, VOCAB)),         # fc w/b
            ],
            out_specs=pl.BlockSpec((B, S, VOCAB), lambda i, ids: (0, 0, 0)),
            scratch_shapes=[pltpu.VMEM((B * S, D), jnp.float32)]),
        compiler_params=pltpu.CompilerParams(
            dimension_semantics=("arbitrary",)),
    )(src.astype(jnp.int32),
      params["embedding_scaled"], params["pe"],
      params["wqkv"], params["bqkv"], params["wo"], params["bo"],
      params["ln1_g"], params["ln1_b"], params["ff1_w"], params["ff1_b"],
      params["ff2_w"], params["ff2_b"], params["ln2_g"], params["ln2_b"],
      params["fc_w"], params["fc_b"])

    # tiny (B,S,V)->(S,B,V) layout fix at the boundary (32 KiB)
    return jnp.transpose(out, (1, 0, 2))


# ---------------- deterministic parameter init ----------------

def init_params(key):
    def nrm(k, shape, scale=0.02):
        return jax.random.normal(k, shape, jnp.float32) * scale

    keys = jax.random.split(key, 3 + NUM_LAYERS)
    params = {}

    # embedding table with sqrt(d_model) scale pre-folded
    params["embedding_scaled"] = nrm(keys[0], (VOCAB, D_MODEL)) \
        * math.sqrt(D_MODEL)

    # sinusoidal positional-encoding buffer, (MAX_LEN, D)
    position = jnp.arange(MAX_LEN, dtype=jnp.float32)[:, None]
    div_term = jnp.exp(jnp.arange(0, D_MODEL, 2, dtype=jnp.float32)
                       * (-math.log(10000.0) / D_MODEL))
    pe = jnp.zeros((MAX_LEN, D_MODEL), jnp.float32)
    pe = pe.at[:, 0::2].set(jnp.sin(position * div_term))
    pe = pe.at[:, 1::2].set(jnp.cos(position * div_term))
    params["pe"] = pe

    wqkv, bqkv, wo, bo = [], [], [], []
    g1, b1, w1, bf1, w2, bf2, g2, b2 = ([] for _ in range(8))
    for l in range(NUM_LAYERS):
        k = jax.random.split(keys[1 + l], 8)
        w_in = nrm(k[0], (D_MODEL, 3 * D_MODEL))
        b_in = nrm(k[1], (3 * D_MODEL,))
        # pre-fold the 1/sqrt(head_dim) attention scale into the q columns
        w_in = w_in.at[:, :D_MODEL].multiply(ATTN_SCALE)
        b_in = b_in.at[:D_MODEL].multiply(ATTN_SCALE)
        wqkv.append(w_in.astype(jnp.bfloat16))
        bqkv.append(b_in.reshape(1, 3 * D_MODEL))
        wo.append(nrm(k[2], (D_MODEL, D_MODEL)).astype(jnp.bfloat16))
        bo.append(nrm(k[3], (D_MODEL,)).reshape(1, D_MODEL))
        w1.append(nrm(k[4], (D_MODEL, DIM_FF)).astype(jnp.bfloat16))
        bf1.append(nrm(k[5], (DIM_FF,)).reshape(1, DIM_FF))
        w2.append(nrm(k[6], (DIM_FF, D_MODEL)).astype(jnp.bfloat16))
        bf2.append(nrm(k[7], (D_MODEL,)).reshape(1, D_MODEL))
        g1.append(jnp.ones((1, D_MODEL), jnp.float32))
        b1.append(jnp.zeros((1, D_MODEL), jnp.float32))
        g2.append(jnp.ones((1, D_MODEL), jnp.float32))
        b2.append(jnp.zeros((1, D_MODEL), jnp.float32))

    stk = lambda xs: jnp.stack(xs, axis=0)
    params.update({
        "wqkv": stk(wqkv), "bqkv": stk(bqkv), "wo": stk(wo), "bo": stk(bo),
        "ln1_g": stk(g1), "ln1_b": stk(b1),
        "ff1_w": stk(w1), "ff1_b": stk(bf1),
        "ff2_w": stk(w2), "ff2_b": stk(bf2),
        "ln2_g": stk(g2), "ln2_b": stk(b2),
    })

    kfc = jax.random.split(keys[1 + NUM_LAYERS], 2)
    params["fc_w"] = nrm(kfc[0], (D_MODEL, VOCAB)).astype(jnp.bfloat16)
    params["fc_b"] = nrm(kfc[1], (VOCAB,)).reshape(1, VOCAB)
    return params


if __name__ == "__main__":
    key = jax.random.PRNGKey(0)
    pkey, dkey = jax.random.split(key)
    params = init_params(pkey)

    S, B = 8, 2   # seq=8, batch=2 (PyTorch non-batch-first: src is (S, B) ids)
    src = jax.random.randint(dkey, (S, B), 0, VOCAB, dtype=jnp.int32)

    out = jax.jit(transformer_forward)(params, src)
    out = jax.block_until_ready(out)
    assert out.shape == (S, B, VOCAB), out.shape
    assert bool(jnp.all(jnp.isfinite(out)))
    print("KERNEL_OK")
</pallas_src>

<mosaic_0001>
module attributes {stable_mosaic.version = 11 : i64} {
  func.func @kernel(%arg0: i32, %arg1: memref<8x2xi32, #tpu.memory_space<smem>>, %arg2: memref<512x128xf32, #tpu.memory_space<vmem>>, %arg3: memref<128x128xf32, #tpu.memory_space<vmem>>, %arg4: memref<2x128x384xbf16, #tpu.memory_space<vmem>>, %arg5: memref<2x1x384xf32, #tpu.memory_space<vmem>>, %arg6: memref<2x128x128xbf16, #tpu.memory_space<vmem>>, %arg7: memref<2x1x128xf32, #tpu.memory_space<vmem>>, %arg8: memref<2x1x128xf32, #tpu.memory_space<vmem>>, %arg9: memref<2x1x128xf32, #tpu.memory_space<vmem>>, %arg10: memref<2x128x256xbf16, #tpu.memory_space<vmem>>, %arg11: memref<2x1x256xf32, #tpu.memory_space<vmem>>, %arg12: memref<2x256x128xbf16, #tpu.memory_space<vmem>>, %arg13: memref<2x1x128xf32, #tpu.memory_space<vmem>>, %arg14: memref<2x1x128xf32, #tpu.memory_space<vmem>>, %arg15: memref<2x1x128xf32, #tpu.memory_space<vmem>>, %arg16: memref<128x512xbf16, #tpu.memory_space<vmem>>, %arg17: memref<1x512xf32, #tpu.memory_space<vmem>>, %arg18: memref<2x8x512xf32, #tpu.memory_space<vmem>>, %arg19: memref<16x128xf32, #tpu.memory_space<vmem>>) attributes {dimension_semantics = [#tpu.dimension_semantics<arbitrary>], iteration_bounds = array<i64: 1>, scalar_prefetch = 1 : i64, scratch_operands = 1 : i64, tpu.core_type = #tpu.core_type<tc>, window_params = [{pipeline_mode = #tpu.pipeline_mode<synchronous>, transform_indices = @transform_0, window_bounds = array<i64: 512, 128>}, {pipeline_mode = #tpu.pipeline_mode<synchronous>, transform_indices = @transform_1, window_bounds = array<i64: 128, 128>}, {pipeline_mode = #tpu.pipeline_mode<synchronous>, transform_indices = @transform_2, window_bounds = array<i64: 2, 128, 384>}, {pipeline_mode = #tpu.pipeline_mode<synchronous>, transform_indices = @transform_3, window_bounds = array<i64: 2, 1, 384>}, {pipeline_mode = #tpu.pipeline_mode<synchronous>, transform_indices = @transform_4, window_bounds = array<i64: 2, 128, 128>}, {pipeline_mode = #tpu.pipeline_mode<synchronous>, transform_indices = @transform_5, window_bounds = array<i64: 2, 1, 128>}, {pipeline_mode = #tpu.pipeline_mode<synchronous>, transform_indices = @transform_6, window_bounds = array<i64: 2, 1, 128>}, {pipeline_mode = #tpu.pipeline_mode<synchronous>, transform_indices = @transform_7, window_bounds = array<i64: 2, 1, 128>}, {pipeline_mode = #tpu.pipeline_mode<synchronous>, transform_indices = @transform_8, window_bounds = array<i64: 2, 128, 256>}, {pipeline_mode = #tpu.pipeline_mode<synchronous>, transform_indices = @transform_9, window_bounds = array<i64: 2, 1, 256>}, {pipeline_mode = #tpu.pipeline_mode<synchronous>, transform_indices = @transform_10, window_bounds = array<i64: 2, 256, 128>}, {pipeline_mode = #tpu.pipeline_mode<synchronous>, transform_indices = @transform_11, window_bounds = array<i64: 2, 1, 128>}, {pipeline_mode = #tpu.pipeline_mode<synchronous>, transform_indices = @transform_12, window_bounds = array<i64: 2, 1, 128>}, {pipeline_mode = #tpu.pipeline_mode<synchronous>, transform_indices = @transform_13, window_bounds = array<i64: 2, 1, 128>}, {pipeline_mode = #tpu.pipeline_mode<synchronous>, transform_indices = @transform_14, window_bounds = array<i64: 128, 512>}, {pipeline_mode = #tpu.pipeline_mode<synchronous>, transform_indices = @transform_15, window_bounds = array<i64: 1, 512>}, {pipeline_mode = #tpu.pipeline_mode<synchronous>, transform_indices = @transform_16, window_bounds = array<i64: 2, 8, 512>}]} {
    %c0 = arith.constant 0 : index
    %c0_0 = arith.constant 0 : index
    %0 = memref.load %arg1[%c0, %c0_0] : memref<8x2xi32, #tpu.memory_space<smem>>
    %1 = arith.index_cast %0 : i32 to index
    %c0_1 = arith.constant 0 : index
    %2 = vector.load %arg2[%1, %c0_1] : memref<512x128xf32, #tpu.memory_space<vmem>>, vector<1x128xf32>
    %c0_2 = arith.constant 0 : index
    %c0_3 = arith.constant 0 : index
    %3 = vector.load %arg3[%c0_2, %c0_3] : memref<128x128xf32, #tpu.memory_space<vmem>>, vector<1x128xf32>
    %4 = arith.addf %2, %3 : vector<1x128xf32>
    %c0_4 = arith.constant 0 : index
    %c0_5 = arith.constant 0 : index
    %5 = vector.load %arg19[%c0_4, %c0_5] : memref<16x128xf32, #tpu.memory_space<vmem>>, vector<1x128xf32>
    tpu.vector_store %arg19[%c0_4, %c0_5], %4 {strides = array<i32>} : memref<16x128xf32, #tpu.memory_space<vmem>>, vector<1x128xf32>,
    %c1 = arith.constant 1 : index
    %c0_6 = arith.constant 0 : index
    %6 = memref.load %arg1[%c1, %c0_6] : memref<8x2xi32, #tpu.memory_space<smem>>
    %7 = arith.index_cast %6 : i32 to index
    %c0_7 = arith.constant 0 : index
    %8 = vector.load %arg2[%7, %c0_7] : memref<512x128xf32, #tpu.memory_space<vmem>>, vector<1x128xf32>
    %c1_8 = arith.constant 1 : index
    %c0_9 = arith.constant 0 : index
    %9 = vector.load %arg3[%c1_8, %c0_9] : memref<128x128xf32, #tpu.memory_space<vmem>>, vector<1x128xf32>
    %10 = arith.addf %8, %9 : vector<1x128xf32>
    %c1_10 = arith.constant 1 : index
    %c0_11 = arith.constant 0 : index
    %11 = vector.load %arg19[%c1_10, %c0_11] : memref<16x128xf32, #tpu.memory_space<vmem>>, vector<1x128xf32>
    tpu.vector_store %arg19[%c1_10, %c0_11], %10 {strides = array<i32>} : memref<16x128xf32, #tpu.memory_space<vmem>>, vector<1x128xf32>,
    %c2 = arith.constant 2 : index
    %c0_12 = arith.constant 0 : index
    %12 = memref.load %arg1[%c2, %c0_12] : memref<8x2xi32, #tpu.memory_space<smem>>
    %13 = arith.index_cast %12 : i32 to index
    %c0_13 = arith.constant 0 : index
    %14 = vector.load %arg2[%13, %c0_13] : memref<512x128xf32, #tpu.memory_space<vmem>>, vector<1x128xf32>
    %c2_14 = arith.constant 2 : index
    %c0_15 = arith.constant 0 : index
    %15 = vector.load %arg3[%c2_14, %c0_15] : memref<128x128xf32, #tpu.memory_space<vmem>>, vector<1x128xf32>
    %16 = arith.addf %14, %15 : vector<1x128xf32>
    %c2_16 = arith.constant 2 : index
    %c0_17 = arith.constant 0 : index
    %17 = vector.load %arg19[%c2_16, %c0_17] : memref<16x128xf32, #tpu.memory_space<vmem>>, vector<1x128xf32>
    tpu.vector_store %arg19[%c2_16, %c0_17], %16 {strides = array<i32>} : memref<16x128xf32, #tpu.memory_space<vmem>>, vector<1x128xf32>,
    %c3 = arith.constant 3 : index
    %c0_18 = arith.constant 0 : index
    %18 = memref.load %arg1[%c3, %c0_18] : memref<8x2xi32, #tpu.memory_space<smem>>
    %19 = arith.index_cast %18 : i32 to index
    %c0_19 = arith.constant 0 : index
    %20 = vector.load %arg2[%19, %c0_19] : memref<512x128xf32, #tpu.memory_space<vmem>>, vector<1x128xf32>
    %c3_20 = arith.constant 3 : index
    %c0_21 = arith.constant 0 : index
    %21 = vector.load %arg3[%c3_20, %c0_21] : memref<128x128xf32, #tpu.memory_space<vmem>>, vector<1x128xf32>
    %22 = arith.addf %20, %21 : vector<1x128xf32>
    %c3_22 = arith.constant 3 : index
    %c0_23 = arith.constant 0 : index
    %23 = vector.load %arg19[%c3_22, %c0_23] : memref<16x128xf32, #tpu.memory_space<vmem>>, vector<1x128xf32>
    tpu.vector_store %arg19[%c3_22, %c0_23], %22 {strides = array<i32>} : memref<16x128xf32, #tpu.memory_space<vmem>>, vector<1x128xf32>,
    %c4 = arith.constant 4 : index
    %c0_24 = arith.constant 0 : index
    %24 = memref.load %arg1[%c4, %c0_24] : memref<8x2xi32, #tpu.memory_space<smem>>
    %25 = arith.index_cast %24 : i32 to index
    %c0_25 = arith.constant 0 : index
    %26 = vector.load %arg2[%25, %c0_25] : memref<512x128xf32, #tpu.memory_space<vmem>>, vector<1x128xf32>
    %c4_26 = arith.constant 4 : index
    %c0_27 = arith.constant 0 : index
    %27 = vector.load %arg3[%c4_26, %c0_27] : memref<128x128xf32, #tpu.memory_space<vmem>>, vector<1x128xf32>
    %28 = arith.addf %26, %27 : vector<1x128xf32>
    %c4_28 = arith.constant 4 : index
    %c0_29 = arith.constant 0 : index
    %29 = vector.load %arg19[%c4_28, %c0_29] : memref<16x128xf32, #tpu.memory_space<vmem>>, vector<1x128xf32>
    tpu.vector_store %arg19[%c4_28, %c0_29], %28 {strides = array<i32>} : memref<16x128xf32, #tpu.memory_space<vmem>>, vector<1x128xf32>,
    %c5 = arith.constant 5 : index
    %c0_30 = arith.constant 0 : index
    %30 = memref.load %arg1[%c5, %c0_30] : memref<8x2xi32, #tpu.memory_space<smem>>
    %31 = arith.index_cast %30 : i32 to index
    %c0_31 = arith.constant 0 : index
    %32 = vector.load %arg2[%31, %c0_31] : memref<512x128xf32, #tpu.memory_space<vmem>>, vector<1x128xf32>
    %c5_32 = arith.constant 5 : index
    %c0_33 = arith.constant 0 : index
    %33 = vector.load %arg3[%c5_32, %c0_33] : memref<128x128xf32, #tpu.memory_space<vmem>>, vector<1x128xf32>
    %34 = arith.addf %32, %33 : vector<1x128xf32>
    %c5_34 = arith.constant 5 : index
    %c0_35 = arith.constant 0 : index
    %35 = vector.load %arg19[%c5_34, %c0_35] : memref<16x128xf32, #tpu.memory_space<vmem>>, vector<1x128xf32>
    tpu.vector_store %arg19[%c5_34, %c0_35], %34 {strides = array<i32>} : memref<16x128xf32, #tpu.memory_space<vmem>>, vector<1x128xf32>,
    %c6 = arith.constant 6 : index
    %c0_36 = arith.constant 0 : index
    %36 = memref.load %arg1[%c6, %c0_36] : memref<8x2xi32, #tpu.memory_space<smem>>
    %37 = arith.index_cast %36 : i32 to index
    %c0_37 = arith.constant 0 : index
    %38 = vector.load %arg2[%37, %c0_37] : memref<512x128xf32, #tpu.memory_space<vmem>>, vector<1x128xf32>
    %c6_38 = arith.constant 6 : index
    %c0_39 = arith.constant 0 : index
    %39 = vector.load %arg3[%c6_38, %c0_39] : memref<128x128xf32, #tpu.memory_space<vmem>>, vector<1x128xf32>
    %40 = arith.addf %38, %39 : vector<1x128xf32>
    %c6_40 = arith.constant 6 : index
    %c0_41 = arith.constant 0 : index
    %41 = vector.load %arg19[%c6_40, %c0_41] : memref<16x128xf32, #tpu.memory_space<vmem>>, vector<1x128xf32>
    tpu.vector_store %arg19[%c6_40, %c0_41], %40 {strides = array<i32>} : memref<16x128xf32, #tpu.memory_space<vmem>>, vector<1x128xf32>,
    %c7 = arith.constant 7 : index
    %c0_42 = arith.constant 0 : index
    %42 = memref.load %arg1[%c7, %c0_42] : memref<8x2xi32, #tpu.memory_space<smem>>
    %43 = arith.index_cast %42 : i32 to index
    %c0_43 = arith.constant 0 : index
    %44 = vector.load %arg2[%43, %c0_43] : memref<512x128xf32, #tpu.memory_space<vmem>>, vector<1x128xf32>
    %c7_44 = arith.constant 7 : index
    %c0_45 = arith.constant 0 : index
    %45 = vector.load %arg3[%c7_44, %c0_45] : memref<128x128xf32, #tpu.memory_space<vmem>>, vector<1x128xf32>
    %46 = arith.addf %44, %45 : vector<1x128xf32>
    %c7_46 = arith.constant 7 : index
    %c0_47 = arith.constant 0 : index
    %47 = vector.load %arg19[%c7_46, %c0_47] : memref<16x128xf32, #tpu.memory_space<vmem>>, vector<1x128xf32>
    tpu.vector_store %arg19[%c7_46, %c0_47], %46 {strides = array<i32>} : memref<16x128xf32, #tpu.memory_space<vmem>>, vector<1x128xf32>,
    %c0_48 = arith.constant 0 : index
    %c1_49 = arith.constant 1 : index
    %48 = memref.load %arg1[%c0_48, %c1_49] : memref<8x2xi32, #tpu.memory_space<smem>>
    %49 = arith.index_cast %48 : i32 to index
    %c0_50 = arith.constant 0 : index
    %50 = vector.load %arg2[%49, %c0_50] : memref<512x128xf32, #tpu.memory_space<vmem>>, vector<1x128xf32>
    %c0_51 = arith.constant 0 : index
    %c0_52 = arith.constant 0 : index
    %51 = vector.load %arg3[%c0_51, %c0_52] : memref<128x128xf32, #tpu.memory_space<vmem>>, vector<1x128xf32>
    %52 = arith.addf %50, %51 : vector<1x128xf32>
    %c8 = arith.constant 8 : index
    %c0_53 = arith.constant 0 : index
    %53 = vector.load %arg19[%c8, %c0_53] : memref<16x128xf32, #tpu.memory_space<vmem>>, vector<1x128xf32>
    tpu.vector_store %arg19[%c8, %c0_53], %52 {strides = array<i32>} : memref<16x128xf32, #tpu.memory_space<vmem>>, vector<1x128xf32>,
    %c1_54 = arith.constant 1 : index
    %c1_55 = arith.constant 1 : index
    %54 = memref.load %arg1[%c1_54, %c1_55] : memref<8x2xi32, #tpu.memory_space<smem>>
    %55 = arith.index_cast %54 : i32 to index
    %c0_56 = arith.constant 0 : index
    %56 = vector.load %arg2[%55, %c0_56] : memref<512x128xf32, #tpu.memory_space<vmem>>, vector<1x128xf32>
    %c1_57 = arith.constant 1 : index
    %c0_58 = arith.constant 0 : index
    %57 = vector.load %arg3[%c1_57, %c0_58] : memref<128x128xf32, #tpu.memory_space<vmem>>, vector<1x128xf32>
    %58 = arith.addf %56, %57 : vector<1x128xf32>
    %c9 = arith.constant 9 : index
    %c0_59 = arith.constant 0 : index
    %59 = vector.load %arg19[%c9, %c0_59] : memref<16x128xf32, #tpu.memory_space<vmem>>, vector<1x128xf32>
    tpu.vector_store %arg19[%c9, %c0_59], %58 {strides = array<i32>} : memref<16x128xf32, #tpu.memory_space<vmem>>, vector<1x128xf32>,
    %c2_60 = arith.constant 2 : index
    %c1_61 = arith.constant 1 : index
    %60 = memref.load %arg1[%c2_60, %c1_61] : memref<8x2xi32, #tpu.memory_space<smem>>
    %61 = arith.index_cast %60 : i32 to index
    %c0_62 = arith.constant 0 : index
    %62 = vector.load %arg2[%61, %c0_62] : memref<512x128xf32, #tpu.memory_space<vmem>>, vector<1x128xf32>
    %c2_63 = arith.constant 2 : index
    %c0_64 = arith.constant 0 : index
    %63 = vector.load %arg3[%c2_63, %c0_64] : memref<128x128xf32, #tpu.memory_space<vmem>>, vector<1x128xf32>
    %64 = arith.addf %62, %63 : vector<1x128xf32>
    %c10 = arith.constant 10 : index
    %c0_65 = arith.constant 0 : index
    %65 = vector.load %arg19[%c10, %c0_65] : memref<16x128xf32, #tpu.memory_space<vmem>>, vector<1x128xf32>
    tpu.vector_store %arg19[%c10, %c0_65], %64 {strides = array<i32>} : memref<16x128xf32, #tpu.memory_space<vmem>>, vector<1x128xf32>,
    %c3_66 = arith.constant 3 : index
    %c1_67 = arith.constant 1 : index
    %66 = memref.load %arg1[%c3_66, %c1_67] : memref<8x2xi32, #tpu.memory_space<smem>>
    %67 = arith.index_cast %66 : i32 to index
    %c0_68 = arith.constant 0 : index
    %68 = vector.load %arg2[%67, %c0_68] : memref<512x128xf32, #tpu.memory_space<vmem>>, vector<1x128xf32>
    %c3_69 = arith.constant 3 : index
    %c0_70 = arith.constant 0 : index
    %69 = vector.load %arg3[%c3_69, %c0_70] : memref<128x128xf32, #tpu.memory_space<vmem>>, vector<1x128xf32>
    %70 = arith.addf %68, %69 : vector<1x128xf32>
    %c11 = arith.constant 11 : index
    %c0_71 = arith.constant 0 : index
    %71 = vector.load %arg19[%c11, %c0_71] : memref<16x128xf32, #tpu.memory_space<vmem>>, vector<1x128xf32>
    tpu.vector_store %arg19[%c11, %c0_71], %70 {strides = array<i32>} : memref<16x128xf32, #tpu.memory_space<vmem>>, vector<1x128xf32>,
    %c4_72 = arith.constant 4 : index
    %c1_73 = arith.constant 1 : index
    %72 = memref.load %arg1[%c4_72, %c1_73] : memref<8x2xi32, #tpu.memory_space<smem>>
    %73 = arith.index_cast %72 : i32 to index
    %c0_74 = arith.constant 0 : index
    %74 = vector.load %arg2[%73, %c0_74] : memref<512x128xf32, #tpu.memory_space<vmem>>, vector<1x128xf32>
    %c4_75 = arith.constant 4 : index
    %c0_76 = arith.constant 0 : index
    %75 = vector.load %arg3[%c4_75, %c0_76] : memref<128x128xf32, #tpu.memory_space<vmem>>, vector<1x128xf32>
    %76 = arith.addf %74, %75 : vector<1x128xf32>
    %c12 = arith.constant 12 : index
    %c0_77 = arith.constant 0 : index
    %77 = vector.load %arg19[%c12, %c0_77] : memref<16x128xf32, #tpu.memory_space<vmem>>, vector<1x128xf32>
    tpu.vector_store %arg19[%c12, %c0_77], %76 {strides = array<i32>} : memref<16x128xf32, #tpu.memory_space<vmem>>, vector<1x128xf32>,
    %c5_78 = arith.constant 5 : index
    %c1_79 = arith.constant 1 : index
    %78 = memref.load %arg1[%c5_78, %c1_79] : memref<8x2xi32, #tpu.memory_space<smem>>
    %79 = arith.index_cast %78 : i32 to index
    %c0_80 = arith.constant 0 : index
    %80 = vector.load %arg2[%79, %c0_80] : memref<512x128xf32, #tpu.memory_space<vmem>>, vector<1x128xf32>
    %c5_81 = arith.constant 5 : index
    %c0_82 = arith.constant 0 : index
    %81 = vector.load %arg3[%c5_81, %c0_82] : memref<128x128xf32, #tpu.memory_space<vmem>>, vector<1x128xf32>
    %82 = arith.addf %80, %81 : vector<1x128xf32>
    %c13 = arith.constant 13 : index
    %c0_83 = arith.constant 0 : index
    %83 = vector.load %arg19[%c13, %c0_83] : memref<16x128xf32, #tpu.memory_space<vmem>>, vector<1x128xf32>
    tpu.vector_store %arg19[%c13, %c0_83], %82 {strides = array<i32>} : memref<16x128xf32, #tpu.memory_space<vmem>>, vector<1x128xf32>,
    %c6_84 = arith.constant 6 : index
    %c1_85 = arith.constant 1 : index
    %84 = memref.load %arg1[%c6_84, %c1_85] : memref<8x2xi32, #tpu.memory_space<smem>>
    %85 = arith.index_cast %84 : i32 to index
    %c0_86 = arith.constant 0 : index
    %86 = vector.load %arg2[%85, %c0_86] : memref<512x128xf32, #tpu.memory_space<vmem>>, vector<1x128xf32>
    %c6_87 = arith.constant 6 : index
    %c0_88 = arith.constant 0 : index
    %87 = vector.load %arg3[%c6_87, %c0_88] : memref<128x128xf32, #tpu.memory_space<vmem>>, vector<1x128xf32>
    %88 = arith.addf %86, %87 : vector<1x128xf32>
    %c14 = arith.constant 14 : index
    %c0_89 = arith.constant 0 : index
    %89 = vector.load %arg19[%c14, %c0_89] : memref<16x128xf32, #tpu.memory_space<vmem>>, vector<1x128xf32>
    tpu.vector_store %arg19[%c14, %c0_89], %88 {strides = array<i32>} : memref<16x128xf32, #tpu.memory_space<vmem>>, vector<1x128xf32>,
    %c7_90 = arith.constant 7 : index
    %c1_91 = arith.constant 1 : index
    %90 = memref.load %arg1[%c7_90, %c1_91] : memref<8x2xi32, #tpu.memory_space<smem>>
    %91 = arith.index_cast %90 : i32 to index
    %c0_92 = arith.constant 0 : index
    %92 = vector.load %arg2[%91, %c0_92] : memref<512x128xf32, #tpu.memory_space<vmem>>, vector<1x128xf32>
    %c7_93 = arith.constant 7 : index
    %c0_94 = arith.constant 0 : index
    %93 = vector.load %arg3[%c7_93, %c0_94] : memref<128x128xf32, #tpu.memory_space<vmem>>, vector<1x128xf32>
    %94 = arith.addf %92, %93 : vector<1x128xf32>
    %c15 = arith.constant 15 : index
    %c0_95 = arith.constant 0 : index
    %95 = vector.load %arg19[%c15, %c0_95] : memref<16x128xf32, #tpu.memory_space<vmem>>, vector<1x128xf32>
    tpu.vector_store %arg19[%c15, %c0_95], %94 {strides = array<i32>} : memref<16x128xf32, #tpu.memory_space<vmem>>, vector<1x128xf32>,
    %c0_96 = arith.constant 0 : index
    %c0_97 = arith.constant 0 : index
    %96 = vector.load %arg19[%c0_96, %c0_97] : memref<16x128xf32, #tpu.memory_space<vmem>>, vector<16x128xf32>
    %c0_98 = arith.constant 0 : index
    %c0_99 = arith.constant 0 : index
    %c0_100 = arith.constant 0 : index
    %97 = vector.load %arg4[%c0_98, %c0_99, %c0_100] : memref<2x128x384xbf16, #tpu.memory_space<vmem>>, vector<1x128x384xbf16>
    %98 = vector.shape_cast %97 : vector<1x128x384xbf16> to vector<128x384xbf16>
    %99 = arith.truncf %96 : vector<16x128xf32> to vector<16x128xbf16>
    %cst = arith.constant dense<0.000000e+00> : vector<16x384xf32>
    %100 = tpu.matmul %99, %98, %cst {dimension_numbers = #tpu.dot_dimension_numbers<[1], [0], [0], [1], [0, 0, 1, 1], [], []>} : vector<16x128xbf16>, vector<128x384xbf16>, vector<16x384xf32> -> vector<16x384xf32>
    %c0_101 = arith.constant 0 : index
    %c0_102 = arith.constant 0 : index
    %c0_103 = arith.constant 0 : index
    %101 = vector.load %arg5[%c0_101, %c0_102, %c0_103] : memref<2x1x384xf32, #tpu.memory_space<vmem>>, vector<1x1x384xf32>
    %102 = vector.shape_cast %101 : vector<1x1x384xf32> to vector<1x384xf32>
    %103 = vector.broadcast %102 : vector<1x384xf32> to vector<16x384xf32>
    %104 = arith.addf %100, %103 : vector<16x384xf32>
    %105 = vector.extract_strided_slice %104 {offsets = [0, 0], sizes = [16, 128], strides = [1, 1]} : vector<16x384xf32> to vector<16x128xf32>
    %106 = vector.extract_strided_slice %104 {offsets = [0, 128], sizes = [16, 128], strides = [1, 1]} : vector<16x384xf32> to vector<16x128xf32>
    %107 = vector.extract_strided_slice %104 {offsets = [0, 256], sizes = [16, 128], strides = [1, 1]} : vector<16x384xf32> to vector<16x128xf32>
    %c0_104 = arith.constant 0 : index
    %c0_105 = arith.constant 0 : index
    %c0_106 = arith.constant 0 : index
    %108 = vector.load %arg6[%c0_104, %c0_105, %c0_106] : memref<2x128x128xbf16, #tpu.memory_space<vmem>>, vector<1x128x128xbf16>
    %109 = vector.shape_cast %108 : vector<1x128x128xbf16> to vector<128x128xbf16>
    %cst_107 = arith.constant 0.000000e+00 : f32
    %110 = vector.broadcast %cst_107 : f32 to vector<16x128xf32>
    %111 = vector.extract_strided_slice %105 {offsets = [0, 0], sizes = [16, 32], strides = [1, 1]} : vector<16x128xf32> to vector<16x32xf32>
    %112 = vector.shape_cast %111 : vector<16x32xf32> to vector<2x8x32xf32>
    %113 = arith.truncf %112 : vector<2x8x32xf32> to vector<2x8x32xbf16>
    %114 = vector.extract_strided_slice %106 {offsets = [0, 0], sizes = [16, 32], strides = [1, 1]} : vector<16x128xf32> to vector<16x32xf32>
    %115 = vector.shape_cast %114 : vector<16x32xf32> to vector<2x8x32xf32>
    %116 = arith.truncf %115 : vector<2x8x32xf32> to vector<2x8x32xbf16>
    %117 = vector.extract_strided_slice %107 {offsets = [0, 0], sizes = [16, 32], strides = [1, 1]} : vector<16x128xf32> to vector<16x32xf32>
    %118 = vector.shape_cast %117 : vector<16x32xf32> to vector<2x8x32xf32>
    %119 = arith.truncf %118 : vector<2x8x32xf32> to vector<2x8x32xbf16>
    "tpu.trace_start"() <{level = 10 : i32, message = "bqd,bkd->bqk"}> : () -> ()
    %cst_108 = arith.constant dense<0.000000e+00> : vector<2x8x8xf32>
    %120 = tpu.matmul %113, %116, %cst_108 {dimension_numbers = #tpu.dot_dimension_numbers<[2], [2], [1], [1], [0, 0, 0, 1, 1, 1], [0], [0]>} : vector<2x8x32xbf16>, vector<2x8x32xbf16>, vector<2x8x8xf32> -> vector<2x8x8xf32>
    "tpu.trace_stop"() : () -> ()
    %cst_109 = arith.constant dense<0xFF800000> : vector<2x8xf32>
    %121 = vector.multi_reduction <maximumf>, %120, %cst_109 [2] : vector<2x8x8xf32> to vector<2x8xf32>
    %122 = vector.shape_cast %121 : vector<2x8xf32> to vector<2x8x1xf32>
    %123 = vector.broadcast %122 : vector<2x8x1xf32> to vector<2x8x8xf32>
    %124 = arith.subf %120, %123 : vector<2x8x8xf32>
    %125 = math.exp %124 : vector<2x8x8xf32>
    %cst_110 = arith.constant dense<0.000000e+00> : vector<2x8xf32>
    %126 = vector.multi_reduction <add>, %125, %cst_110 [2] : vector<2x8x8xf32> to vector<2x8xf32>
    %127 = vector.shape_cast %126 : vector<2x8xf32> to vector<2x8x1xf32>
    %128 = tpu.reciprocal %127 {approx = true} : vector<2x8x1xf32> -> vector<2x8x1xf32>
    %129 = vector.broadcast %128 : vector<2x8x1xf32> to vector<2x8x8xf32>
    %130 = arith.mulf %125, %129 : vector<2x8x8xf32>
    %131 = arith.truncf %130 : vector<2x8x8xf32> to vector<2x8x8xbf16>
    "tpu.trace_start"() <{level = 10 : i32, message = "bqk,bkd->bqd"}> : () -> ()
    %cst_111 = arith.constant dense<0.000000e+00> : vector<2x8x32xf32>
    %132 = tpu.matmul %131, %119, %cst_111 {dimension_numbers = #tpu.dot_dimension_numbers<[2], [1], [1], [2], [0, 0, 0, 1, 1, 2], [0], [0]>} : vector<2x8x8xbf16>, vector<2x8x32xbf16>, vector<2x8x32xf32> -> vector<2x8x32xf32>
    "tpu.trace_stop"() : () -> ()
    %133 = vector.shape_cast %132 : vector<2x8x32xf32> to vector<16x32xf32>
    %134 = vector.extract_strided_slice %109 {offsets = [0, 0], sizes = [32, 128], strides = [1, 1]} : vector<128x128xbf16> to vector<32x128xbf16>
    %135 = arith.truncf %133 : vector<16x32xf32> to vector<16x32xbf16>
    %cst_112 = arith.constant dense<0.000000e+00> : vector<16x128xf32>
    %136 = tpu.matmul %135, %134, %cst_112 {dimension_numbers = #tpu.dot_dimension_numbers<[1], [0], [0], [1], [0, 0, 1, 1], [], []>} : vector<16x32xbf16>, vector<32x128xbf16>, vector<16x128xf32> -> vector<16x128xf32>
    %137 = arith.addf %110, %136 : vector<16x128xf32>
    %138 = vector.extract_strided_slice %105 {offsets = [0, 32], sizes = [16, 32], strides = [1, 1]} : vector<16x128xf32> to vector<16x32xf32>
    %139 = vector.shape_cast %138 : vector<16x32xf32> to vector<2x8x32xf32>
    %140 = arith.truncf %139 : vector<2x8x32xf32> to vector<2x8x32xbf16>
    %141 = vector.extract_strided_slice %106 {offsets = [0, 32], sizes = [16, 32], strides = [1, 1]} : vector<16x128xf32> to vector<16x32xf32>
    %142 = vector.shape_cast %141 : vector<16x32xf32> to vector<2x8x32xf32>
    %143 = arith.truncf %142 : vector<2x8x32xf32> to vector<2x8x32xbf16>
    %144 = vector.extract_strided_slice %107 {offsets = [0, 32], sizes = [16, 32], strides = [1, 1]} : vector<16x128xf32> to vector<16x32xf32>
    %145 = vector.shape_cast %144 : vector<16x32xf32> to vector<2x8x32xf32>
    %146 = arith.truncf %145 : vector<2x8x32xf32> to vector<2x8x32xbf16>
    "tpu.trace_start"() <{level = 10 : i32, message = "bqd,bkd->bqk"}> : () -> ()
    %cst_113 = arith.constant dense<0.000000e+00> : vector<2x8x8xf32>
    %147 = tpu.matmul %140, %143, %cst_113 {dimension_numbers = #tpu.dot_dimension_numbers<[2], [2], [1], [1], [0, 0, 0, 1, 1, 1], [0], [0]>} : vector<2x8x32xbf16>, vector<2x8x32xbf16>, vector<2x8x8xf32> -> vector<2x8x8xf32>
    "tpu.trace_stop"() : () -> ()
    %cst_114 = arith.constant dense<0xFF800000> : vector<2x8xf32>
    %148 = vector.multi_reduction <maximumf>, %147, %cst_114 [2] : vector<2x8x8xf32> to vector<2x8xf32>
    %149 = vector.shape_cast %148 : vector<2x8xf32> to vector<2x8x1xf32>
    %150 = vector.broadcast %149 : vector<2x8x1xf32> to vector<2x8x8xf32>
    %151 = arith.subf %147, %150 : vector<2x8x8xf32>
    %152 = math.exp %151 : vector<2x8x8xf32>
    %cst_115 = arith.constant dense<0.000000e+00> : vector<2x8xf32>
    %153 = vector.multi_reduction <add>, %152, %cst_115 [2] : vector<2x8x8xf32> to vector<2x8xf32>
    %154 = vector.shape_cast %153 : vector<2x8xf32> to vector<2x8x1xf32>
    %155 = tpu.reciprocal %154 {approx = true} : vector<2x8x1xf32> -> vector<2x8x1xf32>
    %156 = vector.broadcast %155 : vector<2x8x1xf32> to vector<2x8x8xf32>
    %157 = arith.mulf %152, %156 : vector<2x8x8xf32>
    %158 = arith.truncf %157 : vector<2x8x8xf32> to vector<2x8x8xbf16>
    "tpu.trace_start"() <{level = 10 : i32, message = "bqk,bkd->bqd"}> : () -> ()
    %cst_116 = arith.constant dense<0.000000e+00> : vector<2x8x32xf32>
    %159 = tpu.matmul %158, %146, %cst_116 {dimension_numbers = #tpu.dot_dimension_numbers<[2], [1], [1], [2], [0, 0, 0, 1, 1, 2], [0], [0]>} : vector<2x8x8xbf16>, vector<2x8x32xbf16>, vector<2x8x32xf32> -> vector<2x8x32xf32>
    "tpu.trace_stop"() : () -> ()
    %160 = vector.shape_cast %159 : vector<2x8x32xf32> to vector<16x32xf32>
    %161 = vector.extract_strided_slice %109 {offsets = [32, 0], sizes = [32, 128], strides = [1, 1]} : vector<128x128xbf16> to vector<32x128xbf16>
    %162 = arith.truncf %160 : vector<16x32xf32> to vector<16x32xbf16>
    %cst_117 = arith.constant dense<0.000000e+00> : vector<16x128xf32>
    %163 = tpu.matmul %162, %161, %cst_117 {dimension_numbers = #tpu.dot_dimension_numbers<[1], [0], [0], [1], [0, 0, 1, 1], [], []>} : vector<16x32xbf16>, vector<32x128xbf16>, vector<16x128xf32> -> vector<16x128xf32>
    %164 = arith.addf %137, %163 : vector<16x128xf32>
    %165 = vector.extract_strided_slice %105 {offsets = [0, 64], sizes = [16, 32], strides = [1, 1]} : vector<16x128xf32> to vector<16x32xf32>
    %166 = vector.shape_cast %165 : vector<16x32xf32> to vector<2x8x32xf32>
    %167 = arith.truncf %166 : vector<2x8x32xf32> to vector<2x8x32xbf16>
    %168 = vector.extract_strided_slice %106 {offsets = [0, 64], sizes = [16, 32], strides = [1, 1]} : vector<16x128xf32> to vector<16x32xf32>
    %169 = vector.shape_cast %168 : vector<16x32xf32> to vector<2x8x32xf32>
    %170 = arith.truncf %169 : vector<2x8x32xf32> to vector<2x8x32xbf16>
    %171 = vector.extract_strided_slice %107 {offsets = [0, 64], sizes = [16, 32], strides = [1, 1]} : vector<16x128xf32> to vector<16x32xf32>
    %172 = vector.shape_cast %171 : vector<16x32xf32> to vector<2x8x32xf32>
    %173 = arith.truncf %172 : vector<2x8x32xf32> to vector<2x8x32xbf16>
    "tpu.trace_start"() <{level = 10 : i32, message = "bqd,bkd->bqk"}> : () -> ()
    %cst_118 = arith.constant dense<0.000000e+00> : vector<2x8x8xf32>
    %174 = tpu.matmul %167, %170, %cst_118 {dimension_numbers = #tpu.dot_dimension_numbers<[2], [2], [1], [1], [0, 0, 0, 1, 1, 1], [0], [0]>} : vector<2x8x32xbf16>, vector<2x8x32xbf16>, vector<2x8x8xf32> -> vector<2x8x8xf32>
    "tpu.trace_stop"() : () -> ()
    %cst_119 = arith.constant dense<0xFF800000> : vector<2x8xf32>
    %175 = vector.multi_reduction <maximumf>, %174, %cst_119 [2] : vector<2x8x8xf32> to vector<2x8xf32>
    %176 = vector.shape_cast %175 : vector<2x8xf32> to vector<2x8x1xf32>
    %177 = vector.broadcast %176 : vector<2x8x1xf32> to vector<2x8x8xf32>
    %178 = arith.subf %174, %177 : vector<2x8x8xf32>
    %179 = math.exp %178 : vector<2x8x8xf32>
    %cst_120 = arith.constant dense<0.000000e+00> : vector<2x8xf32>
    %180 = vector.multi_reduction <add>, %179, %cst_120 [2] : vector<2x8x8xf32> to vector<2x8xf32>
    %181 = vector.shape_cast %180 : vector<2x8xf32> to vector<2x8x1xf32>
    %182 = tpu.reciprocal %181 {approx = true} : vector<2x8x1xf32> -> vector<2x8x1xf32>
    %183 = vector.broadcast %182 : vector<2x8x1xf32> to vector<2x8x8xf32>
    %184 = arith.mulf %179, %183 : vector<2x8x8xf32>
    %185 = arith.truncf %184 : vector<2x8x8xf32> to vector<2x8x8xbf16>
    "tpu.trace_start"() <{level = 10 : i32, message = "bqk,bkd->bqd"}> : () -> ()
    %cst_121 = arith.constant dense<0.000000e+00> : vector<2x8x32xf32>
    %186 = tpu.matmul %185, %173, %cst_121 {dimension_numbers = #tpu.dot_dimension_numbers<[2], [1], [1], [2], [0, 0, 0, 1, 1, 2], [0], [0]>} : vector<2x8x8xbf16>, vector<2x8x32xbf16>, vector<2x8x32xf32> -> vector<2x8x32xf32>
    "tpu.trace_stop"() : () -> ()
    %187 = vector.shape_cast %186 : vector<2x8x32xf32> to vector<16x32xf32>
    %188 = vector.extract_strided_slice %109 {offsets = [64, 0], sizes = [32, 128], strides = [1, 1]} : vector<128x128xbf16> to vector<32x128xbf16>
    %189 = arith.truncf %187 : vector<16x32xf32> to vector<16x32xbf16>
    %cst_122 = arith.constant dense<0.000000e+00> : vector<16x128xf32>
    %190 = tpu.matmul %189, %188, %cst_122 {dimension_numbers = #tpu.dot_dimension_numbers<[1], [0], [0], [1], [0, 0, 1, 1], [], []>} : vector<16x32xbf16>, vector<32x128xbf16>, vector<16x128xf32> -> vector<16x128xf32>
    %191 = arith.addf %164, %190 : vector<16x128xf32>
    %192 = vector.extract_strided_slice %105 {offsets = [0, 96], sizes = [16, 32], strides = [1, 1]} : vector<16x128xf32> to vector<16x32xf32>
    %193 = vector.shape_cast %192 : vector<16x32xf32> to vector<2x8x32xf32>
    %194 = arith.truncf %193 : vector<2x8x32xf32> to vector<2x8x32xbf16>
    %195 = vector.extract_strided_slice %106 {offsets = [0, 96], sizes = [16, 32], strides = [1, 1]} : vector<16x128xf32> to vector<16x32xf32>
    %196 = vector.shape_cast %195 : vector<16x32xf32> to vector<2x8x32xf32>
    %197 = arith.truncf %196 : vector<2x8x32xf32> to vector<2x8x32xbf16>
    %198 = vector.extract_strided_slice %107 {offsets = [0, 96], sizes = [16, 32], strides = [1, 1]} : vector<16x128xf32> to vector<16x32xf32>
    %199 = vector.shape_cast %198 : vector<16x32xf32> to vector<2x8x32xf32>
    %200 = arith.truncf %199 : vector<2x8x32xf32> to vector<2x8x32xbf16>
    "tpu.trace_start"() <{level = 10 : i32, message = "bqd,bkd->bqk"}> : () -> ()
    %cst_123 = arith.constant dense<0.000000e+00> : vector<2x8x8xf32>
    %201 = tpu.matmul %194, %197, %cst_123 {dimension_numbers = #tpu.dot_dimension_numbers<[2], [2], [1], [1], [0, 0, 0, 1, 1, 1], [0], [0]>} : vector<2x8x32xbf16>, vector<2x8x32xbf16>, vector<2x8x8xf32> -> vector<2x8x8xf32>
    "tpu.trace_stop"() : () -> ()
    %cst_124 = arith.constant dense<0xFF800000> : vector<2x8xf32>
    %202 = vector.multi_reduction <maximumf>, %201, %cst_124 [2] : vector<2x8x8xf32> to vector<2x8xf32>
    %203 = vector.shape_cast %202 : vector<2x8xf32> to vector<2x8x1xf32>
    %204 = vector.broadcast %203 : vector<2x8x1xf32> to vector<2x8x8xf32>
    %205 = arith.subf %201, %204 : vector<2x8x8xf32>
    %206 = math.exp %205 : vector<2x8x8xf32>
    %cst_125 = arith.constant dense<0.000000e+00> : vector<2x8xf32>
    %207 = vector.multi_reduction <add>, %206, %cst_125 [2] : vector<2x8x8xf32> to vector<2x8xf32>
    %208 = vector.shape_cast %207 : vector<2x8xf32> to vector<2x8x1xf32>
    %209 = tpu.reciprocal %208 {approx = true} : vector<2x8x1xf32> -> vector<2x8x1xf32>
    %210 = vector.broadcast %209 : vector<2x8x1xf32> to vector<2x8x8xf32>
    %211 = arith.mulf %206, %210 : vector<2x8x8xf32>
    %212 = arith.truncf %211 : vector<2x8x8xf32> to vector<2x8x8xbf16>
    "tpu.trace_start"() <{level = 10 : i32, message = "bqk,bkd->bqd"}> : () -> ()
    %cst_126 = arith.constant dense<0.000000e+00> : vector<2x8x32xf32>
    %213 = tpu.matmul %212, %200, %cst_126 {dimension_numbers = #tpu.dot_dimension_numbers<[2], [1], [1], [2], [0, 0, 0, 1, 1, 2], [0], [0]>} : vector<2x8x8xbf16>, vector<2x8x32xbf16>, vector<2x8x32xf32> -> vector<2x8x32xf32>
    "tpu.trace_stop"() : () -> ()
    %214 = vector.shape_cast %213 : vector<2x8x32xf32> to vector<16x32xf32>
    %215 = vector.extract_strided_slice %109 {offsets = [96, 0], sizes = [32, 128], strides = [1, 1]} : vector<128x128xbf16> to vector<32x128xbf16>
    %216 = arith.truncf %214 : vector<16x32xf32> to vector<16x32xbf16>
    %cst_127 = arith.constant dense<0.000000e+00> : vector<16x128xf32>
    %217 = tpu.matmul %216, %215, %cst_127 {dimension_numbers = #tpu.dot_dimension_numbers<[1], [0], [0], [1], [0, 0, 1, 1], [], []>} : vector<16x32xbf16>, vector<32x128xbf16>, vector<16x128xf32> -> vector<16x128xf32>
    %218 = arith.addf %191, %217 : vector<16x128xf32>
    %c0_128 = arith.constant 0 : index
    %c0_129 = arith.constant 0 : index
    %c0_130 = arith.constant 0 : index
    %219 = vector.load %arg7[%c0_128, %c0_129, %c0_130] : memref<2x1x128xf32, #tpu.memory_space<vmem>>, vector<1x1x128xf32>
    %220 = vector.shape_cast %219 : vector<1x1x128xf32> to vector<1x128xf32>
    %221 = vector.broadcast %220 : vector<1x128xf32> to vector<16x128xf32>
    %222 = arith.addf %218, %221 : vector<16x128xf32>
    %223 = arith.addf %96, %222 : vector<16x128xf32>
    %c0_131 = arith.constant 0 : index
    %c0_132 = arith.constant 0 : index
    %c0_133 = arith.constant 0 : index
    %224 = vector.load %arg8[%c0_131, %c0_132, %c0_133] : memref<2x1x128xf32, #tpu.memory_space<vmem>>, vector<1x1x128xf32>
    %225 = vector.shape_cast %224 : vector<1x1x128xf32> to vector<1x128xf32>
    %c0_134 = arith.constant 0 : index
    %c0_135 = arith.constant 0 : index
    %c0_136 = arith.constant 0 : index
    %226 = vector.load %arg9[%c0_134, %c0_135, %c0_136] : memref<2x1x128xf32, #tpu.memory_space<vmem>>, vector<1x1x128xf32>
    %227 = vector.shape_cast %226 : vector<1x1x128xf32> to vector<1x128xf32>
    %cst_137 = arith.constant dense<0.000000e+00> : vector<16xf32>
    %228 = vector.multi_reduction <add>, %223, %cst_137 [1] : vector<16x128xf32> to vector<16xf32>
    %229 = vector.shape_cast %228 : vector<16xf32> to vector<16x1xf32>
    %cst_138 = arith.constant 1.280000e+02 : f32
    %230 = vector.broadcast %cst_138 : f32 to vector<16x1xf32>
    %231 = arith.divf %229, %230 : vector<16x1xf32>
    %232 = vector.broadcast %231 : vector<16x1xf32> to vector<16x128xf32>
    %233 = arith.subf %223, %232 : vector<16x128xf32>
    %234 = arith.mulf %233, %233 : vector<16x128xf32>
    %cst_139 = arith.constant dense<0.000000e+00> : vector<16xf32>
    %235 = vector.multi_reduction <add>, %234, %cst_139 [1] : vector<16x128xf32> to vector<16xf32>
    %236 = vector.shape_cast %235 : vector<16xf32> to vector<16x1xf32>
    %cst_140 = arith.constant 1.280000e+02 : f32
    %237 = vector.broadcast %cst_140 : f32 to vector<16x1xf32>
    %238 = arith.divf %236, %237 : vector<16x1xf32>
    %cst_141 = arith.constant 9.99999974E-6 : f32
    %239 = vector.broadcast %cst_141 : f32 to vector<16x1xf32>
    %240 = arith.addf %238, %239 : vector<16x1xf32>
    %241 = math.rsqrt %240 : vector<16x1xf32>
    %242 = vector.broadcast %241 : vector<16x1xf32> to vector<16x128xf32>
    %243 = arith.mulf %233, %242 : vector<16x128xf32>
    %244 = vector.broadcast %225 : vector<1x128xf32> to vector<16x128xf32>
    %245 = arith.mulf %243, %244 : vector<16x128xf32>
    %246 = vector.broadcast %227 : vector<1x128xf32> to vector<16x128xf32>
    %247 = arith.addf %245, %246 : vector<16x128xf32>
    %c0_142 = arith.constant 0 : index
    %c0_143 = arith.constant 0 : index
    %c0_144 = arith.constant 0 : index
    %248 = vector.load %arg10[%c0_142, %c0_143, %c0_144] : memref<2x128x256xbf16, #tpu.memory_space<vmem>>, vector<1x128x256xbf16>
    %249 = vector.shape_cast %248 : vector<1x128x256xbf16> to vector<128x256xbf16>
    %250 = arith.truncf %247 : vector<16x128xf32> to vector<16x128xbf16>
    %cst_145 = arith.constant dense<0.000000e+00> : vector<16x256xf32>
    %251 = tpu.matmul %250, %249, %cst_145 {dimension_numbers = #tpu.dot_dimension_numbers<[1], [0], [0], [1], [0, 0, 1, 1], [], []>} : vector<16x128xbf16>, vector<128x256xbf16>, vector<16x256xf32> -> vector<16x256xf32>
    %c0_146 = arith.constant 0 : index
    %c0_147 = arith.constant 0 : index
    %c0_148 = arith.constant 0 : index
    %252 = vector.load %arg11[%c0_146, %c0_147, %c0_148] : memref<2x1x256xf32, #tpu.memory_space<vmem>>, vector<1x1x256xf32>
    %253 = vector.shape_cast %252 : vector<1x1x256xf32> to vector<1x256xf32>
    %254 = vector.broadcast %253 : vector<1x256xf32> to vector<16x256xf32>
    %255 = arith.addf %251, %254 : vector<16x256xf32>
    %cst_149 = arith.constant 0.000000e+00 : f32
    %256 = vector.broadcast %cst_149 : f32 to vector<16x256xf32>
    %257 = arith.maximumf %255, %256 : vector<16x256xf32>
    %c0_150 = arith.constant 0 : index
    %c0_151 = arith.constant 0 : index
    %c0_152 = arith.constant 0 : index
    %258 = vector.load %arg12[%c0_150, %c0_151, %c0_152] : memref<2x256x128xbf16, #tpu.memory_space<vmem>>, vector<1x256x128xbf16>
    %259 = vector.shape_cast %258 : vector<1x256x128xbf16> to vector<256x128xbf16>
    %260 = arith.truncf %257 : vector<16x256xf32> to vector<16x256xbf16>
    %cst_153 = arith.constant dense<0.000000e+00> : vector<16x128xf32>
    %261 = tpu.matmul %260, %259, %cst_153 {dimension_numbers = #tpu.dot_dimension_numbers<[1], [0], [0], [1], [0, 0, 1, 1], [], []>} : vector<16x256xbf16>, vector<256x128xbf16>, vector<16x128xf32> -> vector<16x128xf32>
    %c0_154 = arith.constant 0 : index
    %c0_155 = arith.constant 0 : index
    %c0_156 = arith.constant 0 : index
    %262 = vector.load %arg13[%c0_154, %c0_155, %c0_156] : memref<2x1x128xf32, #tpu.memory_space<vmem>>, vector<1x1x128xf32>
    %263 = vector.shape_cast %262 : vector<1x1x128xf32> to vector<1x128xf32>
    %264 = vector.broadcast %263 : vector<1x128xf32> to vector<16x128xf32>
    %265 = arith.addf %261, %264 : vector<16x128xf32>
    %266 = arith.addf %247, %265 : vector<16x128xf32>
    %c0_157 = arith.constant 0 : index
    %c0_158 = arith.constant 0 : index
    %c0_159 = arith.constant 0 : index
    %267 = vector.load %arg14[%c0_157, %c0_158, %c0_159] : memref<2x1x128xf32, #tpu.memory_space<vmem>>, vector<1x1x128xf32>
    %268 = vector.shape_cast %267 : vector<1x1x128xf32> to vector<1x128xf32>
    %c0_160 = arith.constant 0 : index
    %c0_161 = arith.constant 0 : index
    %c0_162 = arith.constant 0 : index
    %269 = vector.load %arg15[%c0_160, %c0_161, %c0_162] : memref<2x1x128xf32, #tpu.memory_space<vmem>>, vector<1x1x128xf32>
    %270 = vector.shape_cast %269 : vector<1x1x128xf32> to vector<1x128xf32>
    %cst_163 = arith.constant dense<0.000000e+00> : vector<16xf32>
    %271 = vector.multi_reduction <add>, %266, %cst_163 [1] : vector<16x128xf32> to vector<16xf32>
    %272 = vector.shape_cast %271 : vector<16xf32> to vector<16x1xf32>
    %cst_164 = arith.constant 1.280000e+02 : f32
    %273 = vector.broadcast %cst_164 : f32 to vector<16x1xf32>
    %274 = arith.divf %272, %273 : vector<16x1xf32>
    %275 = vector.broadcast %274 : vector<16x1xf32> to vector<16x128xf32>
    %276 = arith.subf %266, %275 : vector<16x128xf32>
    %277 = arith.mulf %276, %276 : vector<16x128xf32>
    %cst_165 = arith.constant dense<0.000000e+00> : vector<16xf32>
    %278 = vector.multi_reduction <add>, %277, %cst_165 [1] : vector<16x128xf32> to vector<16xf32>
    %279 = vector.shape_cast %278 : vector<16xf32> to vector<16x1xf32>
    %cst_166 = arith.constant 1.280000e+02 : f32
    %280 = vector.broadcast %cst_166 : f32 to vector<16x1xf32>
    %281 = arith.divf %279, %280 : vector<16x1xf32>
    %cst_167 = arith.constant 9.99999974E-6 : f32
    %282 = vector.broadcast %cst_167 : f32 to vector<16x1xf32>
    %283 = arith.addf %281, %282 : vector<16x1xf32>
    %284 = math.rsqrt %283 : vector<16x1xf32>
    %285 = vector.broadcast %284 : vector<16x1xf32> to vector<16x128xf32>
    %286 = arith.mulf %276, %285 : vector<16x128xf32>
    %287 = vector.broadcast %268 : vector<1x128xf32> to vector<16x128xf32>
    %288 = arith.mulf %286, %287 : vector<16x128xf32>
    %289 = vector.broadcast %270 : vector<1x128xf32> to vector<16x128xf32>
    %290 = arith.addf %288, %289 : vector<16x128xf32>
    %c1_168 = arith.constant 1 : index
    %c0_169 = arith.constant 0 : index
    %c0_170 = arith.constant 0 : index
    %291 = vector.load %arg4[%c1_168, %c0_169, %c0_170] : memref<2x128x384xbf16, #tpu.memory_space<vmem>>, vector<1x128x384xbf16>
    %292 = vector.shape_cast %291 : vector<1x128x384xbf16> to vector<128x384xbf16>
    %293 = arith.truncf %290 : vector<16x128xf32> to vector<16x128xbf16>
    %cst_171 = arith.constant dense<0.000000e+00> : vector<16x384xf32>
    %294 = tpu.matmul %293, %292, %cst_171 {dimension_numbers = #tpu.dot_dimension_numbers<[1], [0], [0], [1], [0, 0, 1, 1], [], []>} : vector<16x128xbf16>, vector<128x384xbf16>, vector<16x384xf32> -> vector<16x384xf32>
    %c1_172 = arith.constant 1 : index
    %c0_173 = arith.constant 0 : index
    %c0_174 = arith.constant 0 : index
    %295 = vector.load %arg5[%c1_172, %c0_173, %c0_174] : memref<2x1x384xf32, #tpu.memory_space<vmem>>, vector<1x1x384xf32>
    %296 = vector.shape_cast %295 : vector<1x1x384xf32> to vector<1x384xf32>
    %297 = vector.broadcast %296 : vector<1x384xf32> to vector<16x384xf32>
    %298 = arith.addf %294, %297 : vector<16x384xf32>
    %299 = vector.extract_strided_slice %298 {offsets = [0, 0], sizes = [16, 128], strides = [1, 1]} : vector<16x384xf32> to vector<16x128xf32>
    %300 = vector.extract_strided_slice %298 {offsets = [0, 128], sizes = [16, 128], strides = [1, 1]} : vector<16x384xf32> to vector<16x128xf32>
    %301 = vector.extract_strided_slice %298 {offsets = [0, 256], sizes = [16, 128], strides = [1, 1]} : vector<16x384xf32> to vector<16x128xf32>
    %c1_175 = arith.constant 1 : index
    %c0_176 = arith.constant 0 : index
    %c0_177 = arith.constant 0 : index
    %302 = vector.load %arg6[%c1_175, %c0_176, %c0_177] : memref<2x128x128xbf16, #tpu.memory_space<vmem>>, vector<1x128x128xbf16>
    %303 = vector.shape_cast %302 : vector<1x128x128xbf16> to vector<128x128xbf16>
    %cst_178 = arith.constant 0.000000e+00 : f32
    %304 = vector.broadcast %cst_178 : f32 to vector<16x128xf32>
    %305 = vector.extract_strided_slice %299 {offsets = [0, 0], sizes = [16, 32], strides = [1, 1]} : vector<16x128xf32> to vector<16x32xf32>
    %306 = vector.shape_cast %305 : vector<16x32xf32> to vector<2x8x32xf32>
    %307 = arith.truncf %306 : vector<2x8x32xf32> to vector<2x8x32xbf16>
    %308 = vector.extract_strided_slice %300 {offsets = [0, 0], sizes = [16, 32], strides = [1, 1]} : vector<16x128xf32> to vector<16x32xf32>
    %309 = vector.shape_cast %308 : vector<16x32xf32> to vector<2x8x32xf32>
    %310 = arith.truncf %309 : vector<2x8x32xf32> to vector<2x8x32xbf16>
    %311 = vector.extract_strided_slice %301 {offsets = [0, 0], sizes = [16, 32], strides = [1, 1]} : vector<16x128xf32> to vector<16x32xf32>
    %312 = vector.shape_cast %311 : vector<16x32xf32> to vector<2x8x32xf32>
    %313 = arith.truncf %312 : vector<2x8x32xf32> to vector<2x8x32xbf16>
    "tpu.trace_start"() <{level = 10 : i32, message = "bqd,bkd->bqk"}> : () -> ()
    %cst_179 = arith.constant dense<0.000000e+00> : vector<2x8x8xf32>
    %314 = tpu.matmul %307, %310, %cst_179 {dimension_numbers = #tpu.dot_dimension_numbers<[2], [2], [1], [1], [0, 0, 0, 1, 1, 1], [0], [0]>} : vector<2x8x32xbf16>, vector<2x8x32xbf16>, vector<2x8x8xf32> -> vector<2x8x8xf32>
    "tpu.trace_stop"() : () -> ()
    %cst_180 = arith.constant dense<0xFF800000> : vector<2x8xf32>
    %315 = vector.multi_reduction <maximumf>, %314, %cst_180 [2] : vector<2x8x8xf32> to vector<2x8xf32>
    %316 = vector.shape_cast %315 : vector<2x8xf32> to vector<2x8x1xf32>
    %317 = vector.broadcast %316 : vector<2x8x1xf32> to vector<2x8x8xf32>
    %318 = arith.subf %314, %317 : vector<2x8x8xf32>
    %319 = math.exp %318 : vector<2x8x8xf32>
    %cst_181 = arith.constant dense<0.000000e+00> : vector<2x8xf32>
    %320 = vector.multi_reduction <add>, %319, %cst_181 [2] : vector<2x8x8xf32> to vector<2x8xf32>
    %321 = vector.shape_cast %320 : vector<2x8xf32> to vector<2x8x1xf32>
    %322 = tpu.reciprocal %321 {approx = true} : vector<2x8x1xf32> -> vector<2x8x1xf32>
    %323 = vector.broadcast %322 : vector<2x8x1xf32> to vector<2x8x8xf32>
    %324 = arith.mulf %319, %323 : vector<2x8x8xf32>
    %325 = arith.truncf %324 : vector<2x8x8xf32> to vector<2x8x8xbf16>
    "tpu.trace_start"() <{level = 10 : i32, message = "bqk,bkd->bqd"}> : () -> ()
    %cst_182 = arith.constant dense<0.000000e+00> : vector<2x8x32xf32>
    %326 = tpu.matmul %325, %313, %cst_182 {dimension_numbers = #tpu.dot_dimension_numbers<[2], [1], [1], [2], [0, 0, 0, 1, 1, 2], [0], [0]>} : vector<2x8x8xbf16>, vector<2x8x32xbf16>, vector<2x8x32xf32> -> vector<2x8x32xf32>
    "tpu.trace_stop"() : () -> ()
    %327 = vector.shape_cast %326 : vector<2x8x32xf32> to vector<16x32xf32>
    %328 = vector.extract_strided_slice %303 {offsets = [0, 0], sizes = [32, 128], strides = [1, 1]} : vector<128x128xbf16> to vector<32x128xbf16>
    %329 = arith.truncf %327 : vector<16x32xf32> to vector<16x32xbf16>
    %cst_183 = arith.constant dense<0.000000e+00> : vector<16x128xf32>
    %330 = tpu.matmul %329, %328, %cst_183 {dimension_numbers = #tpu.dot_dimension_numbers<[1], [0], [0], [1], [0, 0, 1, 1], [], []>} : vector<16x32xbf16>, vector<32x128xbf16>, vector<16x128xf32> -> vector<16x128xf32>
    %331 = arith.addf %304, %330 : vector<16x128xf32>
    %332 = vector.extract_strided_slice %299 {offsets = [0, 32], sizes = [16, 32], strides = [1, 1]} : vector<16x128xf32> to vector<16x32xf32>
    %333 = vector.shape_cast %332 : vector<16x32xf32> to vector<2x8x32xf32>
    %334 = arith.truncf %333 : vector<2x8x32xf32> to vector<2x8x32xbf16>
    %335 = vector.extract_strided_slice %300 {offsets = [0, 32], sizes = [16, 32], strides = [1, 1]} : vector<16x128xf32> to vector<16x32xf32>
    %336 = vector.shape_cast %335 : vector<16x32xf32> to vector<2x8x32xf32>
    %337 = arith.truncf %336 : vector<2x8x32xf32> to vector<2x8x32xbf16>
    %338 = vector.extract_strided_slice %301 {offsets = [0, 32], sizes = [16, 32], strides = [1, 1]} : vector<16x128xf32> to vector<16x32xf32>
    %339 = vector.shape_cast %338 : vector<16x32xf32> to vector<2x8x32xf32>
    %340 = arith.truncf %339 : vector<2x8x32xf32> to vector<2x8x32xbf16>
    "tpu.trace_start"() <{level = 10 : i32, message = "bqd,bkd->bqk"}> : () -> ()
    %cst_184 = arith.constant dense<0.000000e+00> : vector<2x8x8xf32>
    %341 = tpu.matmul %334, %337, %cst_184 {dimension_numbers = #tpu.dot_dimension_numbers<[2], [2], [1], [1], [0, 0, 0, 1, 1, 1], [0], [0]>} : vector<2x8x32xbf16>, vector<2x8x32xbf16>, vector<2x8x8xf32> -> vector<2x8x8xf32>
    "tpu.trace_stop"() : () -> ()
    %cst_185 = arith.constant dense<0xFF800000> : vector<2x8xf32>
    %342 = vector.multi_reduction <maximumf>, %341, %cst_185 [2] : vector<2x8x8xf32> to vector<2x8xf32>
    %343 = vector.shape_cast %342 : vector<2x8xf32> to vector<2x8x1xf32>
    %344 = vector.broadcast %343 : vector<2x8x1xf32> to vector<2x8x8xf32>
    %345 = arith.subf %341, %344 : vector<2x8x8xf32>
    %346 = math.exp %345 : vector<2x8x8xf32>
    %cst_186 = arith.constant dense<0.000000e+00> : vector<2x8xf32>
    %347 = vector.multi_reduction <add>, %346, %cst_186 [2] : vector<2x8x8xf32> to vector<2x8xf32>
    %348 = vector.shape_cast %347 : vector<2x8xf32> to vector<2x8x1xf32>
    %349 = tpu.reciprocal %348 {approx = true} : vector<2x8x1xf32> -> vector<2x8x1xf32>
    %350 = vector.broadcast %349 : vector<2x8x1xf32> to vector<2x8x8xf32>
    %351 = arith.mulf %346, %350 : vector<2x8x8xf32>
    %352 = arith.truncf %351 : vector<2x8x8xf32> to vector<2x8x8xbf16>
    "tpu.trace_start"() <{level = 10 : i32, message = "bqk,bkd->bqd"}> : () -> ()
    %cst_187 = arith.constant dense<0.000000e+00> : vector<2x8x32xf32>
    %353 = tpu.matmul %352, %340, %cst_187 {dimension_numbers = #tpu.dot_dimension_numbers<[2], [1], [1], [2], [0, 0, 0, 1, 1, 2], [0], [0]>} : vector<2x8x8xbf16>, vector<2x8x32xbf16>, vector<2x8x32xf32> -> vector<2x8x32xf32>
    "tpu.trace_stop"() : () -> ()
    %354 = vector.shape_cast %353 : vector<2x8x32xf32> to vector<16x32xf32>
    %355 = vector.extract_strided_slice %303 {offsets = [32, 0], sizes = [32, 128], strides = [1, 1]} : vector<128x128xbf16> to vector<32x128xbf16>
    %356 = arith.truncf %354 : vector<16x32xf32> to vector<16x32xbf16>
    %cst_188 = arith.constant dense<0.000000e+00> : vector<16x128xf32>
    %357 = tpu.matmul %356, %355, %cst_188 {dimension_numbers = #tpu.dot_dimension_numbers<[1], [0], [0], [1], [0, 0, 1, 1], [], []>} : vector<16x32xbf16>, vector<32x128xbf16>, vector<16x128xf32> -> vector<16x128xf32>
    %358 = arith.addf %331, %357 : vector<16x128xf32>
    %359 = vector.extract_strided_slice %299 {offsets = [0, 64], sizes = [16, 32], strides = [1, 1]} : vector<16x128xf32> to vector<16x32xf32>
    %360 = vector.shape_cast %359 : vector<16x32xf32> to vector<2x8x32xf32>
    %361 = arith.truncf %360 : vector<2x8x32xf32> to vector<2x8x32xbf16>
    %362 = vector.extract_strided_slice %300 {offsets = [0, 64], sizes = [16, 32], strides = [1, 1]} : vector<16x128xf32> to vector<16x32xf32>
    %363 = vector.shape_cast %362 : vector<16x32xf32> to vector<2x8x32xf32>
    %364 = arith.truncf %363 : vector<2x8x32xf32> to vector<2x8x32xbf16>
    %365 = vector.extract_strided_slice %301 {offsets = [0, 64], sizes = [16, 32], strides = [1, 1]} : vector<16x128xf32> to vector<16x32xf32>
    %366 = vector.shape_cast %365 : vector<16x32xf32> to vector<2x8x32xf32>
    %367 = arith.truncf %366 : vector<2x8x32xf32> to vector<2x8x32xbf16>
    "tpu.trace_start"() <{level = 10 : i32, message = "bqd,bkd->bqk"}> : () -> ()
    %cst_189 = arith.constant dense<0.000000e+00> : vector<2x8x8xf32>
    %368 = tpu.matmul %361, %364, %cst_189 {dimension_numbers = #tpu.dot_dimension_numbers<[2], [2], [1], [1], [0, 0, 0, 1, 1, 1], [0], [0]>} : vector<2x8x32xbf16>, vector<2x8x32xbf16>, vector<2x8x8xf32> -> vector<2x8x8xf32>
    "tpu.trace_stop"() : () -> ()
    %cst_190 = arith.constant dense<0xFF800000> : vector<2x8xf32>
    %369 = vector.multi_reduction <maximumf>, %368, %cst_190 [2] : vector<2x8x8xf32> to vector<2x8xf32>
    %370 = vector.shape_cast %369 : vector<2x8xf32> to vector<2x8x1xf32>
    %371 = vector.broadcast %370 : vector<2x8x1xf32> to vector<2x8x8xf32>
    %372 = arith.subf %368, %371 : vector<2x8x8xf32>
    %373 = math.exp %372 : vector<2x8x8xf32>
    %cst_191 = arith.constant dense<0.000000e+00> : vector<2x8xf32>
    %374 = vector.multi_reduction <add>, %373, %cst_191 [2] : vector<2x8x8xf32> to vector<2x8xf32>
    %375 = vector.shape_cast %374 : vector<2x8xf32> to vector<2x8x1xf32>
    %376 = tpu.reciprocal %375 {approx = true} : vector<2x8x1xf32> -> vector<2x8x1xf32>
    %377 = vector.broadcast %376 : vector<2x8x1xf32> to vector<2x8x8xf32>
    %378 = arith.mulf %373, %377 : vector<2x8x8xf32>
    %379 = arith.truncf %378 : vector<2x8x8xf32> to vector<2x8x8xbf16>
    "tpu.trace_start"() <{level = 10 : i32, message = "bqk,bkd->bqd"}> : () -> ()
    %cst_192 = arith.constant dense<0.000000e+00> : vector<2x8x32xf32>
    %380 = tpu.matmul %379, %367, %cst_192 {dimension_numbers = #tpu.dot_dimension_numbers<[2], [1], [1], [2], [0, 0, 0, 1, 1, 2], [0], [0]>} : vector<2x8x8xbf16>, vector<2x8x32xbf16>, vector<2x8x32xf32> -> vector<2x8x32xf32>
    "tpu.trace_stop"() : () -> ()
    %381 = vector.shape_cast %380 : vector<2x8x32xf32> to vector<16x32xf32>
    %382 = vector.extract_strided_slice %303 {offsets = [64, 0], sizes = [32, 128], strides = [1, 1]} : vector<128x128xbf16> to vector<32x128xbf16>
    %383 = arith.truncf %381 : vector<16x32xf32> to vector<16x32xbf16>
    %cst_193 = arith.constant dense<0.000000e+00> : vector<16x128xf32>
    %384 = tpu.matmul %383, %382, %cst_193 {dimension_numbers = #tpu.dot_dimension_numbers<[1], [0], [0], [1], [0, 0, 1, 1], [], []>} : vector<16x32xbf16>, vector<32x128xbf16>, vector<16x128xf32> -> vector<16x128xf32>
    %385 = arith.addf %358, %384 : vector<16x128xf32>
    %386 = vector.extract_strided_slice %299 {offsets = [0, 96], sizes = [16, 32], strides = [1, 1]} : vector<16x128xf32> to vector<16x32xf32>
    %387 = vector.shape_cast %386 : vector<16x32xf32> to vector<2x8x32xf32>
    %388 = arith.truncf %387 : vector<2x8x32xf32> to vector<2x8x32xbf16>
    %389 = vector.extract_strided_slice %300 {offsets = [0, 96], sizes = [16, 32], strides = [1, 1]} : vector<16x128xf32> to vector<16x32xf32>
    %390 = vector.shape_cast %389 : vector<16x32xf32> to vector<2x8x32xf32>
    %391 = arith.truncf %390 : vector<2x8x32xf32> to vector<2x8x32xbf16>
    %392 = vector.extract_strided_slice %301 {offsets = [0, 96], sizes = [16, 32], strides = [1, 1]} : vector<16x128xf32> to vector<16x32xf32>
    %393 = vector.shape_cast %392 : vector<16x32xf32> to vector<2x8x32xf32>
    %394 = arith.truncf %393 : vector<2x8x32xf32> to vector<2x8x32xbf16>
    "tpu.trace_start"() <{level = 10 : i32, message = "bqd,bkd->bqk"}> : () -> ()
    %cst_194 = arith.constant dense<0.000000e+00> : vector<2x8x8xf32>
    %395 = tpu.matmul %388, %391, %cst_194 {dimension_numbers = #tpu.dot_dimension_numbers<[2], [2], [1], [1], [0, 0, 0, 1, 1, 1], [0], [0]>} : vector<2x8x32xbf16>, vector<2x8x32xbf16>, vector<2x8x8xf32> -> vector<2x8x8xf32>
    "tpu.trace_stop"() : () -> ()
    %cst_195 = arith.constant dense<0xFF800000> : vector<2x8xf32>
    %396 = vector.multi_reduction <maximumf>, %395, %cst_195 [2] : vector<2x8x8xf32> to vector<2x8xf32>
    %397 = vector.shape_cast %396 : vector<2x8xf32> to vector<2x8x1xf32>
    %398 = vector.broadcast %397 : vector<2x8x1xf32> to vector<2x8x8xf32>
    %399 = arith.subf %395, %398 : vector<2x8x8xf32>
    %400 = math.exp %399 : vector<2x8x8xf32>
    %cst_196 = arith.constant dense<0.000000e+00> : vector<2x8xf32>
    %401 = vector.multi_reduction <add>, %400, %cst_196 [2] : vector<2x8x8xf32> to vector<2x8xf32>
    %402 = vector.shape_cast %401 : vector<2x8xf32> to vector<2x8x1xf32>
    %403 = tpu.reciprocal %402 {approx = true} : vector<2x8x1xf32> -> vector<2x8x1xf32>
    %404 = vector.broadcast %403 : vector<2x8x1xf32> to vector<2x8x8xf32>
    %405 = arith.mulf %400, %404 : vector<2x8x8xf32>
    %406 = arith.truncf %405 : vector<2x8x8xf32> to vector<2x8x8xbf16>
    "tpu.trace_start"() <{level = 10 : i32, message = "bqk,bkd->bqd"}> : () -> ()
    %cst_197 = arith.constant dense<0.000000e+00> : vector<2x8x32xf32>
    %407 = tpu.matmul %406, %394, %cst_197 {dimension_numbers = #tpu.dot_dimension_numbers<[2], [1], [1], [2], [0, 0, 0, 1, 1, 2], [0], [0]>} : vector<2x8x8xbf16>, vector<2x8x32xbf16>, vector<2x8x32xf32> -> vector<2x8x32xf32>
    "tpu.trace_stop"() : () -> ()
    %408 = vector.shape_cast %407 : vector<2x8x32xf32> to vector<16x32xf32>
    %409 = vector.extract_strided_slice %303 {offsets = [96, 0], sizes = [32, 128], strides = [1, 1]} : vector<128x128xbf16> to vector<32x128xbf16>
    %410 = arith.truncf %408 : vector<16x32xf32> to vector<16x32xbf16>
    %cst_198 = arith.constant dense<0.000000e+00> : vector<16x128xf32>
    %411 = tpu.matmul %410, %409, %cst_198 {dimension_numbers = #tpu.dot_dimension_numbers<[1], [0], [0], [1], [0, 0, 1, 1], [], []>} : vector<16x32xbf16>, vector<32x128xbf16>, vector<16x128xf32> -> vector<16x128xf32>
    %412 = arith.addf %385, %411 : vector<16x128xf32>
    %c1_199 = arith.constant 1 : index
    %c0_200 = arith.constant 0 : index
    %c0_201 = arith.constant 0 : index
    %413 = vector.load %arg7[%c1_199, %c0_200, %c0_201] : memref<2x1x128xf32, #tpu.memory_space<vmem>>, vector<1x1x128xf32>
    %414 = vector.shape_cast %413 : vector<1x1x128xf32> to vector<1x128xf32>
    %415 = vector.broadcast %414 : vector<1x128xf32> to vector<16x128xf32>
    %416 = arith.addf %412, %415 : vector<16x128xf32>
    %417 = arith.addf %290, %416 : vector<16x128xf32>
    %c1_202 = arith.constant 1 : index
    %c0_203 = arith.constant 0 : index
    %c0_204 = arith.constant 0 : index
    %418 = vector.load %arg8[%c1_202, %c0_203, %c0_204] : memref<2x1x128xf32, #tpu.memory_space<vmem>>, vector<1x1x128xf32>
    %419 = vector.shape_cast %418 : vector<1x1x128xf32> to vector<1x128xf32>
    %c1_205 = arith.constant 1 : index
    %c0_206 = arith.constant 0 : index
    %c0_207 = arith.constant 0 : index
    %420 = vector.load %arg9[%c1_205, %c0_206, %c0_207] : memref<2x1x128xf32, #tpu.memory_space<vmem>>, vector<1x1x128xf32>
    %421 = vector.shape_cast %420 : vector<1x1x128xf32> to vector<1x128xf32>
    %cst_208 = arith.constant dense<0.000000e+00> : vector<16xf32>
    %422 = vector.multi_reduction <add>, %417, %cst_208 [1] : vector<16x128xf32> to vector<16xf32>
    %423 = vector.shape_cast %422 : vector<16xf32> to vector<16x1xf32>
    %cst_209 = arith.constant 1.280000e+02 : f32
    %424 = vector.broadcast %cst_209 : f32 to vector<16x1xf32>
    %425 = arith.divf %423, %424 : vector<16x1xf32>
    %426 = vector.broadcast %425 : vector<16x1xf32> to vector<16x128xf32>
    %427 = arith.subf %417, %426 : vector<16x128xf32>
    %428 = arith.mulf %427, %427 : vector<16x128xf32>
    %cst_210 = arith.constant dense<0.000000e+00> : vector<16xf32>
    %429 = vector.multi_reduction <add>, %428, %cst_210 [1] : vector<16x128xf32> to vector<16xf32>
    %430 = vector.shape_cast %429 : vector<16xf32> to vector<16x1xf32>
    %cst_211 = arith.constant 1.280000e+02 : f32
    %431 = vector.broadcast %cst_211 : f32 to vector<16x1xf32>
    %432 = arith.divf %430, %431 : vector<16x1xf32>
    %cst_212 = arith.constant 9.99999974E-6 : f32
    %433 = vector.broadcast %cst_212 : f32 to vector<16x1xf32>
    %434 = arith.addf %432, %433 : vector<16x1xf32>
    %435 = math.rsqrt %434 : vector<16x1xf32>
    %436 = vector.broadcast %435 : vector<16x1xf32> to vector<16x128xf32>
    %437 = arith.mulf %427, %436 : vector<16x128xf32>
    %438 = vector.broadcast %419 : vector<1x128xf32> to vector<16x128xf32>
    %439 = arith.mulf %437, %438 : vector<16x128xf32>
    %440 = vector.broadcast %421 : vector<1x128xf32> to vector<16x128xf32>
    %441 = arith.addf %439, %440 : vector<16x128xf32>
    %c1_213 = arith.constant 1 : index
    %c0_214 = arith.constant 0 : index
    %c0_215 = arith.constant 0 : index
    %442 = vector.load %arg10[%c1_213, %c0_214, %c0_215] : memref<2x128x256xbf16, #tpu.memory_space<vmem>>, vector<1x128x256xbf16>
    %443 = vector.shape_cast %442 : vector<1x128x256xbf16> to vector<128x256xbf16>
    %444 = arith.truncf %441 : vector<16x128xf32> to vector<16x128xbf16>
    %cst_216 = arith.constant dense<0.000000e+00> : vector<16x256xf32>
    %445 = tpu.matmul %444, %443, %cst_216 {dimension_numbers = #tpu.dot_dimension_numbers<[1], [0], [0], [1], [0, 0, 1, 1], [], []>} : vector<16x128xbf16>, vector<128x256xbf16>, vector<16x256xf32> -> vector<16x256xf32>
    %c1_217 = arith.constant 1 : index
    %c0_218 = arith.constant 0 : index
    %c0_219 = arith.constant 0 : index
    %446 = vector.load %arg11[%c1_217, %c0_218, %c0_219] : memref<2x1x256xf32, #tpu.memory_space<vmem>>, vector<1x1x256xf32>
    %447 = vector.shape_cast %446 : vector<1x1x256xf32> to vector<1x256xf32>
    %448 = vector.broadcast %447 : vector<1x256xf32> to vector<16x256xf32>
    %449 = arith.addf %445, %448 : vector<16x256xf32>
    %cst_220 = arith.constant 0.000000e+00 : f32
    %450 = vector.broadcast %cst_220 : f32 to vector<16x256xf32>
    %451 = arith.maximumf %449, %450 : vector<16x256xf32>
    %c1_221 = arith.constant 1 : index
    %c0_222 = arith.constant 0 : index
    %c0_223 = arith.constant 0 : index
    %452 = vector.load %arg12[%c1_221, %c0_222, %c0_223] : memref<2x256x128xbf16, #tpu.memory_space<vmem>>, vector<1x256x128xbf16>
    %453 = vector.shape_cast %452 : vector<1x256x128xbf16> to vector<256x128xbf16>
    %454 = arith.truncf %451 : vector<16x256xf32> to vector<16x256xbf16>
    %cst_224 = arith.constant dense<0.000000e+00> : vector<16x128xf32>
    %455 = tpu.matmul %454, %453, %cst_224 {dimension_numbers = #tpu.dot_dimension_numbers<[1], [0], [0], [1], [0, 0, 1, 1], [], []>} : vector<16x256xbf16>, vector<256x128xbf16>, vector<16x128xf32> -> vector<16x128xf32>
    %c1_225 = arith.constant 1 : index
    %c0_226 = arith.constant 0 : index
    %c0_227 = arith.constant 0 : index
    %456 = vector.load %arg13[%c1_225, %c0_226, %c0_227] : memref<2x1x128xf32, #tpu.memory_space<vmem>>, vector<1x1x128xf32>
    %457 = vector.shape_cast %456 : vector<1x1x128xf32> to vector<1x128xf32>
    %458 = vector.broadcast %457 : vector<1x128xf32> to vector<16x128xf32>
    %459 = arith.addf %455, %458 : vector<16x128xf32>
    %460 = arith.addf %441, %459 : vector<16x128xf32>
    %c1_228 = arith.constant 1 : index
    %c0_229 = arith.constant 0 : index
    %c0_230 = arith.constant 0 : index
    %461 = vector.load %arg14[%c1_228, %c0_229, %c0_230] : memref<2x1x128xf32, #tpu.memory_space<vmem>>, vector<1x1x128xf32>
    %462 = vector.shape_cast %461 : vector<1x1x128xf32> to vector<1x128xf32>
    %c1_231 = arith.constant 1 : index
    %c0_232 = arith.constant 0 : index
    %c0_233 = arith.constant 0 : index
    %463 = vector.load %arg15[%c1_231, %c0_232, %c0_233] : memref<2x1x128xf32, #tpu.memory_space<vmem>>, vector<1x1x128xf32>
    %464 = vector.shape_cast %463 : vector<1x1x128xf32> to vector<1x128xf32>
    %cst_234 = arith.constant dense<0.000000e+00> : vector<16xf32>
    %465 = vector.multi_reduction <add>, %460, %cst_234 [1] : vector<16x128xf32> to vector<16xf32>
    %466 = vector.shape_cast %465 : vector<16xf32> to vector<16x1xf32>
    %cst_235 = arith.constant 1.280000e+02 : f32
    %467 = vector.broadcast %cst_235 : f32 to vector<16x1xf32>
    %468 = arith.divf %466, %467 : vector<16x1xf32>
    %469 = vector.broadcast %468 : vector<16x1xf32> to vector<16x128xf32>
    %470 = arith.subf %460, %469 : vector<16x128xf32>
    %471 = arith.mulf %470, %470 : vector<16x128xf32>
    %cst_236 = arith.constant dense<0.000000e+00> : vector<16xf32>
    %472 = vector.multi_reduction <add>, %471, %cst_236 [1] : vector<16x128xf32> to vector<16xf32>
    %473 = vector.shape_cast %472 : vector<16xf32> to vector<16x1xf32>
    %cst_237 = arith.constant 1.280000e+02 : f32
    %474 = vector.broadcast %cst_237 : f32 to vector<16x1xf32>
    %475 = arith.divf %473, %474 : vector<16x1xf32>
    %cst_238 = arith.constant 9.99999974E-6 : f32
    %476 = vector.broadcast %cst_238 : f32 to vector<16x1xf32>
    %477 = arith.addf %475, %476 : vector<16x1xf32>
    %478 = math.rsqrt %477 : vector<16x1xf32>
    %479 = vector.broadcast %478 : vector<16x1xf32> to vector<16x128xf32>
    %480 = arith.mulf %470, %479 : vector<16x128xf32>
    %481 = vector.broadcast %462 : vector<1x128xf32> to vector<16x128xf32>
    %482 = arith.mulf %480, %481 : vector<16x128xf32>
    %483 = vector.broadcast %464 : vector<1x128xf32> to vector<16x128xf32>
    %484 = arith.addf %482, %483 : vector<16x128xf32>
    %c0_239 = arith.constant 0 : index
    %c0_240 = arith.constant 0 : index
    %485 = vector.load %arg16[%c0_239, %c0_240] : memref<128x512xbf16, #tpu.memory_space<vmem>>, vector<128x512xbf16>
    %486 = arith.truncf %484 : vector<16x128xf32> to vector<16x128xbf16>
    %cst_241 = arith.constant dense<0.000000e+00> : vector<16x512xf32>
    %487 = tpu.matmul %486, %485, %cst_241 {dimension_numbers = #tpu.dot_dimension_numbers<[1], [0], [0], [1], [0, 0, 1, 1], [], []>} : vector<16x128xbf16>, vector<128x512xbf16>, vector<16x512xf32> -> vector<16x512xf32>
    %c0_242 = arith.constant 0 : index
    %c0_243 = arith.constant 0 : index
    %488 = vector.load %arg17[%c0_242, %c0_243] : memref<1x512xf32, #tpu.memory_space<vmem>>, vector<1x512xf32>
    %489 = vector.broadcast %488 : vector<1x512xf32> to vector<16x512xf32>
    %490 = arith.addf %487, %489 : vector<16x512xf32>
    %491 = vector.shape_cast %490 : vector<16x512xf32> to vector<2x8x512xf32>
    %c0_244 = arith.constant 0 : index
    %c0_245 = arith.constant 0 : index
    %c0_246 = arith.constant 0 : index
    %492 = vector.load %arg18[%c0_244, %c0_245, %c0_246] : memref<2x8x512xf32, #tpu.memory_space<vmem>>, vector<2x8x512xf32>
    tpu.vector_store %arg18[%c0_244, %c0_245, %c0_246], %491 {strides = array<i32>} : memref<2x8x512xf32, #tpu.memory_space<vmem>>, vector<2x8x512xf32>,
    return
  }
  func.func @transform_0(%arg0: i32, %arg1: memref<8x2xi32, #tpu.memory_space<smem>>) -> (i32, i32) {
    %c0_i32 = arith.constant 0 : i32
    %c0_i32_0 = arith.constant 0 : i32
    %c0_i32_1 = arith.constant 0 : i32
    return %c0_i32, %c0_i32_0 : i32, i32
  }
  func.func @transform_1(%arg0: i32, %arg1: memref<8x2xi32, #tpu.memory_space<smem>>) -> (i32, i32) {
    %c0_i32 = arith.constant 0 : i32
    %c0_i32_0 = arith.constant 0 : i32
    %c0_i32_1 = arith.constant 0 : i32
    return %c0_i32, %c0_i32_0 : i32, i32
  }
  func.func @transform_2(%arg0: i32, %arg1: memref<8x2xi32, #tpu.memory_space<smem>>) -> (i32, i32, i32) {
    %c0_i32 = arith.constant 0 : i32
    %c0_i32_0 = arith.constant 0 : i32
    %c0_i32_1 = arith.constant 0 : i32
    %c0_i32_2 = arith.constant 0 : i32
    return %c0_i32, %c0_i32_0, %c0_i32_1 : i32, i32, i32
  }
  func.func @transform_3(%arg0: i32, %arg1: memref<8x2xi32, #tpu.memory_space<smem>>) -> (i32, i32, i32) {
    %c0_i32 = arith.constant 0 : i32
    %c0_i32_0 = arith.constant 0 : i32
    %c0_i32_1 = arith.constant 0 : i32
    %c0_i32_2 = arith.constant 0 : i32
    return %c0_i32, %c0_i32_0, %c0_i32_1 : i32, i32, i32
  }
  func.func @transform_4(%arg0: i32, %arg1: memref<8x2xi32, #tpu.memory_space<smem>>) -> (i32, i32, i32) {
    %c0_i32 = arith.constant 0 : i32
    %c0_i32_0 = arith.constant 0 : i32
    %c0_i32_1 = arith.constant 0 : i32
    %c0_i32_2 = arith.constant 0 : i32
    return %c0_i32, %c0_i32_0, %c0_i32_1 : i32, i32, i32
  }
  func.func @transform_5(%arg0: i32, %arg1: memref<8x2xi32, #tpu.memory_space<smem>>) -> (i32, i32, i32) {
    %c0_i32 = arith.constant 0 : i32
    %c0_i32_0 = arith.constant 0 : i32
    %c0_i32_1 = arith.constant 0 : i32
    %c0_i32_2 = arith.constant 0 : i32
    return %c0_i32, %c0_i32_0, %c0_i32_1 : i32, i32, i32
  }
  func.func @transform_6(%arg0: i32, %arg1: memref<8x2xi32, #tpu.memory_space<smem>>) -> (i32, i32, i32) {
    %c0_i32 = arith.constant 0 : i32
    %c0_i32_0 = arith.constant 0 : i32
    %c0_i32_1 = arith.constant 0 : i32
    %c0_i32_2 = arith.constant 0 : i32
    return %c0_i32, %c0_i32_0, %c0_i32_1 : i32, i32, i32
  }
  func.func @transform_7(%arg0: i32, %arg1: memref<8x2xi32, #tpu.memory_space<smem>>) -> (i32, i32, i32) {
    %c0_i32 = arith.constant 0 : i32
    %c0_i32_0 = arith.constant 0 : i32
    %c0_i32_1 = arith.constant 0 : i32
    %c0_i32_2 = arith.constant 0 : i32
    return %c0_i32, %c0_i32_0, %c0_i32_1 : i32, i32, i32
  }
  func.func @transform_8(%arg0: i32, %arg1: memref<8x2xi32, #tpu.memory_space<smem>>) -> (i32, i32, i32) {
    %c0_i32 = arith.constant 0 : i32
    %c0_i32_0 = arith.constant 0 : i32
    %c0_i32_1 = arith.constant 0 : i32
    %c0_i32_2 = arith.constant 0 : i32
    return %c0_i32, %c0_i32_0, %c0_i32_1 : i32, i32, i32
  }
  func.func @transform_9(%arg0: i32, %arg1: memref<8x2xi32, #tpu.memory_space<smem>>) -> (i32, i32, i32) {
    %c0_i32 = arith.constant 0 : i32
    %c0_i32_0 = arith.constant 0 : i32
    %c0_i32_1 = arith.constant 0 : i32
    %c0_i32_2 = arith.constant 0 : i32
    return %c0_i32, %c0_i32_0, %c0_i32_1 : i32, i32, i32
  }
  func.func @transform_10(%arg0: i32, %arg1: memref<8x2xi32, #tpu.memory_space<smem>>) -> (i32, i32, i32) {
    %c0_i32 = arith.constant 0 : i32
    %c0_i32_0 = arith.constant 0 : i32
    %c0_i32_1 = arith.constant 0 : i32
    %c0_i32_2 = arith.constant 0 : i32
    return %c0_i32, %c0_i32_0, %c0_i32_1 : i32, i32, i32
  }
  func.func @transform_11(%arg0: i32, %arg1: memref<8x2xi32, #tpu.memory_space<smem>>) -> (i32, i32, i32) {
    %c0_i32 = arith.constant 0 : i32
    %c0_i32_0 = arith.constant 0 : i32
    %c0_i32_1 = arith.constant 0 : i32
    %c0_i32_2 = arith.constant 0 : i32
    return %c0_i32, %c0_i32_0, %c0_i32_1 : i32, i32, i32
  }
  func.func @transform_12(%arg0: i32, %arg1: memref<8x2xi32, #tpu.memory_space<smem>>) -> (i32, i32, i32) {
    %c0_i32 = arith.constant 0 : i32
    %c0_i32_0 = arith.constant 0 : i32
    %c0_i32_1 = arith.constant 0 : i32
    %c0_i32_2 = arith.constant 0 : i32
    return %c0_i32, %c0_i32_0, %c0_i32_1 : i32, i32, i32
  }
  func.func @transform_13(%arg0: i32, %arg1: memref<8x2xi32, #tpu.memory_space<smem>>) -> (i32, i32, i32) {
    %c0_i32 = arith.constant 0 : i32
    %c0_i32_0 = arith.constant 0 : i32
    %c0_i32_1 = arith.constant 0 : i32
    %c0_i32_2 = arith.constant 0 : i32
    return %c0_i32, %c0_i32_0, %c0_i32_1 : i32, i32, i32
  }
  func.func @transform_14(%arg0: i32, %arg1: memref<8x2xi32, #tpu.memory_space<smem>>) -> (i32, i32) {
    %c0_i32 = arith.constant 0 : i32
    %c0_i32_0 = arith.constant 0 : i32
    %c0_i32_1 = arith.constant 0 : i32
    return %c0_i32, %c0_i32_0 : i32, i32
  }
  func.func @transform_15(%arg0: i32, %arg1: memref<8x2xi32, #tpu.memory_space<smem>>) -> (i32, i32) {
    %c0_i32 = arith.constant 0 : i32
    %c0_i32_0 = arith.constant 0 : i32
    %c0_i32_1 = arith.constant 0 : i32
    return %c0_i32, %c0_i32_0 : i32, i32
  }
  func.func @transform_16(%arg0: i32, %arg1: memref<8x2xi32, #tpu.memory_space<smem>>) -> (i32, i32, i32) {
    %c0_i32 = arith.constant 0 : i32
    %c0_i32_0 = arith.constant 0 : i32
    %c0_i32_1 = arith.constant 0 : i32
    %c0_i32_2 = arith.constant 0 : i32
    return %c0_i32, %c0_i32_0, %c0_i32_1 : i32, i32, i32
  }
}

</mosaic_0001>

<llo_original>
// kernel: transformer_forward.1
$region0: #{transformer_forward.1}
  #allocation0 [shape = 'u32[]', space=smem, size = 0x4, offset = 0x4, fixed_abs, tag = 'smem constant byte address 0x4 - core index']
  #allocation1 [shape = 'u32[72,128]{1,0:T(1,128)}', space=vmem, size = 0x9000, scoped, tag = 'internal scratch']
  #allocation2 [shape = 'f32[16,128]{1,0:T(8,128)}', space=vmem, size = 0x2000, scoped, tag = 'scratch operand']
  #allocation3 [shape = 's32[1]{0}', space=sflag, size = 0x4, scoped, tag = 'scoped memory for transformer_forward.1']
  #allocation4 [shape = 'u8[4096]{0}', space=smem, size = 0x1000, scoped, tag = 'prefetched SMEM operand 0']
  %s0 = inlined_call_operand.vmem [shape: s32[8,2], index: 0, kind: input, shape index: {}]
  %s1 = inlined_call_operand.hbm [shape: f32[512,128], index: 1, kind: input, shape index: {}]
  %s2 = inlined_call_operand.hbm [shape: f32[128,128], index: 2, kind: input, shape index: {}]
  %s3 = inlined_call_operand.hbm [shape: bf16[2,128,384], index: 3, kind: input, shape index: {}]
  %s4 = inlined_call_operand.vmem [shape: f32[2,1,384], index: 4, kind: input, shape index: {}]
  %s5 = inlined_call_operand.hbm [shape: bf16[2,128,128], index: 5, kind: input, shape index: {}]
  %s6 = inlined_call_operand.hbm [shape: f32[2,1,128], index: 6, kind: input, shape index: {}]
  %s7 = inlined_call_operand.vmem [shape: f32[2,1,128], index: 7, kind: input, shape index: {}]
  %s8 = inlined_call_operand.vmem [shape: f32[2,1,128], index: 8, kind: input, shape index: {}]
  %s9 = inlined_call_operand.hbm [shape: bf16[2,128,256], index: 9, kind: input, shape index: {}]
  %s10 = inlined_call_operand.vmem [shape: f32[2,1,256], index: 10, kind: input, shape index: {}]
  %s11 = inlined_call_operand.hbm [shape: bf16[2,256,128], index: 11, kind: input, shape index: {}]
  %s12 = inlined_call_operand.hbm [shape: f32[2,1,128], index: 12, kind: input, shape index: {}]
  %s13 = inlined_call_operand.vmem [shape: f32[2,1,128], index: 13, kind: input, shape index: {}]
  %s14 = inlined_call_operand.vmem [shape: f32[2,1,128], index: 14, kind: input, shape index: {}]
  %s15 = inlined_call_operand.hbm [shape: bf16[128,512], index: 15, kind: input, shape index: {}]
  %s16 = inlined_call_operand.hbm [shape: f32[1,512], index: 16, kind: input, shape index: {}]
  %s17 = inlined_call_operand.vmem [shape: f32[2,8,512], index: 17, kind: output, shape index: {}]
  %s18 = sld [smem:[#allocation0]]
  $region114: #{transformer_forward.1} parent=0
    _
  %s20 = ssub.s32 1, %s18
  %s21 = scalar_select 0, %s20, %s18
  %s23 = sshll.u32 %s0, 4
  %s24 = int_to_ptr.vmem [resolvable:$true] %s23
  %26 = dma.vmem_to_smem %s24, 128, [#allocation4], [#allocation3]
  %28 = dma.done [#allocation3], 128
  %29 = sfence
  $region1: #{transformer_forward.1} parent=0
    #allocation5 [shape = 'u8[262144]{0}', space=vmem, size = 0x40000, scoped, tag = 'input window, operand 1, single buffered']
    #allocation6 [shape = 's32[1]{0}', space=sflag, size = 0x4, scoped, tag = 'scoped memory for transformer_forward.1']
    #allocation7 [shape = 'u8[65536]{0}', space=vmem, size = 0x10000, scoped, tag = 'input window, operand 2, single buffered']
    #allocation8 [shape = 's32[1]{0}', space=sflag, size = 0x4, scoped, tag = 'scoped memory for transformer_forward.1']
    #allocation9 [shape = 'u8[196608]{0}', space=vmem, size = 0x30000, scoped, tag = 'input window, operand 3, single buffered']
    #allocation10 [shape = 'u8[65536]{0}', space=vmem, size = 0x10000, scoped, tag = 'input window, operand 5, single buffered']
    #allocation11 [shape = 's32[1]{0}', space=sflag, size = 0x4, scoped, tag = 'scoped memory for transformer_forward.1']
    #allocation12 [shape = 'u8[1024]{0}', space=vmem, size = 0x400, scoped, tag = 'input window, operand 6, single buffered']
    #allocation13 [shape = 'u8[131072]{0}', space=vmem, size = 0x20000, scoped, tag = 'input window, operand 9, single buffered']
    #allocation14 [shape = 's32[1]{0}', space=sflag, size = 0x4, scoped, tag = 'scoped memory for transformer_forward.1']
    #allocation15 [shape = 'u8[131072]{0}', space=vmem, size = 0x20000, scoped, tag = 'input window, operand 11, single buffered']
    #allocation16 [shape = 'u8[1024]{0}', space=vmem, size = 0x400, scoped, tag = 'input window, operand 12, single buffered']
    #allocation17 [shape = 's32[1]{0}', space=sflag, size = 0x4, scoped, tag = 'scoped memory for transformer_forward.1']
    #allocation18 [shape = 'u8[131072]{0}', space=vmem, size = 0x20000, scoped, tag = 'input window, operand 15, single buffered']
    #allocation19 [shape = 'u8[2048]{0}', space=vmem, size = 0x800, scoped, tag = 'input window, operand 16, single buffered']
    #allocation20 [shape = 's32[1]{0}', space=sflag, size = 0x4, scoped, tag = 'scoped memory for transformer_forward.1']
    %30 = vsyncpa [#allocation6], 0
    %31 = vsyncpa [#allocation8], 0
    %32 = vsyncpa [#allocation11], 0
    %33 = vsyncpa [#allocation14], 0
    %34 = vsyncpa [#allocation17], 0
    %35 = vsyncpa [#allocation20], 0
    // Predicated region
    $region2: #{transformer_forward.1} parent=1 // pred_check
      _
    $region3: #{transformer_forward.1} parent=1 // pred_check_branch
      %37 = sbr.rel (0) target = $region5
    $region4: #{transformer_forward.1} parent=1 // pred_region
      %39 = vsyncadd [#allocation6], 0
      %s40 = sshll.u32 %s1, 4
      %s41 = int_to_ptr.hbm [resolvable:$true] %s40
      %s42 = sshll.u32 [#allocation5], 4
      %s43 = int_to_ptr.vmem [resolvable:$true] %s42
      %48 = dma.hbm_to_vmem [thread:$0]  %s41, 8192, %s43, [#allocation6], 128, 128, 8
    $region5: #{transformer_forward.1} parent=1 // pred_fallthru
      _
    // Predicated region
    $region6: #{transformer_forward.1} parent=1 // pred_check
      _
    $region7: #{transformer_forward.1} parent=1 // pred_check_branch
      %50 = sbr.rel (0) target = $region9
    $region8: #{transformer_forward.1} parent=1 // pred_region
      %52 = vsyncadd [#allocation8], 0
      %s53 = sshll.u32 %s2, 4
      %s54 = int_to_ptr.hbm [resolvable:$true] %s53
      %s55 = sshll.u32 [#allocation7], 4
      %s56 = int_to_ptr.vmem [resolvable:$true] %s55
      %61 = dma.hbm_to_vmem [thread:$0]  %s54, 2048, %s56, [#allocation8], 128, 128, 8
    $region9: #{transformer_forward.1} parent=1 // pred_fallthru
      _
    // Predicated region
    $region10: #{transformer_forward.1} parent=1 // pred_check
      _
    $region11: #{transformer_forward.1} parent=1 // pred_check_branch
      %63 = sbr.rel (0) target = $region13
    $region12: #{transformer_forward.1} parent=1 // pred_region
      %65 = vsyncadd [#allocation8], 0
      %s66 = sshll.u32 %s3, 4
      %s67 = int_to_ptr.hbm [resolvable:$true] %s66
      %s68 = sshll.u32 [#allocation9], 4
      %s69 = int_to_ptr.vmem [resolvable:$true] %s68
      %74 = dma.hbm_to_vmem [thread:$0]  %s67, 6144, %s69, [#allocation8], 192, 192, 12
    $region13: #{transformer_forward.1} parent=1 // pred_fallthru
      _
    // Predicated region
    $region14: #{transformer_forward.1} parent=1 // pred_check
      _
    $region15: #{transformer_forward.1} parent=1 // pred_check_branch
      %76 = sbr.rel (0) target = $region17
    $region16: #{transformer_forward.1} parent=1 // pred_region
      _
    $region17: #{transformer_forward.1} parent=1 // pred_fallthru
      _
    // Predicated region
    $region18: #{transformer_forward.1} parent=1 // pred_check
      _
    $region19: #{transformer_forward.1} parent=1 // pred_check_branch
      %78 = sbr.rel (0) target = $region21
    $region20: #{transformer_forward.1} parent=1 // pred_region
      %80 = vsyncadd [#allocation11], 0
      %s81 = sshll.u32 %s5, 4
      %s82 = int_to_ptr.hbm [resolvable:$true] %s81
      %s83 = sshll.u32 [#allocation10], 4
      %s84 = int_to_ptr.vmem [resolvable:$true] %s83
      %89 = dma.hbm_to_vmem [thread:$0]  %s82, 2048, %s84, [#allocation11], 64, 64, 4
    $region21: #{transformer_forward.1} parent=1 // pred_fallthru
      _
    // Predicated region
    $region22: #{transformer_forward.1} parent=1 // pred_check
      _
    $region23: #{transformer_forward.1} parent=1 // pred_check_branch
      %91 = sbr.rel (0) target = $region25
    $region24: #{transformer_forward.1} parent=1 // pred_region
      %93 = vsyncadd [#allocation11], 0
      %s94 = sshll.u32 %s6, 4
      %s95 = int_to_ptr.hbm [resolvable:$true] %s94
      %s96 = sshll.u32 [#allocation12], 4
      %s97 = int_to_ptr.vmem [resolvable:$true] %s96
      %102 = dma.hbm_to_vmem [thread:$0]  %s95, 32, %s97, [#allocation11], 16, 16, 1
    $region25: #{transformer_forward.1} parent=1 // pred_fallthru
      _
    // Predicated region
    $region26: #{transformer_forward.1} parent=1 // pred_check
      _
    $region27: #{transformer_forward.1} parent=1 // pred_check_branch
      %104 = sbr.rel (0) target = $region29
    $region28: #{transformer_forward.1} parent=1 // pred_region
      _
    $region29: #{transformer_forward.1} parent=1 // pred_fallthru
      _
    // Predicated region
    $region30: #{transformer_forward.1} parent=1 // pred_check
      _
    $region31: #{transformer_forward.1} parent=1 // pred_check_branch
      %106 = sbr.rel (0) target = $region33
    $region32: #{transformer_forward.1} parent=1 // pred_region
      _
    $region33: #{transformer_forward.1} parent=1 // pred_fallthru
      _
    // Predicated region
    $region34: #{transformer_forward.1} parent=1 // pred_check
      _
    $region35: #{transformer_forward.1} parent=1 // pred_check_branch
      %108 = sbr.rel (0) target = $region37
    $region36: #{transformer_forward.1} parent=1 // pred_region
      %110 = vsyncadd [#allocation14], 0
      %s111 = sshll.u32 %s9, 4
      %s112 = int_to_ptr.hbm [resolvable:$true] %s111
      %s113 = sshll.u32 [#allocation13], 4
      %s114 = int_to_ptr.vmem [resolvable:$true] %s113
      %119 = dma.hbm_to_vmem [thread:$0]  %s112, 4096, %s114, [#allocation14], 128, 128, 8
    $region37: #{transformer_forward.1} parent=1 // pred_fallthru
      _
    // Predicated region
    $region38: #{transformer_forward.1} parent=1 // pred_check
      _
    $region39: #{transformer_forward.1} parent=1 // pred_check_branch
      %121 = sbr.rel (0) target = $region41
    $region40: #{transformer_forward.1} parent=1 // pred_region
      _
    $region41: #{transformer_forward.1} parent=1 // pred_fallthru
      _
    // Predicated region
    $region42: #{transformer_forward.1} parent=1 // pred_check
      _
    $region43: #{transformer_forward.1} parent=1 // pred_check_branch
      %123 = sbr.rel (0) target = $region45
    $region44: #{transformer_forward.1} parent=1 // pred_region
      %125 = vsyncadd [#allocation14], 0
      %s126 = sshll.u32 %s11, 4
      %s127 = int_to_ptr.hbm [resolvable:$true] %s126
      %s128 = sshll.u32 [#allocation15], 4
      %s129 = int_to_ptr.vmem [resolvable:$true] %s128
      %134 = dma.hbm_to_vmem [thread:$0]  %s127, 4096, %s129, [#allocation14], 64, 64, 4
    $region45: #{transformer_forward.1} parent=1 // pred_fallthru
      _
    // Predicated region
    $region46: #{transformer_forward.1} parent=1 // pred_check
      _
    $region47: #{transformer_forward.1} parent=1 // pred_check_branch
      %136 = sbr.rel (0) target = $region49
    $region48: #{transformer_forward.1} parent=1 // pred_region
      %138 = vsyncadd [#allocation17], 0
      %s139 = sshll.u32 %s12, 4
      %s140 = int_to_ptr.hbm [resolvable:$true] %s139
      %s141 = sshll.u32 [#allocation16], 4
      %s142 = int_to_ptr.vmem [resolvable:$true] %s141
      %147 = dma.hbm_to_vmem [thread:$0]  %s140, 32, %s142, [#allocation17], 16, 16, 1
    $region49: #{transformer_forward.1} parent=1 // pred_fallthru
      _
    // Predicated region
    $region50: #{transformer_forward.1} parent=1 // pred_check
      _
    $region51: #{transformer_forward.1} parent=1 // pred_check_branch
      %149 = sbr.rel (0) target = $region53
    $region52: #{transformer_forward.1} parent=1 // pred_region
      _
    $region53: #{transformer_forward.1} parent=1 // pred_fallthru
      _
    // Predicated region
    $region54: #{transformer_forward.1} parent=1 // pred_check
      _
    $region55: #{transformer_forward.1} parent=1 // pred_check_branch
      %151 = sbr.rel (0) target = $region57
    $region56: #{transformer_forward.1} parent=1 // pred_region
      _
    $region57: #{transformer_forward.1} parent=1 // pred_fallthru
      _
    // Predicated region
    $region58: #{transformer_forward.1} parent=1 // pred_check
      _
    $region59: #{transformer_forward.1} parent=1 // pred_check_branch
      %153 = sbr.rel (0) target = $region61
    $region60: #{transformer_forward.1} parent=1 // pred_region
      %155 = vsyncadd [#allocation17], 0
      %s156 = sshll.u32 %s15, 4
      %s157 = int_to_ptr.hbm [resolvable:$true] %s156
      %s158 = sshll.u32 [#allocation18], 4
      %s159 = int_to_ptr.vmem [resolvable:$true] %s158
      %164 = dma.hbm_to_vmem [thread:$0]  %s157, 4096, %s159, [#allocation17], 256, 256, 16
    $region61: #{transformer_forward.1} parent=1 // pred_fallthru
      _
    // Predicated region
    $region62: #{transformer_forward.1} parent=1 // pred_check
      _
    $region63: #{transformer_forward.1} parent=1 // pred_check_branch
      %166 = sbr.rel (0) target = $region65
    $region64: #{transformer_forward.1} parent=1 // pred_region
      %168 = vsyncadd [#allocation20], 0
      %s170 = sshll.u32 %s16, 4
      %s171 = int_to_ptr.hbm [resolvable:$true] %s170
      %s172 = sshll.u32 [#allocation19], 4
      %s173 = int_to_ptr.vmem [resolvable:$true] %s172
      %175 = dma.hbm_to_vmem [thread:$0]  %s171, 64, %s173, [#allocation20]
    $region65: #{transformer_forward.1} parent=1 // pred_fallthru
      _
    // Predicated region
    $region66: #{transformer_forward.1} parent=1 // pred_check
      _
    $region67: #{transformer_forward.1} parent=1 // pred_check_branch
      %177 = sbr.rel (0) target = $region69
    $region68: #{transformer_forward.1} parent=1 // pred_region
      %179 = dma.done [#allocation6], 8192
    $region69: #{transformer_forward.1} parent=1 // pred_fallthru
      _
    // Predicated region
    $region70: #{transformer_forward.1} parent=1 // pred_check
      _
    $region71: #{transformer_forward.1} parent=1 // pred_check_branch
      %181 = sbr.rel (0) target = $region73
    $region72: #{transformer_forward.1} parent=1 // pred_region
      %183 = dma.done [#allocation8], 2048
    $region73: #{transformer_forward.1} parent=1 // pred_fallthru
      _
    // Predicated region
    $region74: #{transformer_forward.1} parent=1 // pred_check
      _
    $region75: #{transformer_forward.1} parent=1 // pred_check_branch
      %185 = sbr.rel (0) target = $region77
    $region76: #{transformer_forward.1} parent=1 // pred_region
      %187 = dma.done [#allocation8], 6144
    $region77: #{transformer_forward.1} parent=1 // pred_fallthru
      _
    // Predicated region
    $region78: #{transformer_forward.1} parent=1 // pred_check
      _
    $region79: #{transformer_forward.1} parent=1 // pred_check_branch
      %189 = sbr.rel (0) target = $region81
    $region80: #{transformer_forward.1} parent=1 // pred_region
      %191 = dma.done [#allocation11], 2048
    $region81: #{transformer_forward.1} parent=1 // pred_fallthru
      _
    // Predicated region
    $region82: #{transformer_forward.1} parent=1 // pred_check
      _
    $region83: #{transformer_forward.1} parent=1 // pred_check_branch
      %193 = sbr.rel (0) target = $region85
    $region84: #{transformer_forward.1} parent=1 // pred_region
      %195 = dma.done [#allocation11], 32
    $region85: #{transformer_forward.1} parent=1 // pred_fallthru
      _
    // Predicated region
    $region86: #{transformer_forward.1} parent=1 // pred_check
      _
    $region87: #{transformer_forward.1} parent=1 // pred_check_branch
      %197 = sbr.rel (0) target = $region89
    $region88: #{transformer_forward.1} parent=1 // pred_region
      %199 = dma.done [#allocation14], 4096
    $region89: #{transformer_forward.1} parent=1 // pred_fallthru
      _
    // Predicated region
    $region90: #{transformer_forward.1} parent=1 // pred_check
      _
    $region91: #{transformer_forward.1} parent=1 // pred_check_branch
      %201 = sbr.rel (0) target = $region93
    $region92: #{transformer_forward.1} parent=1 // pred_region
      %203 = dma.done [#allocation14], 4096
    $region93: #{transformer_forward.1} parent=1 // pred_fallthru
      _
    // Predicated region
    $region94: #{transformer_forward.1} parent=1 // pred_check
      _
    $region95: #{transformer_forward.1} parent=1 // pred_check_branch
      %205 = sbr.rel (0) target = $region97
    $region96: #{transformer_forward.1} parent=1 // pred_region
      %207 = dma.done [#allocation17], 32
    $region97: #{transformer_forward.1} parent=1 // pred_fallthru
      _
    // Predicated region
    $region98: #{transformer_forward.1} parent=1 // pred_check
      _
    $region99: #{transformer_forward.1} parent=1 // pred_check_branch
      %209 = sbr.rel (0) target = $region101
    $region100: #{transformer_forward.1} parent=1 // pred_region
      %211 = dma.done [#allocation17], 4096
    $region101: #{transformer_forward.1} parent=1 // pred_fallthru
      _
    // Predicated region
    $region102: #{transformer_forward.1} parent=1 // pred_check
      _
    $region103: #{transformer_forward.1} parent=1 // pred_check_branch
      %213 = sbr.rel (0) target = $region105
    $region104: #{transformer_forward.1} parent=1 // pred_region
      %215 = dma.done [#allocation20], 64
    $region105: #{transformer_forward.1} parent=1 // pred_fallthru
      _
    %s217 = sld [smem:[#allocation4]]
    %s218 = scalar_lea.vmem [#allocation5], %s217
    %v219 = vld [vmem:[%s218] sm:$0x1]
    %v220 = vld [vmem:[#allocation7] sm:$0x1]
    %v221 = vadd.f32 %v219, %v220
    %222 = vst [vmem:[#allocation2] sm:$0x1] %v221
    %s223 = sld [smem:[#allocation4 + $0x80]]
    %s224 = scalar_lea.vmem [#allocation5], %s223
    %v225 = vld [vmem:[%s224] sm:$0x1]
    %v226 = vld [vmem:[#allocation7 + $0x1] sm:$0x1]
    %v227 = vadd.f32 %v225, %v226
    %228 = vst [vmem:[#allocation2 + $0x1] sm:$0x1] %v227
    %s229 = sld [smem:[#allocation4 + $0x100]]
    %s230 = scalar_lea.vmem [#allocation5], %s229
    %v231 = vld [vmem:[%s230] sm:$0x1]
    %v232 = vld [vmem:[#allocation7 + $0x2] sm:$0x1]
    %v233 = vadd.f32 %v231, %v232
    %234 = vst [vmem:[#allocation2 + $0x2] sm:$0x1] %v233
    %s235 = sld [smem:[#allocation4 + $0x180]]
    %s236 = scalar_lea.vmem [#allocation5], %s235
    %v237 = vld [vmem:[%s236] sm:$0x1]
    %v238 = vld [vmem:[#allocation7 + $0x3] sm:$0x1]
    %v239 = vadd.f32 %v237, %v238
    %240 = vst [vmem:[#allocation2 + $0x3] sm:$0x1] %v239
    %s241 = sld [smem:[#allocation4 + $0x200]]
    %s242 = scalar_lea.vmem [#allocation5], %s241
    %v243 = vld [vmem:[%s242] sm:$0x1]
    %v244 = vld [vmem:[#allocation7 + $0x4] sm:$0x1]
    %v245 = vadd.f32 %v243, %v244
    %246 = vst [vmem:[#allocation2 + $0x4] sm:$0x1] %v245
    %s247 = sld [smem:[#allocation4 + $0x280]]
    %s248 = scalar_lea.vmem [#allocation5], %s247
    %v249 = vld [vmem:[%s248] sm:$0x1]
    %v250 = vld [vmem:[#allocation7 + $0x5] sm:$0x1]
    %v251 = vadd.f32 %v249, %v250
    %252 = vst [vmem:[#allocation2 + $0x5] sm:$0x1] %v251
    %s253 = sld [smem:[#allocation4 + $0x300]]
    %s254 = scalar_lea.vmem [#allocation5], %s253
    %v255 = vld [vmem:[%s254] sm:$0x1]
    %v256 = vld [vmem:[#allocation7 + $0x6] sm:$0x1]
    %v257 = vadd.f32 %v255, %v256
    %258 = vst [vmem:[#allocation2 + $0x6] sm:$0x1] %v257
    %s259 = sld [smem:[#allocation4 + $0x380]]
    %s260 = scalar_lea.vmem [#allocation5], %s259
    %v261 = vld [vmem:[%s260] sm:$0x1]
    %v262 = vld [vmem:[#allocation7 + $0x7] sm:$0x1]
    %v263 = vadd.f32 %v261, %v262
    %264 = vst [vmem:[#allocation2 + $0x7] sm:$0x1] %v263
    %s265 = sld [smem:[#allocation4 + $0x1]]
    %s266 = scalar_lea.vmem [#allocation5], %s265
    %v267 = vld [vmem:[%s266] sm:$0x1]
    %v268 = vld [vmem:[#allocation7] sm:$0x1]
    %v269 = vadd.f32 %v267, %v268
    %270 = vst [vmem:[#allocation2 + $0x8] sm:$0x1] %v269
    %s271 = sld [smem:[#allocation4 + $0x81]]
    %s272 = scalar_lea.vmem [#allocation5], %s271
    %v273 = vld [vmem:[%s272] sm:$0x1]
    %v274 = vld [vmem:[#allocation7 + $0x1] sm:$0x1]
    %v275 = vadd.f32 %v273, %v274
    %276 = vst [vmem:[#allocation2 + $0x9] sm:$0x1] %v275
    %s277 = sld [smem:[#allocation4 + $0x101]]
    %s278 = scalar_lea.vmem [#allocation5], %s277
    %v279 = vld [vmem:[%s278] sm:$0x1]
    %v280 = vld [vmem:[#allocation7 + $0x2] sm:$0x1]
    %v281 = vadd.f32 %v279, %v280
    %282 = vst [vmem:[#allocation2 + $0xa] sm:$0x1] %v281
    %s283 = sld [smem:[#allocation4 + $0x181]]
    %s284 = scalar_lea.vmem [#allocation5], %s283
    %v285 = vld [vmem:[%s284] sm:$0x1]
    %v286 = vld [vmem:[#allocation7 + $0x3] sm:$0x1]
    %v287 = vadd.f32 %v285, %v286
    %288 = vst [vmem:[#allocation2 + $0xb] sm:$0x1] %v287
    %s289 = sld [smem:[#allocation4 + $0x201]]
    %s290 = scalar_lea.vmem [#allocation5], %s289
    %v291 = vld [vmem:[%s290] sm:$0x1]
    %v292 = vld [vmem:[#allocation7 + $0x4] sm:$0x1]
    %v293 = vadd.f32 %v291, %v292
    %294 = vst [vmem:[#allocation2 + $0xc] sm:$0x1] %v293
    %s295 = sld [smem:[#allocation4 + $0x281]]
    %s296 = scalar_lea.vmem [#allocation5], %s295
    %v297 = vld [vmem:[%s296] sm:$0x1]
    %v298 = vld [vmem:[#allocation7 + $0x5] sm:$0x1]
    %v299 = vadd.f32 %v297, %v298
    %300 = vst [vmem:[#allocation2 + $0xd] sm:$0x1] %v299
    %s301 = sld [smem:[#allocation4 + $0x301]]
    %s302 = scalar_lea.vmem [#allocation5], %s301
    %v303 = vld [vmem:[%s302] sm:$0x1]
    %v304 = vld [vmem:[#allocation7 + $0x6] sm:$0x1]
    %v305 = vadd.f32 %v303, %v304
    %306 = vst [vmem:[#allocation2 + $0xe] sm:$0x1] %v305
    %s307 = sld [smem:[#allocation4 + $0x381]]
    %s308 = scalar_lea.vmem [#allocation5], %s307
    %v309 = vld [vmem:[%s308] sm:$0x1]
    %v310 = vld [vmem:[#allocation7 + $0x7] sm:$0x1]
    %v311 = vadd.f32 %v309, %v310
    %312 = vst [vmem:[#allocation2 + $0xf] sm:$0x1] %v311
    %v313 = vld [vmem:[#allocation2] sm:$0xff]
    %v314 = vld [vmem:[#allocation2 + $0x8] sm:$0xff]
    %v315 = vld [vmem:[#allocation9] sm:$0xff]
    %v316 = vld [vmem:[#allocation9 + $0x8] sm:$0xf]
    %v317 = vld [vmem:[#allocation9 + $0xc] sm:$0xff]
    %v318 = vld [vmem:[#allocation9 + $0x14] sm:$0xf]
    %v319 = vld [vmem:[#allocation9 + $0x18] sm:$0xff]
    %v320 = vld [vmem:[#allocation9 + $0x20] sm:$0xf]
    %v321 = vld [vmem:[#allocation9 + $0x24] sm:$0xff]
    %v322 = vld [vmem:[#allocation9 + $0x2c] sm:$0xf]
    %v323 = vld [vmem:[#allocation9 + $0x30] sm:$0xff]
    %v324 = vld [vmem:[#allocation9 + $0x38] sm:$0xf]
    %v325 = vld [vmem:[#allocation9 + $0x3c] sm:$0xff]
    %v326 = vld [vmem:[#allocation9 + $0x44] sm:$0xf]
    %v327 = vld [vmem:[#allocation9 + $0x48] sm:$0xff]
    %v328 = vld [vmem:[#allocation9 + $0x50] sm:$0xf]
    %v329 = vld [vmem:[#allocation9 + $0x54] sm:$0xff]
    %v330 = vld [vmem:[#allocation9 + $0x5c] sm:$0xf]
    %v331 = vld [vmem:[#allocation9 + $0x60] sm:$0xff]
    %v332 = vld [vmem:[#allocation9 + $0x68] sm:$0xf]
    %v333 = vld [vmem:[#allocation9 + $0x6c] sm:$0xff]
    %v334 = vld [vmem:[#allocation9 + $0x74] sm:$0xf]
    %v335 = vld [vmem:[#allocation9 + $0x78] sm:$0xff]
    %v336 = vld [vmem:[#allocation9 + $0x80] sm:$0xf]
    %v337 = vld [vmem:[#allocation9 + $0x84] sm:$0xff]
    %v338 = vld [vmem:[#allocation9 + $0x8c] sm:$0xf]
    %v339 = vld [vmem:[#allocation9 + $0x90] sm:$0xff]
    %v340 = vld [vmem:[#allocation9 + $0x98] sm:$0xf]
    %v341 = vld [vmem:[#allocation9 + $0x9c] sm:$0xff]
    %v342 = vld [vmem:[#allocation9 + $0xa4] sm:$0xf]
    %v343 = vld [vmem:[#allocation9 + $0xa8] sm:$0xff]
    %v344 = vld [vmem:[#allocation9 + $0xb0] sm:$0xf]
    %v345 = vld [vmem:[#allocation9 + $0xb4] sm:$0xff]
    %v346 = vld [vmem:[#allocation9 + $0xbc] sm:$0xf]
    %v347 = vpack.c.bf16 %v314, %v313
    %v348 = vld [vmem:[%s4] sm:$0x7]
    %v350 = vperm.slane %v348, 0
    %v351 = vperm.slane %v348, 1
    %v352 = vperm.slane %v348, 2
    %v388 = vunpack.c.l.b16 %v315
    %v389 = vunpack.c.h.b16 %v315
    %v390 = vunpack.c.l.b16 %v316
    %v391 = vunpack.c.l.b16 %v317
    %v392 = vunpack.c.h.b16 %v317
    %v393 = vunpack.c.l.b16 %v318
    %v394 = vunpack.c.l.b16 %v319
    %v395 = vunpack.c.h.b16 %v319
    %v396 = vunpack.c.l.b16 %v320
    %v397 = vunpack.c.l.b16 %v321
    %v398 = vunpack.c.h.b16 %v321
    %v399 = vunpack.c.l.b16 %v322
    %v400 = vunpack.c.l.b16 %v323
    %v401 = vunpack.c.h.b16 %v323
    %v402 = vunpack.c.l.b16 %v324
    %v403 = vunpack.c.l.b16 %v325
    %v404 = vunpack.c.h.b16 %v325
    %v405 = vunpack.c.l.b16 %v326
    %v406 = vunpack.c.l.b16 %v327
    %v407 = vunpack.c.h.b16 %v327
    %v408 = vunpack.c.l.b16 %v328
    %v409 = vunpack.c.l.b16 %v329
    %v410 = vunpack.c.h.b16 %v329
    %v411 = vunpack.c.l.b16 %v330
    %v412 = vunpack.c.l.b16 %v331
    %v413 = vunpack.c.h.b16 %v331
    %v414 = vunpack.c.l.b16 %v332
    %v415 = vunpack.c.l.b16 %v333
    %v416 = vunpack.c.h.b16 %v333
    %v417 = vunpack.c.l.b16 %v334
    %v418 = vunpack.c.l.b16 %v335
    %v419 = vunpack.c.h.b16 %v335
    %v420 = vunpack.c.l.b16 %v336
    %v421 = vunpack.c.l.b16 %v337
    %v422 = vunpack.c.h.b16 %v337
    %v423 = vunpack.c.l.b16 %v338
    %v424 = vunpack.c.l.b16 %v339
    %v425 = vunpack.c.h.b16 %v339
    %v426 = vunpack.c.l.b16 %v340
    %v427 = vunpack.c.l.b16 %v341
    %v428 = vunpack.c.h.b16 %v341
    %v429 = vunpack.c.l.b16 %v342
    %v430 = vunpack.c.l.b16 %v343
    %v431 = vunpack.c.h.b16 %v343
    %v432 = vunpack.c.l.b16 %v344
    %v433 = vunpack.c.l.b16 %v345
    %v434 = vunpack.c.h.b16 %v345
    %v435 = vunpack.c.l.b16 %v346
    %v436 = vpack.c.b16 %v391, %v388
    %v437 = vpack.c.b16 %v392, %v389
    %v438 = vpack.c.b16 %v393, %v390
    %v439 = vpack.c.b16 %v397, %v394
    %v440 = vpack.c.b16 %v398, %v395
    %v441 = vpack.c.b16 %v399, %v396
    %v442 = vpack.c.b16 %v403, %v400
    %v443 = vpack.c.b16 %v404, %v401
    %v444 = vpack.c.b16 %v405, %v402
    %v445 = vpack.c.b16 %v409, %v406
    %v446 = vpack.c.b16 %v410, %v407
    %v447 = vpack.c.b16 %v411, %v408
    %v448 = vpack.c.b16 %v415, %v412
    %v449 = vpack.c.b16 %v416, %v413
    %v450 = vpack.c.b16 %v417, %v414
    %v451 = vpack.c.b16 %v421, %v418
    %v452 = vpack.c.b16 %v422, %v419
    %v453 = vpack.c.b16 %v423, %v420
    %v454 = vpack.c.b16 %v427, %v424
    %v455 = vpack.c.b16 %v428, %v425
    %v456 = vpack.c.b16 %v429, %v426
    %v457 = vpack.c.b16 %v433, %v430
    %v458 = vpack.c.b16 %v434, %v431
    %v459 = vpack.c.b16 %v435, %v432
    %484 = vmatpush.bf16.msra.mxu0 %v457
    %485 = vmatpush.bf16.msra.mxu0 %v454
    %486 = vmatpush.bf16.msra.mxu0 %v451
    %487 = vmatpush.bf16.msra.mxu0 %v448
    %488 = vmatpush.bf16.msra.mxu0 %v445
    %489 = vmatpush.bf16.msra.mxu0 %v442
    %490 = vmatpush.bf16.msra.mxu0 %v439
    %491 = vmatpush.bf16.msra.mxu0 %v436
    %492 = vmatmul.bf16.gmra.mxu0 %v347
    %v493 = vpop.f32.mrf.mxu0
    %v494 = vadd.f32 %v350, %v493
    %v495 = vpop.f32.mrf.mxu0
    %v496 = vadd.f32 %v350, %v495
    %497 = vdwg.mxu0
    %498 = vmatpush.bf16.msra.mxu0 %v458
    %499 = vmatpush.bf16.msra.mxu0 %v455
    %500 = vmatpush.bf16.msra.mxu0 %v452
    %501 = vmatpush.bf16.msra.mxu0 %v449
    %502 = vmatpush.bf16.msra.mxu0 %v446
    %503 = vmatpush.bf16.msra.mxu0 %v443
    %504 = vmatpush.bf16.msra.mxu0 %v440
    %505 = vmatpush.bf16.msra.mxu0 %v437
    %506 = vmatmul.bf16.gmra.mxu0 %v347
    %v507 = vpop.f32.mrf.mxu0
    %v508 = vadd.f32 %v351, %v507
    %v509 = vpop.f32.mrf.mxu0
    %v510 = vadd.f32 %v351, %v509
    %511 = vdwg.mxu0
    %512 = vmatpush.bf16.msra.mxu0 %v459
    %513 = vmatpush.bf16.msra.mxu0 %v456
    %514 = vmatpush.bf16.msra.mxu0 %v453
    %515 = vmatpush.bf16.msra.mxu0 %v450
    %516 = vmatpush.bf16.msra.mxu0 %v447
    %517 = vmatpush.bf16.msra.mxu0 %v444
    %518 = vmatpush.bf16.msra.mxu0 %v441
    %519 = vmatpush.bf16.msra.mxu0 %v438
    %520 = vmatmul.bf16.gmra.mxu0 %v347
    %v521 = vpop.f32.mrf.mxu0
    %v522 = vadd.f32 %v352, %v521
    %v523 = vpop.f32.mrf.mxu0
    %v524 = vadd.f32 %v352, %v523
    %525 = vdwg.mxu0
    %v526 = vld [vmem:[#allocation10] sm:$0xf]
    %v527 = vld [vmem:[#allocation10 + $0x4] sm:$0xf]
    %v528 = vld [vmem:[#allocation10 + $0x8] sm:$0xf]
    %v529 = vld [vmem:[#allocation10 + $0xc] sm:$0xf]
    %v530 = vld [vmem:[#allocation10 + $0x10] sm:$0xf]
    %v531 = vld [vmem:[#allocation10 + $0x14] sm:$0xf]
    %v532 = vld [vmem:[#allocation10 + $0x18] sm:$0xf]
    %v533 = vld [vmem:[#allocation10 + $0x1c] sm:$0xf]
    %v534 = vld [vmem:[#allocation10 + $0x20] sm:$0xf]
    %v535 = vld [vmem:[#allocation10 + $0x24] sm:$0xf]
    %v536 = vld [vmem:[#allocation10 + $0x28] sm:$0xf]
    %v537 = vld [vmem:[#allocation10 + $0x2c] sm:$0xf]
    %v538 = vld [vmem:[#allocation10 + $0x30] sm:$0xf]
    %v539 = vld [vmem:[#allocation10 + $0x34] sm:$0xf]
    %v540 = vld [vmem:[#allocation10 + $0x38] sm:$0xf]
    %v541 = vld [vmem:[#allocation10 + $0x3c] sm:$0xf]
    %v542 = vpack.c.bf16 %v494, %v494
    %v543 = vpack.c.bf16 %v496, %v496
    %v544 = vpack.c.bf16 %v508, %v508
    %v545 = vpack.c.bf16 %v510, %v510
    %v546 = vpack.c.bf16 %v522, %v522
    %v547 = vpack.c.bf16 %v524, %v524
    %vm548 = vcmask 261120
    %v550 = vsel %vm548, %v542, 0
    %v553 = vsel %vm548, %v544, 0
    %555 = vmatpush.bf16.xpose.msra.mxu0 0
    %556 = vmatpush.bf16.xpose.msra.mxu0 0
    %557 = vmatpush.bf16.xpose.msra.mxu0 0
    %558 = vmatpush.bf16.xpose.msra.mxu0 0
    %559 = vmatpush.bf16.xpose.msra.mxu0 0
    %560 = vmatpush.bf16.xpose.msra.mxu0 0
    %561 = vmatpush.bf16.xpose.msra.mxu0 0
    %562 = vmatpush.bf16.xpose.msra.mxu0 %v553
    %563 = vmatmul.bf16.gmra.mxu0 %v550
    %v564 = vpop.f32.mrf.mxu0
    %v565 = vadd.f32 0.0, %v564
    %v566 = vpop.f32.mrf.mxu0
    %567 = vdwg.mxu0
    %v569 = vsel %vm548, %v543, 0
    %v572 = vsel %vm548, %v545, 0
    %574 = vmatpush.bf16.xpose.msra.mxu0 0
    %575 = vmatpush.bf16.xpose.msra.mxu0 0
    %576 = vmatpush.bf16.xpose.msra.mxu0 0
    %577 = vmatpush.bf16.xpose.msra.mxu0 0
    %578 = vmatpush.bf16.xpose.msra.mxu0 0
    %579 = vmatpush.bf16.xpose.msra.mxu0 0
    %580 = vmatpush.bf16.xpose.msra.mxu0 0
    %581 = vmatpush.bf16.xpose.msra.mxu0 %v572
    %582 = vmatmul.bf16.gmra.mxu0 %v569
    %v583 = vpop.f32.mrf.mxu0
    %v584 = vadd.f32 0.0, %v583
    %v585 = vpop.f32.mrf.mxu0
    %586 = vdwg.mxu0
    %vm587 = vcmask 64512
    %v588 = vsel %vm587, %v565, -inf
    %589 = vmax.xlane.f32.xlu0 %v588
    %v590 = vpop.xlane.xlu0 %589
    %v591 = vsel %vm587, %v584, -inf
    %592 = vmax.xlane.f32.xlu0 %v591
    %v593 = vpop.xlane.xlu0 %592
    %v594 = vsub.f32 %v565, %v590
    %v595 = vsub.f32 %v584, %v593
    %v596 = vmul.f32 %v594, 1.442695
    %v597 = vpow.pop %v596
    %v598 = vmul.f32 %v595, 1.442695
    %v599 = vpow.pop %v598
    %v600 = vsel %vm587, %v597, 0.0
    %601 = vadd.xlane.f32.xlu0 %v600
    %v602 = vpop.xlane.xlu0 %601
    %v603 = vsel %vm587, %v599, 0.0
    %604 = vadd.xlane.f32.xlu0 %v603
    %v605 = vpop.xlane.xlu0 %604
    %v606 = vrcp.pop %v602
    %v607 = vrcp.pop %v605
    %v608 = vmul.f32 %v597, %v606
    %v609 = vmul.f32 %v599, %v607
    %v610 = vpack.c.bf16 %v608, %v608
    %v611 = vpack.c.bf16 %v609, %v609
    %v613 = vsel %vm587, %v610, 0
    %vm615 = vcmask 1043456
    %v617 = vsel %vm615, %v546, 0
    %619 = vmatpush.bf16.msra.mxu0 0
    %620 = vmatpush.bf16.msra.mxu0 0
    %621 = vmatpush.bf16.msra.mxu0 0
    %622 = vmatpush.bf16.msra.mxu0 0
    %623 = vmatpush.bf16.msra.mxu0 0
    %624 = vmatpush.bf16.msra.mxu0 0
    %625 = vmatpush.bf16.msra.mxu0 0
    %626 = vmatpush.bf16.msra.mxu0 %v617
    %627 = vmatmul.bf16.gmra.mxu0 %v613
    %v628 = vpop.f32.mrf.mxu0
    %v629 = vadd.f32 0.0, %v628
    %v630 = vpop.f32.mrf.mxu0
    %631 = vdwg.mxu0
    %v633 = vsel %vm587, %v611, 0
    %v636 = vsel %vm615, %v547, 0
    %638 = vmatpush.bf16.msra.mxu0 0
    %639 = vmatpush.bf16.msra.mxu0 0
    %640 = vmatpush.bf16.msra.mxu0 0
    %641 = vmatpush.bf16.msra.mxu0 0
    %642 = vmatpush.bf16.msra.mxu0 0
    %643 = vmatpush.bf16.msra.mxu0 0
    %644 = vmatpush.bf16.msra.mxu0 0
    %645 = vmatpush.bf16.msra.mxu0 %v636
    %646 = vmatmul.bf16.gmra.mxu0 %v633
    %v647 = vpop.f32.mrf.mxu0
    %v648 = vadd.f32 0.0, %v647
    %v649 = vpop.f32.mrf.mxu0
    %650 = vdwg.mxu0
    %v651 = vpack.c.bf16 %v648, %v629
    %v653 = vunpack.c.l.b16 %v542
    %v654 = vpack.c.b16 %v653, %v653
    %655 = vrot.lane.b32.xlu0 %v654, 96
    %v656 = vpop.permute.xlu0 %655
    %v658 = vunpack.c.l.b16 %v544
    %v659 = vpack.c.b16 %v658, %v658
    %660 = vrot.lane.b32.xlu0 %v659, 96
    %v661 = vpop.permute.xlu0 %660
    %v663 = vsel %vm548, %v656, 0
    %v666 = vsel %vm548, %v661, 0
    %668 = vmatpush.bf16.xpose.msra.mxu0 0
    %669 = vmatpush.bf16.xpose.msra.mxu0 0
    %670 = vmatpush.bf16.xpose.msra.mxu0 0
    %671 = vmatpush.bf16.xpose.msra.mxu0 0
    %672 = vmatpush.bf16.xpose.msra.mxu0 0
    %673 = vmatpush.bf16.xpose.msra.mxu0 0
    %674 = vmatpush.bf16.xpose.msra.mxu0 0
    %675 = vmatpush.bf16.xpose.msra.mxu0 %v666
    %676 = vmatmul.bf16.gmra.mxu0 %v663
    %v677 = vpop.f32.mrf.mxu0
    %v678 = vadd.f32 0.0, %v677
    %v679 = vpop.f32.mrf.mxu0
    %680 = vdwg.mxu0
    %v682 = vunpack.c.l.b16 %v543
    %v683 = vpack.c.b16 %v682, %v682
    %684 = vrot.lane.b32.xlu0 %v683, 96
    %v685 = vpop.permute.xlu0 %684
    %v687 = vunpack.c.l.b16 %v545
    %v688 = vpack.c.b16 %v687, %v687
    %689 = vrot.lane.b32.xlu0 %v688, 96
    %v690 = vpop.permute.xlu0 %689
    %v692 = vsel %vm548, %v685, 0
    %v695 = vsel %vm548, %v690, 0
    %697 = vmatpush.bf16.xpose.msra.mxu0 0
    %698 = vmatpush.bf16.xpose.msra.mxu0 0
    %699 = vmatpush.bf16.xpose.msra.mxu0 0
    %700 = vmatpush.bf16.xpose.msra.mxu0 0
    %701 = vmatpush.bf16.xpose.msra.mxu0 0
    %702 = vmatpush.bf16.xpose.msra.mxu0 0
    %703 = vmatpush.bf16.xpose.msra.mxu0 0
    %704 = vmatpush.bf16.xpose.msra.mxu0 %v695
    %705 = vmatmul.bf16.gmra.mxu0 %v692
    %v706 = vpop.f32.mrf.mxu0
    %v707 = vadd.f32 0.0, %v706
    %v708 = vpop.f32.mrf.mxu0
    %709 = vdwg.mxu0
    %v710 = vsel %vm587, %v678, -inf
    %711 = vmax.xlane.f32.xlu0 %v710
    %v712 = vpop.xlane.xlu0 %711
    %v713 = vsel %vm587, %v707, -inf
    %714 = vmax.xlane.f32.xlu0 %v713
    %v715 = vpop.xlane.xlu0 %714
    %v716 = vsub.f32 %v678, %v712
    %v717 = vsub.f32 %v707, %v715
    %v718 = vmul.f32 %v716, 1.442695
    %v719 = vpow.pop %v718
    %v720 = vmul.f32 %v717, 1.442695
    %v721 = vpow.pop %v720
    %v722 = vsel %vm587, %v719, 0.0
    %723 = vadd.xlane.f32.xlu0 %v722
    %v724 = vpop.xlane.xlu0 %723
    %v725 = vsel %vm587, %v721, 0.0
    %726 = vadd.xlane.f32.xlu0 %v725
    %v727 = vpop.xlane.xlu0 %726
    %v728 = vrcp.pop %v724
    %v729 = vrcp.pop %v727
    %v730 = vmul.f32 %v719, %v728
    %v731 = vmul.f32 %v721, %v729
    %v732 = vpack.c.bf16 %v730, %v730
    %v733 = vpack.c.bf16 %v731, %v731
    %v735 = vunpack.c.l.b16 %v546
    %v736 = vpack.c.b16 %v735, %v735
    %737 = vrot.lane.b32.xlu0 %v736, 96
    %v738 = vpop.permute.xlu0 %737
    %v740 = vsel %vm587, %v732, 0
    %v743 = vsel %vm615, %v738, 0
    %745 = vmatpush.bf16.msra.mxu0 0
    %746 = vmatpush.bf16.msra.mxu0 0
    %747 = vmatpush.bf16.msra.mxu0 0
    %748 = vmatpush.bf16.msra.mxu0 0
    %749 = vmatpush.bf16.msra.mxu0 0
    %750 = vmatpush.bf16.msra.mxu0 0
    %751 = vmatpush.bf16.msra.mxu0 0
    %752 = vmatpush.bf16.msra.mxu0 %v743
    %753 = vmatmul.bf16.gmra.mxu0 %v740
    %v754 = vpop.f32.mrf.mxu0
    %v755 = vadd.f32 0.0, %v754
    %v756 = vpop.f32.mrf.mxu0
    %757 = vdwg.mxu0
    %v759 = vunpack.c.l.b16 %v547
    %v760 = vpack.c.b16 %v759, %v759
    %761 = vrot.lane.b32.xlu0 %v760, 96
    %v762 = vpop.permute.xlu0 %761
    %v764 = vsel %vm587, %v733, 0
    %v767 = vsel %vm615, %v762, 0
    %769 = vmatpush.bf16.msra.mxu0 0
    %770 = vmatpush.bf16.msra.mxu0 0
    %771 = vmatpush.bf16.msra.mxu0 0
    %772 = vmatpush.bf16.msra.mxu0 0
    %773 = vmatpush.bf16.msra.mxu0 0
    %774 = vmatpush.bf16.msra.mxu0 0
    %775 = vmatpush.bf16.msra.mxu0 0
    %776 = vmatpush.bf16.msra.mxu0 %v767
    %777 = vmatmul.bf16.gmra.mxu0 %v764
    %v778 = vpop.f32.mrf.mxu0
    %v779 = vadd.f32 0.0, %v778
    %v780 = vpop.f32.mrf.mxu0
    %781 = vdwg.mxu0
    %v782 = vpack.c.bf16 %v779, %v755
    %v787 = vunpack.c.l.b16 %v530
    %v788 = vunpack.c.l.b16 %v531
    %v789 = vunpack.c.l.b16 %v532
    %v790 = vunpack.c.l.b16 %v533
    %v791 = vpack.c.b16 %v788, %v787
    %v792 = vpack.c.b16 %v790, %v789
    %v796 = vsel %vm548, %v782, 0
    %798 = vmatpush.bf16.msra.mxu0 0
    %799 = vmatpush.bf16.msra.mxu0 0
    %800 = vmatpush.bf16.msra.mxu0 0
    %801 = vmatpush.bf16.msra.mxu0 0
    %802 = vmatpush.bf16.msra.mxu0 0
    %803 = vmatpush.bf16.msra.mxu0 0
    %804 = vmatpush.bf16.msra.mxu0 %v792
    %805 = vmatpush.bf16.msra.mxu0 %v791
    %806 = vmatmul.bf16.gmra.mxu0 %v796
    %v807 = vpop.f32.mrf.mxu0
    %v808 = vadd.f32 0.0, %v807
    %v809 = vpop.f32.mrf.mxu0
    %v810 = vadd.f32 0.0, %v809
    %811 = vdwg.mxu0
    %v816 = vunpack.c.l.b16 %v526
    %v817 = vunpack.c.l.b16 %v527
    %v818 = vunpack.c.l.b16 %v528
    %v819 = vunpack.c.l.b16 %v529
    %v820 = vpack.c.b16 %v817, %v816
    %v821 = vpack.c.b16 %v819, %v818
    %v825 = vsel %vm548, %v651, 0
    %827 = vmatpush.bf16.msra.mxu0 0
    %828 = vmatpush.bf16.msra.mxu0 0
    %829 = vmatpush.bf16.msra.mxu0 0
    %830 = vmatpush.bf16.msra.mxu0 0
    %831 = vmatpush.bf16.msra.mxu0 0
    %832 = vmatpush.bf16.msra.mxu0 0
    %833 = vmatpush.bf16.msra.mxu0 %v821
    %834 = vmatpush.bf16.msra.mxu0 %v820
    %835 = vmatmul.bf16.gmra.mxu0 %v825
    %v836 = vpop.f32.mrf.mxu0
    %v837 = vadd.f32 %v808, %v836
    %v838 = vpop.f32.mrf.mxu0
    %v839 = vadd.f32 %v810, %v838
    %840 = vdwg.mxu0
    %841 = vrot.lane.b32.xlu0 %v654, 64
    %v842 = vpop.permute.xlu0 %841
    %843 = vrot.lane.b32.xlu0 %v659, 64
    %v844 = vpop.permute.xlu0 %843
    %v846 = vsel %vm548, %v842, 0
    %v849 = vsel %vm548, %v844, 0
    %851 = vmatpush.bf16.xpose.msra.mxu0 0
    %852 = vmatpush.bf16.xpose.msra.mxu0 0
    %853 = vmatpush.bf16.xpose.msra.mxu0 0
    %854 = vmatpush.bf16.xpose.msra.mxu0 0
    %855 = vmatpush.bf16.xpose.msra.mxu0 0
    %856 = vmatpush.bf16.xpose.msra.mxu0 0
    %857 = vmatpush.bf16.xpose.msra.mxu0 0
    %858 = vmatpush.bf16.xpose.msra.mxu0 %v849
    %859 = vmatmul.bf16.gmra.mxu0 %v846
    %v860 = vpop.f32.mrf.mxu0
    %v861 = vadd.f32 0.0, %v860
    %v862 = vpop.f32.mrf.mxu0
    %863 = vdwg.mxu0
    %864 = vrot.lane.b32.xlu0 %v683, 64
    %v865 = vpop.permute.xlu0 %864
    %866 = vrot.lane.b32.xlu0 %v688, 64
    %v867 = vpop.permute.xlu0 %866
    %v869 = vsel %vm548, %v865, 0
    %v872 = vsel %vm548, %v867, 0
    %874 = vmatpush.bf16.xpose.msra.mxu0 0
    %875 = vmatpush.bf16.xpose.msra.mxu0 0
    %876 = vmatpush.bf16.xpose.msra.mxu0 0
    %877 = vmatpush.bf16.xpose.msra.mxu0 0
    %878 = vmatpush.bf16.xpose.msra.mxu0 0
    %879 = vmatpush.bf16.xpose.msra.mxu0 0
    %880 = vmatpush.bf16.xpose.msra.mxu0 0
    %881 = vmatpush.bf16.xpose.msra.mxu0 %v872
    %882 = vmatmul.bf16.gmra.mxu0 %v869
    %v883 = vpop.f32.mrf.mxu0
    %v884 = vadd.f32 0.0, %v883
    %v885 = vpop.f32.mrf.mxu0
    %886 = vdwg.mxu0
    %v887 = vsel %vm587, %v861, -inf
    %888 = vmax.xlane.f32.xlu0 %v887
    %v889 = vpop.xlane.xlu0 %888
    %v890 = vsel %vm587, %v884, -inf
    %891 = vmax.xlane.f32.xlu0 %v890
    %v892 = vpop.xlane.xlu0 %891
    %v893 = vsub.f32 %v861, %v889
    %v894 = vsub.f32 %v884, %v892
    %v895 = vmul.f32 %v893, 1.442695
    %v896 = vpow.pop %v895
    %v897 = vmul.f32 %v894, 1.442695
    %v898 = vpow.pop %v897
    %v899 = vsel %vm587, %v896, 0.0
    %900 = vadd.xlane.f32.xlu0 %v899
    %v901 = vpop.xlane.xlu0 %900
    %v902 = vsel %vm587, %v898, 0.0
    %903 = vadd.xlane.f32.xlu0 %v902
    %v904 = vpop.xlane.xlu0 %903
    %v905 = vrcp.pop %v901
    %v906 = vrcp.pop %v904
    %v907 = vmul.f32 %v896, %v905
    %v908 = vmul.f32 %v898, %v906
    %v909 = vpack.c.bf16 %v907, %v907
    %v910 = vpack.c.bf16 %v908, %v908
    %911 = vrot.lane.b32.xlu0 %v736, 64
    %v912 = vpop.permute.xlu0 %911
    %v914 = vsel %vm587, %v909, 0
    %v917 = vsel %vm615, %v912, 0
    %919 = vmatpush.bf16.msra.mxu0 0
    %920 = vmatpush.bf16.msra.mxu0 0
    %921 = vmatpush.bf16.msra.mxu0 0
    %922 = vmatpush.bf16.msra.mxu0 0
    %923 = vmatpush.bf16.msra.mxu0 0
    %924 = vmatpush.bf16.msra.mxu0 0
    %925 = vmatpush.bf16.msra.mxu0 0
    %926 = vmatpush.bf16.msra.mxu0 %v917
    %927 = vmatmul.bf16.gmra.mxu0 %v914
    %v928 = vpop.f32.mrf.mxu0
    %v929 = vadd.f32 0.0, %v928
    %v930 = vpop.f32.mrf.mxu0
    %931 = vdwg.mxu0
    %932 = vrot.lane.b32.xlu0 %v760, 64
    %v933 = vpop.permute.xlu0 %932
    %v935 = vsel %vm587, %v910, 0
    %v938 = vsel %vm615, %v933, 0
    %940 = vmatpush.bf16.msra.mxu0 0
    %941 = vmatpush.bf16.msra.mxu0 0
    %942 = vmatpush.bf16.msra.mxu0 0
    %943 = vmatpush.bf16.msra.mxu0 0
    %944 = vmatpush.bf16.msra.mxu0 0
    %945 = vmatpush.bf16.msra.mxu0 0
    %946 = vmatpush.bf16.msra.mxu0 0
    %947 = vmatpush.bf16.msra.mxu0 %v938
    %948 = vmatmul.bf16.gmra.mxu0 %v935
    %v949 = vpop.f32.mrf.mxu0
    %v950 = vadd.f32 0.0, %v949
    %v951 = vpop.f32.mrf.mxu0
    %952 = vdwg.mxu0
    %v953 = vpack.c.bf16 %v950, %v929
    %v958 = vunpack.c.l.b16 %v534
    %v959 = vunpack.c.l.b16 %v535
    %v960 = vunpack.c.l.b16 %v536
    %v961 = vunpack.c.l.b16 %v537
    %v962 = vpack.c.b16 %v959, %v958
    %v963 = vpack.c.b16 %v961, %v960
    %v967 = vsel %vm548, %v953, 0
    %969 = vmatpush.bf16.msra.mxu0 0
    %970 = vmatpush.bf16.msra.mxu0 0
    %971 = vmatpush.bf16.msra.mxu0 0
    %972 = vmatpush.bf16.msra.mxu0 0
    %973 = vmatpush.bf16.msra.mxu0 0
    %974 = vmatpush.bf16.msra.mxu0 0
    %975 = vmatpush.bf16.msra.mxu0 %v963
    %976 = vmatpush.bf16.msra.mxu0 %v962
    %977 = vmatmul.bf16.gmra.mxu0 %v967
    %v978 = vpop.f32.mrf.mxu0
    %v979 = vadd.f32 0.0, %v978
    %v980 = vpop.f32.mrf.mxu0
    %v981 = vadd.f32 0.0, %v980
    %982 = vdwg.mxu0
    %v983 = vadd.f32 %v837, %v979
    %v984 = vadd.f32 %v839, %v981
    %985 = vrot.lane.b32.xlu0 %v654, 32
    %v986 = vpop.permute.xlu0 %985
    %987 = vrot.lane.b32.xlu0 %v659, 32
    %v988 = vpop.permute.xlu0 %987
    %v990 = vsel %vm548, %v986, 0
    %v993 = vsel %vm548, %v988, 0
    %995 = vmatpush.bf16.xpose.msra.mxu0 0
    %996 = vmatpush.bf16.xpose.msra.mxu0 0
    %997 = vmatpush.bf16.xpose.msra.mxu0 0
    %998 = vmatpush.bf16.xpose.msra.mxu0 0
    %999 = vmatpush.bf16.xpose.msra.mxu0 0
    %1000 = vmatpush.bf16.xpose.msra.mxu0 0
    %1001 = vmatpush.bf16.xpose.msra.mxu0 0
    %1002 = vmatpush.bf16.xpose.msra.mxu0 %v993
    %1003 = vmatmul.bf16.gmra.mxu0 %v990
    %v1004 = vpop.f32.mrf.mxu0
    %v1005 = vadd.f32 0.0, %v1004
    %v1006 = vpop.f32.mrf.mxu0
    %1007 = vdwg.mxu0
    %1008 = vrot.lane.b32.xlu0 %v683, 32
    %v1009 = vpop.permute.xlu0 %1008
    %1010 = vrot.lane.b32.xlu0 %v688, 32
    %v1011 = vpop.permute.xlu0 %1010
    %v1013 = vsel %vm548, %v1009, 0
    %v1016 = vsel %vm548, %v1011, 0
    %1018 = vmatpush.bf16.xpose.msra.mxu0 0
    %1019 = vmatpush.bf16.xpose.msra.mxu0 0
    %1020 = vmatpush.bf16.xpose.msra.mxu0 0
    %1021 = vmatpush.bf16.xpose.msra.mxu0 0
    %1022 = vmatpush.bf16.xpose.msra.mxu0 0
    %1023 = vmatpush.bf16.xpose.msra.mxu0 0
    %1024 = vmatpush.bf16.xpose.msra.mxu0 0
    %1025 = vmatpush.bf16.xpose.msra.mxu0 %v1016
    %1026 = vmatmul.bf16.gmra.mxu0 %v1013
    %v1027 = vpop.f32.mrf.mxu0
    %v1028 = vadd.f32 0.0, %v1027
    %v1029 = vpop.f32.mrf.mxu0
    %1030 = vdwg.mxu0
    %v1031 = vsel %vm587, %v1005, -inf
    %1032 = vmax.xlane.f32.xlu0 %v1031
    %v1033 = vpop.xlane.xlu0 %1032
    %v1034 = vsel %vm587, %v1028, -inf
    %1035 = vmax.xlane.f32.xlu0 %v1034
    %v1036 = vpop.xlane.xlu0 %1035
    %v1037 = vsub.f32 %v1005, %v1033
    %v1038 = vsub.f32 %v1028, %v1036
    %v1039 = vmul.f32 %v1037, 1.442695
    %v1040 = vpow.pop %v1039
    %v1041 = vmul.f32 %v1038, 1.442695
    %v1042 = vpow.pop %v1041
    %v1043 = vsel %vm587, %v1040, 0.0
    %1044 = vadd.xlane.f32.xlu0 %v1043
    %v1045 = vpop.xlane.xlu0 %1044
    %v1046 = vsel %vm587, %v1042, 0.0
    %1047 = vadd.xlane.f32.xlu0 %v1046
    %v1048 = vpop.xlane.xlu0 %1047
    %v1049 = vrcp.pop %v1045
    %v1050 = vrcp.pop %v1048
    %v1051 = vmul.f32 %v1040, %v1049
    %v1052 = vmul.f32 %v1042, %v1050
    %v1053 = vpack.c.bf16 %v1051, %v1051
    %v1054 = vpack.c.bf16 %v1052, %v1052
    %1055 = vrot.lane.b32.xlu0 %v736, 32
    %v1056 = vpop.permute.xlu0 %1055
    %v1058 = vsel %vm587, %v1053, 0
    %v1061 = vsel %vm615, %v1056, 0
    %1063 = vmatpush.bf16.msra.mxu0 0
    %1064 = vmatpush.bf16.msra.mxu0 0
    %1065 = vmatpush.bf16.msra.mxu0 0
    %1066 = vmatpush.bf16.msra.mxu0 0
    %1067 = vmatpush.bf16.msra.mxu0 0
    %1068 = vmatpush.bf16.msra.mxu0 0
    %1069 = vmatpush.bf16.msra.mxu0 0
    %1070 = vmatpush.bf16.msra.mxu0 %v1061
    %1071 = vmatmul.bf16.gmra.mxu0 %v1058
    %v1072 = vpop.f32.mrf.mxu0
    %v1073 = vadd.f32 0.0, %v1072
    %v1074 = vpop.f32.mrf.mxu0
    %1075 = vdwg.mxu0
    %1076 = vrot.lane.b32.xlu0 %v760, 32
    %v1077 = vpop.permute.xlu0 %1076
    %v1079 = vsel %vm587, %v1054, 0
    %v1082 = vsel %vm615, %v1077, 0
    %1084 = vmatpush.bf16.msra.mxu0 0
    %1085 = vmatpush.bf16.msra.mxu0 0
    %1086 = vmatpush.bf16.msra.mxu0 0
    %1087 = vmatpush.bf16.msra.mxu0 0
    %1088 = vmatpush.bf16.msra.mxu0 0
    %1089 = vmatpush.bf16.msra.mxu0 0
    %1090 = vmatpush.bf16.msra.mxu0 0
    %1091 = vmatpush.bf16.msra.mxu0 %v1082
    %1092 = vmatmul.bf16.gmra.mxu0 %v1079
    %v1093 = vpop.f32.mrf.mxu0
    %v1094 = vadd.f32 0.0, %v1093
    %v1095 = vpop.f32.mrf.mxu0
    %1096 = vdwg.mxu0
    %v1097 = vpack.c.bf16 %v1094, %v1073
    %v1102 = vunpack.c.l.b16 %v538
    %v1103 = vunpack.c.l.b16 %v539
    %v1104 = vunpack.c.l.b16 %v540
    %v1105 = vunpack.c.l.b16 %v541
    %v1106 = vpack.c.b16 %v1103, %v1102
    %v1107 = vpack.c.b16 %v1105, %v1104
    %v1111 = vsel %vm548, %v1097, 0
    %1113 = vmatpush.bf16.msra.mxu0 0
    %1114 = vmatpush.bf16.msra.mxu0 0
    %1115 = vmatpush.bf16.msra.mxu0 0
    %1116 = vmatpush.bf16.msra.mxu0 0
    %1117 = vmatpush.bf16.msra.mxu0 0
    %1118 = vmatpush.bf16.msra.mxu0 0
    %1119 = vmatpush.bf16.msra.mxu0 %v1107
    %1120 = vmatpush.bf16.msra.mxu0 %v1106
    %1121 = vmatmul.bf16.gmra.mxu0 %v1111
    %v1122 = vpop.f32.mrf.mxu0
    %v1123 = vadd.f32 0.0, %v1122
    %v1124 = vpop.f32.mrf.mxu0
    %v1125 = vadd.f32 0.0, %v1124
    %1126 = vdwg.mxu0
    %v1127 = vadd.f32 %v983, %v1123
    %v1128 = vadd.f32 %v984, %v1125
    %v1129 = vld [vmem:[#allocation12] sm:$0x1]
    %v1131 = vperm.slane %v1129, 0
    %v1133 = vadd.f32 %v1127, %v1131
    %v1134 = vadd.f32 %v1128, %v1131
    %v1135 = vadd.f32 %v313, %v1133
    %v1136 = vadd.f32 %v314, %v1134
    %v1137 = vld [vmem:[%s7] sm:$0x1]
    %v1138 = vld [vmem:[%s8] sm:$0x1]
    %1139 = vadd.xlane.f32.xlu0 %v1135
    %v1140 = vpop.xlane.xlu0 %1139
    %1141 = vadd.xlane.f32.xlu0 %v1136
    %v1142 = vpop.xlane.xlu0 %1141
    %v1143 = vrcp.pop 128.0
    %v1144 = vmul.f32 128.0, %v1143
    %v1145 = vsub.f32 1.0, %v1144
    %v1146 = vmul.f32 %v1143, %v1145
    %v1147 = vadd.f32 %v1143, %v1146
    %vm1148 = vweird.f32 %v1143
    %v1149 = vsel %vm1148, %v1143, %v1147
    %v1150 = vmul.f32 %v1140, %v1149
    %v1151 = vmul.f32 %v1142, %v1149
    %v1152 = vsub.f32 %v1135, %v1150
    %v1153 = vsub.f32 %v1136, %v1151
    %v1154 = vmul.f32 %v1152, %v1152
    %v1155 = vmul.f32 %v1153, %v1153
    %1156 = vadd.xlane.f32.xlu0 %v1154
    %v1157 = vpop.xlane.xlu0 %1156
    %1158 = vadd.xlane.f32.xlu0 %v1155
    %v1159 = vpop.xlane.xlu0 %1158
    %v1160 = vmul.f32 %v1157, %v1149
    %v1161 = vmul.f32 %v1159, %v1149
    %v1162 = vadd.f32 %v1160, 1e-05
    %v1163 = vadd.f32 %v1161, 1e-05
    %v1164 = vrsqrt.pop %v1162
    %v1165 = vmul.f32 %v1164, %v1162
    %v1166 = vmul.f32 %v1165, %v1164
    %v1167 = vmul.f32 0.5, %v1166
    %v1168 = vsub.f32 1.5, %v1167
    %v1169 = vmul.f32 %v1164, %v1168
    %vm1170 = vweird.f32 %v1162
    %vm1171 = vweird.f32 %v1164
    %vm1172 = vmor %vm1170, %vm1171
    %v1173 = vsel %vm1172, %v1164, %v1169
    %v1174 = vrsqrt.pop %v1163
    %v1175 = vmul.f32 %v1174, %v1163
    %v1176 = vmul.f32 %v1175, %v1174
    %v1177 = vmul.f32 0.5, %v1176
    %v1178 = vsub.f32 1.5, %v1177
    %v1179 = vmul.f32 %v1174, %v1178
    %vm1180 = vweird.f32 %v1163
    %vm1181 = vweird.f32 %v1174
    %vm1182 = vmor %vm1180, %vm1181
    %v1183 = vsel %vm1182, %v1174, %v1179
    %v1184 = vmul.f32 %v1152, %v1173
    %v1185 = vmul.f32 %v1153, %v1183
    %v1187 = vperm.slane %v1137, 0
    %v1189 = vmul.f32 %v1184, %v1187
    %v1190 = vmul.f32 %v1185, %v1187
    %v1192 = vperm.slane %v1138, 0
    %v1194 = vadd.f32 %v1189, %v1192
    %v1195 = vadd.f32 %v1190, %v1192
    %v1196 = vld [vmem:[#allocation13] sm:$0xff]
    %v1197 = vld [vmem:[#allocation13 + $0x8] sm:$0xff]
    %v1198 = vld [vmem:[#allocation13 + $0x10] sm:$0xff]
    %v1199 = vld [vmem:[#allocation13 + $0x18] sm:$0xff]
    %v1200 = vld [vmem:[#allocation13 + $0x20] sm:$0xff]
    %v1201 = vld [vmem:[#allocation13 + $0x28] sm:$0xff]
    %v1202 = vld [vmem:[#allocation13 + $0x30] sm:$0xff]
    %v1203 = vld [vmem:[#allocation13 + $0x38] sm:$0xff]
    %v1204 = vld [vmem:[#allocation13 + $0x40] sm:$0xff]
    %v1205 = vld [vmem:[#allocation13 + $0x48] sm:$0xff]
    %v1206 = vld [vmem:[#allocation13 + $0x50] sm:$0xff]
    %v1207 = vld [vmem:[#allocation13 + $0x58] sm:$0xff]
    %v1208 = vld [vmem:[#allocation13 + $0x60] sm:$0xff]
    %v1209 = vld [vmem:[#allocation13 + $0x68] sm:$0xff]
    %v1210 = vld [vmem:[#allocation13 + $0x70] sm:$0xff]
    %v1211 = vld [vmem:[#allocation13 + $0x78] sm:$0xff]
    %v1212 = vpack.c.bf16 %v1195, %v1194
    %v1213 = vld [vmem:[%s10] sm:$0x3]
    %v1215 = vperm.slane %v1213, 0
    %v1216 = vperm.slane %v1213, 1
    %v1235 = vunpack.c.l.b16 %v1196
    %v1236 = vunpack.c.h.b16 %v1196
    %v1237 = vunpack.c.l.b16 %v1197
    %v1238 = vunpack.c.h.b16 %v1197
    %v1239 = vunpack.c.l.b16 %v1198
    %v1240 = vunpack.c.h.b16 %v1198
    %v1241 = vunpack.c.l.b16 %v1199
    %v1242 = vunpack.c.h.b16 %v1199
    %v1243 = vunpack.c.l.b16 %v1200
    %v1244 = vunpack.c.h.b16 %v1200
    %v1245 = vunpack.c.l.b16 %v1201
    %v1246 = vunpack.c.h.b16 %v1201
    %v1247 = vunpack.c.l.b16 %v1202
    %v1248 = vunpack.c.h.b16 %v1202
    %v1249 = vunpack.c.l.b16 %v1203
    %v1250 = vunpack.c.h.b16 %v1203
    %v1251 = vunpack.c.l.b16 %v1204
    %v1252 = vunpack.c.h.b16 %v1204
    %v1253 = vunpack.c.l.b16 %v1205
    %v1254 = vunpack.c.h.b16 %v1205
    %v1255 = vunpack.c.l.b16 %v1206
    %v1256 = vunpack.c.h.b16 %v1206
    %v1257 = vunpack.c.l.b16 %v1207
    %v1258 = vunpack.c.h.b16 %v1207
    %v1259 = vunpack.c.l.b16 %v1208
    %v1260 = vunpack.c.h.b16 %v1208
    %v1261 = vunpack.c.l.b16 %v1209
    %v1262 = vunpack.c.h.b16 %v1209
    %v1263 = vunpack.c.l.b16 %v1210
    %v1264 = vunpack.c.h.b16 %v1210
    %v1265 = vunpack.c.l.b16 %v1211
    %v1266 = vunpack.c.h.b16 %v1211
    %v1267 = vpack.c.b16 %v1237, %v1235
    %v1268 = vpack.c.b16 %v1238, %v1236
    %v1269 = vpack.c.b16 %v1241, %v1239
    %v1270 = vpack.c.b16 %v1242, %v1240
    %v1271 = vpack.c.b16 %v1245, %v1243
    %v1272 = vpack.c.b16 %v1246, %v1244
    %v1273 = vpack.c.b16 %v1249, %v1247
    %v1274 = vpack.c.b16 %v1250, %v1248
    %v1275 = vpack.c.b16 %v1253, %v1251
    %v1276 = vpack.c.b16 %v1254, %v1252
    %v1277 = vpack.c.b16 %v1257, %v1255
    %v1278 = vpack.c.b16 %v1258, %v1256
    %v1279 = vpack.c.b16 %v1261, %v1259
    %v1280 = vpack.c.b16 %v1262, %v1260
    %v1281 = vpack.c.b16 %v1265, %v1263
    %v1282 = vpack.c.b16 %v1266, %v1264
    %1299 = vmatpush.bf16.msra.mxu0 %v1281
    %1300 = vmatpush.bf16.msra.mxu0 %v1279
    %1301 = vmatpush.bf16.msra.mxu0 %v1277
    %1302 = vmatpush.bf16.msra.mxu0 %v1275
    %1303 = vmatpush.bf16.msra.mxu0 %v1273
    %1304 = vmatpush.bf16.msra.mxu0 %v1271
    %1305 = vmatpush.bf16.msra.mxu0 %v1269
    %1306 = vmatpush.bf16.msra.mxu0 %v1267
    %1307 = vmatmul.bf16.gmra.mxu0 %v1212
    %v1308 = vpop.f32.mrf.mxu0
    %v1309 = vadd.f32 %v1215, %v1308
    %v1310 = vpop.f32.mrf.mxu0
    %v1311 = vadd.f32 %v1215, %v1310
    %1312 = vdwg.mxu0
    %1313 = vmatpush.bf16.msra.mxu0 %v1282
    %1314 = vmatpush.bf16.msra.mxu0 %v1280
    %1315 = vmatpush.bf16.msra.mxu0 %v1278
    %1316 = vmatpush.bf16.msra.mxu0 %v1276
    %1317 = vmatpush.bf16.msra.mxu0 %v1274
    %1318 = vmatpush.bf16.msra.mxu0 %v1272
    %1319 = vmatpush.bf16.msra.mxu0 %v1270
    %1320 = vmatpush.bf16.msra.mxu0 %v1268
    %1321 = vmatmul.bf16.gmra.mxu0 %v1212
    %v1322 = vpop.f32.mrf.mxu0
    %v1323 = vadd.f32 %v1216, %v1322
    %v1324 = vpop.f32.mrf.mxu0
    %v1325 = vadd.f32 %v1216, %v1324
    %1326 = vdwg.mxu0
    %v1327 = vmax.f32 %v1309, 0.0
    %v1328 = vmax.f32 %v1323, 0.0
    %v1329 = vmax.f32 %v1311, 0.0
    %v1330 = vmax.f32 %v1325, 0.0
    %v1331 = vld [vmem:[#allocation15] sm:$0xf]
    %v1332 = vld [vmem:[#allocation15 + $0x4] sm:$0xf]
    %v1333 = vld [vmem:[#allocation15 + $0x8] sm:$0xf]
    %v1334 = vld [vmem:[#allocation15 + $0xc] sm:$0xf]
    %v1335 = vld [vmem:[#allocation15 + $0x10] sm:$0xf]
    %v1336 = vld [vmem:[#allocation15 + $0x14] sm:$0xf]
    %v1337 = vld [vmem:[#allocation15 + $0x18] sm:$0xf]
    %v1338 = vld [vmem:[#allocation15 + $0x1c] sm:$0xf]
    %v1339 = vld [vmem:[#allocation15 + $0x20] sm:$0xf]
    %v1340 = vld [vmem:[#allocation15 + $0x24] sm:$0xf]
    %v1341 = vld [vmem:[#allocation15 + $0x28] sm:$0xf]
    %v1342 = vld [vmem:[#allocation15 + $0x2c] sm:$0xf]
    %v1343 = vld [vmem:[#allocation15 + $0x30] sm:$0xf]
    %v1344 = vld [vmem:[#allocation15 + $0x34] sm:$0xf]
    %v1345 = vld [vmem:[#allocation15 + $0x38] sm:$0xf]
    %v1346 = vld [vmem:[#allocation15 + $0x3c] sm:$0xf]
    %v1347 = vld [vmem:[#allocation15 + $0x40] sm:$0xf]
    %v1348 = vld [vmem:[#allocation15 + $0x44] sm:$0xf]
    %v1349 = vld [vmem:[#allocation15 + $0x48] sm:$0xf]
    %v1350 = vld [vmem:[#allocation15 + $0x4c] sm:$0xf]
    %v1351 = vld [vmem:[#allocation15 + $0x50] sm:$0xf]
    %v1352 = vld [vmem:[#allocation15 + $0x54] sm:$0xf]
    %v1353 = vld [vmem:[#allocation15 + $0x58] sm:$0xf]
    %v1354 = vld [vmem:[#allocation15 + $0x5c] sm:$0xf]
    %v1355 = vld [vmem:[#allocation15 + $0x60] sm:$0xf]
    %v1356 = vld [vmem:[#allocation15 + $0x64] sm:$0xf]
    %v1357 = vld [vmem:[#allocation15 + $0x68] sm:$0xf]
    %v1358 = vld [vmem:[#allocation15 + $0x6c] sm:$0xf]
    %v1359 = vld [vmem:[#allocation15 + $0x70] sm:$0xf]
    %v1360 = vld [vmem:[#allocation15 + $0x74] sm:$0xf]
    %v1361 = vld [vmem:[#allocation15 + $0x78] sm:$0xf]
    %v1362 = vld [vmem:[#allocation15 + $0x7c] sm:$0xf]
    %v1363 = vpack.c.bf16 %v1329, %v1327
    %v1364 = vpack.c.bf16 %v1330, %v1328
    %v1365 = vld [vmem:[#allocation16] sm:$0x1]
    %v1367 = vperm.slane %v1365, 0
    %v1401 = vunpack.c.l.b16 %v1331
    %v1402 = vunpack.c.l.b16 %v1332
    %v1403 = vunpack.c.l.b16 %v1333
    %v1404 = vunpack.c.l.b16 %v1334
    %v1405 = vunpack.c.l.b16 %v1335
    %v1406 = vunpack.c.l.b16 %v1336
    %v1407 = vunpack.c.l.b16 %v1337
    %v1408 = vunpack.c.l.b16 %v1338
    %v1409 = vunpack.c.l.b16 %v1339
    %v1410 = vunpack.c.l.b16 %v1340
    %v1411 = vunpack.c.l.b16 %v1341
    %v1412 = vunpack.c.l.b16 %v1342
    %v1413 = vunpack.c.l.b16 %v1343
    %v1414 = vunpack.c.l.b16 %v1344
    %v1415 = vunpack.c.l.b16 %v1345
    %v1416 = vunpack.c.l.b16 %v1346
    %v1417 = vunpack.c.l.b16 %v1347
    %v1418 = vunpack.c.l.b16 %v1348
    %v1419 = vunpack.c.l.b16 %v1349
    %v1420 = vunpack.c.l.b16 %v1350
    %v1421 = vunpack.c.l.b16 %v1351
    %v1422 = vunpack.c.l.b16 %v1352
    %v1423 = vunpack.c.l.b16 %v1353
    %v1424 = vunpack.c.l.b16 %v1354
    %v1425 = vunpack.c.l.b16 %v1355
    %v1426 = vunpack.c.l.b16 %v1356
    %v1427 = vunpack.c.l.b16 %v1357
    %v1428 = vunpack.c.l.b16 %v1358
    %v1429 = vunpack.c.l.b16 %v1359
    %v1430 = vunpack.c.l.b16 %v1360
    %v1431 = vunpack.c.l.b16 %v1361
    %v1432 = vunpack.c.l.b16 %v1362
    %v1433 = vpack.c.b16 %v1402, %v1401
    %v1434 = vpack.c.b16 %v1404, %v1403
    %v1435 = vpack.c.b16 %v1406, %v1405
    %v1436 = vpack.c.b16 %v1408, %v1407
    %v1437 = vpack.c.b16 %v1410, %v1409
    %v1438 = vpack.c.b16 %v1412, %v1411
    %v1439 = vpack.c.b16 %v1414, %v1413
    %v1440 = vpack.c.b16 %v1416, %v1415
    %v1441 = vpack.c.b16 %v1418, %v1417
    %v1442 = vpack.c.b16 %v1420, %v1419
    %v1443 = vpack.c.b16 %v1422, %v1421
    %v1444 = vpack.c.b16 %v1424, %v1423
    %v1445 = vpack.c.b16 %v1426, %v1425
    %v1446 = vpack.c.b16 %v1428, %v1427
    %v1447 = vpack.c.b16 %v1430, %v1429
    %v1448 = vpack.c.b16 %v1432, %v1431
    %1465 = vmatpush.bf16.msra.mxu0 %v1440
    %1466 = vmatpush.bf16.msra.mxu0 %v1439
    %1467 = vmatpush.bf16.msra.mxu0 %v1438
    %1468 = vmatpush.bf16.msra.mxu0 %v1437
    %1469 = vmatpush.bf16.msra.mxu0 %v1436
    %1470 = vmatpush.bf16.msra.mxu0 %v1435
    %1471 = vmatpush.bf16.msra.mxu0 %v1434
    %1472 = vmatpush.bf16.msra.mxu0 %v1433
    %1473 = vmatmul.bf16.gmra.mxu0 %v1363
    %v1474 = vpop.f32.mrf.mxu0
    %v1475 = vadd.f32 %v1367, %v1474
    %v1476 = vpop.f32.mrf.mxu0
    %v1477 = vadd.f32 %v1367, %v1476
    %1478 = vdwg.mxu0
    %1479 = vmatpush.bf16.msra.mxu0 %v1448
    %1480 = vmatpush.bf16.msra.mxu0 %v1447
    %1481 = vmatpush.bf16.msra.mxu0 %v1446
    %1482 = vmatpush.bf16.msra.mxu0 %v1445
    %1483 = vmatpush.bf16.msra.mxu0 %v1444
    %1484 = vmatpush.bf16.msra.mxu0 %v1443
    %1485 = vmatpush.bf16.msra.mxu0 %v1442
    %1486 = vmatpush.bf16.msra.mxu0 %v1441
    %1487 = vmatmul.bf16.gmra.mxu0 %v1364
    %v1488 = vpop.f32.mrf.mxu0
    %v1489 = vadd.f32 %v1475, %v1488
    %v1490 = vpop.f32.mrf.mxu0
    %v1491 = vadd.f32 %v1477, %v1490
    %1492 = vdwg.mxu0
    %v1493 = vadd.f32 %v1194, %v1489
    %v1494 = vadd.f32 %v1195, %v1491
    %v1495 = vld [vmem:[%s13] sm:$0x1]
    %v1496 = vld [vmem:[%s14] sm:$0x1]
    %1497 = vadd.xlane.f32.xlu0 %v1493
    %v1498 = vpop.xlane.xlu0 %1497
    %1499 = vadd.xlane.f32.xlu0 %v1494
    %v1500 = vpop.xlane.xlu0 %1499
    %v1501 = vmul.f32 %v1498, %v1149
    %v1502 = vmul.f32 %v1500, %v1149
    %v1503 = vsub.f32 %v1493, %v1501
    %v1504 = vsub.f32 %v1494, %v1502
    %v1505 = vmul.f32 %v1503, %v1503
    %v1506 = vmul.f32 %v1504, %v1504
    %1507 = vadd.xlane.f32.xlu0 %v1505
    %v1508 = vpop.xlane.xlu0 %1507
    %1509 = vadd.xlane.f32.xlu0 %v1506
    %v1510 = vpop.xlane.xlu0 %1509
    %v1511 = vmul.f32 %v1508, %v1149
    %v1512 = vmul.f32 %v1510, %v1149
    %v1513 = vadd.f32 %v1511, 1e-05
    %v1514 = vadd.f32 %v1512, 1e-05
    %v1515 = vrsqrt.pop %v1513
    %v1516 = vmul.f32 %v1515, %v1513
    %v1517 = vmul.f32 %v1516, %v1515
    %v1518 = vmul.f32 0.5, %v1517
    %v1519 = vsub.f32 1.5, %v1518
    %v1520 = vmul.f32 %v1515, %v1519
    %vm1521 = vweird.f32 %v1513
    %vm1522 = vweird.f32 %v1515
    %vm1523 = vmor %vm1521, %vm1522
    %v1524 = vsel %vm1523, %v1515, %v1520
    %v1525 = vrsqrt.pop %v1514
    %v1526 = vmul.f32 %v1525, %v1514
    %v1527 = vmul.f32 %v1526, %v1525
    %v1528 = vmul.f32 0.5, %v1527
    %v1529 = vsub.f32 1.5, %v1528
    %v1530 = vmul.f32 %v1525, %v1529
    %vm1531 = vweird.f32 %v1514
    %vm1532 = vweird.f32 %v1525
    %vm1533 = vmor %vm1531, %vm1532
    %v1534 = vsel %vm1533, %v1525, %v1530
    %v1535 = vmul.f32 %v1503, %v1524
    %v1536 = vmul.f32 %v1504, %v1534
    %v1538 = vperm.slane %v1495, 0
    %v1540 = vmul.f32 %v1535, %v1538
    %v1541 = vmul.f32 %v1536, %v1538
    %v1543 = vperm.slane %v1496, 0
    %v1545 = vadd.f32 %v1540, %v1543
    %v1546 = vadd.f32 %v1541, %v1543
    %s1547 = scalar_lea.vmem [#allocation9], 192
    %v1548 = vld [vmem:[%s1547] sm:$0xff]
    %v1549 = vld [vmem:[%s1547 + $0x8] sm:$0xf]
    %v1550 = vld [vmem:[%s1547 + $0xc] sm:$0xff]
    %v1551 = vld [vmem:[%s1547 + $0x14] sm:$0xf]
    %v1552 = vld [vmem:[%s1547 + $0x18] sm:$0xff]
    %v1553 = vld [vmem:[%s1547 + $0x20] sm:$0xf]
    %v1554 = vld [vmem:[%s1547 + $0x24] sm:$0xff]
    %v1555 = vld [vmem:[%s1547 + $0x2c] sm:$0xf]
    %v1556 = vld [vmem:[%s1547 + $0x30] sm:$0xff]
    %v1557 = vld [vmem:[%s1547 + $0x38] sm:$0xf]
    %v1558 = vld [vmem:[%s1547 + $0x3c] sm:$0xff]
    %v1559 = vld [vmem:[%s1547 + $0x44] sm:$0xf]
    %v1560 = vld [vmem:[%s1547 + $0x48] sm:$0xff]
    %v1561 = vld [vmem:[%s1547 + $0x50] sm:$0xf]
    %v1562 = vld [vmem:[%s1547 + $0x54] sm:$0xff]
    %v1563 = vld [vmem:[%s1547 + $0x5c] sm:$0xf]
    %v1564 = vld [vmem:[%s1547 + $0x60] sm:$0xff]
    %v1565 = vld [vmem:[%s1547 + $0x68] sm:$0xf]
    %v1566 = vld [vmem:[%s1547 + $0x6c] sm:$0xff]
    %v1567 = vld [vmem:[%s1547 + $0x74] sm:$0xf]
    %v1568 = vld [vmem:[%s1547 + $0x78] sm:$0xff]
    %v1569 = vld [vmem:[%s1547 + $0x80] sm:$0xf]
    %v1570 = vld [vmem:[%s1547 + $0x84] sm:$0xff]
    %v1571 = vld [vmem:[%s1547 + $0x8c] sm:$0xf]
    %v1572 = vld [vmem:[%s1547 + $0x90] sm:$0xff]
    %v1573 = vld [vmem:[%s1547 + $0x98] sm:$0xf]
    %v1574 = vld [vmem:[%s1547 + $0x9c] sm:$0xff]
    %v1575 = vld [vmem:[%s1547 + $0xa4] sm:$0xf]
    %v1576 = vld [vmem:[%s1547 + $0xa8] sm:$0xff]
    %v1577 = vld [vmem:[%s1547 + $0xb0] sm:$0xf]
    %v1578 = vld [vmem:[%s1547 + $0xb4] sm:$0xff]
    %v1579 = vld [vmem:[%s1547 + $0xbc] sm:$0xf]
    %v1580 = vpack.c.bf16 %v1546, %v1545
    %s1581 = scalar_lea.vmem %s4, 3
    %v1582 = vld [vmem:[%s1581] sm:$0x7]
    %v1584 = vperm.slane %v1582, 0
    %v1585 = vperm.slane %v1582, 1
    %v1586 = vperm.slane %v1582, 2
    %v1622 = vunpack.c.l.b16 %v1548
    %v1623 = vunpack.c.h.b16 %v1548
    %v1624 = vunpack.c.l.b16 %v1549
    %v1625 = vunpack.c.l.b16 %v1550
    %v1626 = vunpack.c.h.b16 %v1550
    %v1627 = vunpack.c.l.b16 %v1551
    %v1628 = vunpack.c.l.b16 %v1552
    %v1629 = vunpack.c.h.b16 %v1552
    %v1630 = vunpack.c.l.b16 %v1553
    %v1631 = vunpack.c.l.b16 %v1554
    %v1632 = vunpack.c.h.b16 %v1554
    %v1633 = vunpack.c.l.b16 %v1555
    %v1634 = vunpack.c.l.b16 %v1556
    %v1635 = vunpack.c.h.b16 %v1556
    %v1636 = vunpack.c.l.b16 %v1557
    %v1637 = vunpack.c.l.b16 %v1558
    %v1638 = vunpack.c.h.b16 %v1558
    %v1639 = vunpack.c.l.b16 %v1559
    %v1640 = vunpack.c.l.b16 %v1560
    %v1641 = vunpack.c.h.b16 %v1560
    %v1642 = vunpack.c.l.b16 %v1561
    %v1643 = vunpack.c.l.b16 %v1562
    %v1644 = vunpack.c.h.b16 %v1562
    %v1645 = vunpack.c.l.b16 %v1563
    %v1646 = vunpack.c.l.b16 %v1564
    %v1647 = vunpack.c.h.b16 %v1564
    %v1648 = vunpack.c.l.b16 %v1565
    %v1649 = vunpack.c.l.b16 %v1566
    %v1650 = vunpack.c.h.b16 %v1566
    %v1651 = vunpack.c.l.b16 %v1567
    %v1652 = vunpack.c.l.b16 %v1568
    %v1653 = vunpack.c.h.b16 %v1568
    %v1654 = vunpack.c.l.b16 %v1569
    %v1655 = vunpack.c.l.b16 %v1570
    %v1656 = vunpack.c.h.b16 %v1570
    %v1657 = vunpack.c.l.b16 %v1571
    %v1658 = vunpack.c.l.b16 %v1572
    %v1659 = vunpack.c.h.b16 %v1572
    %v1660 = vunpack.c.l.b16 %v1573
    %v1661 = vunpack.c.l.b16 %v1574
    %v1662 = vunpack.c.h.b16 %v1574
    %v1663 = vunpack.c.l.b16 %v1575
    %v1664 = vunpack.c.l.b16 %v1576
    %v1665 = vunpack.c.h.b16 %v1576
    %v1666 = vunpack.c.l.b16 %v1577
    %v1667 = vunpack.c.l.b16 %v1578
    %v1668 = vunpack.c.h.b16 %v1578
    %v1669 = vunpack.c.l.b16 %v1579
    %v1670 = vpack.c.b16 %v1625, %v1622
    %v1671 = vpack.c.b16 %v1626, %v1623
    %v1672 = vpack.c.b16 %v1627, %v1624
    %v1673 = vpack.c.b16 %v1631, %v1628
    %v1674 = vpack.c.b16 %v1632, %v1629
    %v1675 = vpack.c.b16 %v1633, %v1630
    %v1676 = vpack.c.b16 %v1637, %v1634
    %v1677 = vpack.c.b16 %v1638, %v1635
    %v1678 = vpack.c.b16 %v1639, %v1636
    %v1679 = vpack.c.b16 %v1643, %v1640
    %v1680 = vpack.c.b16 %v1644, %v1641
    %v1681 = vpack.c.b16 %v1645, %v1642
    %v1682 = vpack.c.b16 %v1649, %v1646
    %v1683 = vpack.c.b16 %v1650, %v1647
    %v1684 = vpack.c.b16 %v1651, %v1648
    %v1685 = vpack.c.b16 %v1655, %v1652
    %v1686 = vpack.c.b16 %v1656, %v1653
    %v1687 = vpack.c.b16 %v1657, %v1654
    %v1688 = vpack.c.b16 %v1661, %v1658
    %v1689 = vpack.c.b16 %v1662, %v1659
    %v1690 = vpack.c.b16 %v1663, %v1660
    %v1691 = vpack.c.b16 %v1667, %v1664
    %v1692 = vpack.c.b16 %v1668, %v1665
    %v1693 = vpack.c.b16 %v1669, %v1666
    %1718 = vmatpush.bf16.msra.mxu0 %v1691
    %1719 = vmatpush.bf16.msra.mxu0 %v1688
    %1720 = vmatpush.bf16.msra.mxu0 %v1685
    %1721 = vmatpush.bf16.msra.mxu0 %v1682
    %1722 = vmatpush.bf16.msra.mxu0 %v1679
    %1723 = vmatpush.bf16.msra.mxu0 %v1676
    %1724 = vmatpush.bf16.msra.mxu0 %v1673
    %1725 = vmatpush.bf16.msra.mxu0 %v1670
    %1726 = vmatmul.bf16.gmra.mxu0 %v1580
    %v1727 = vpop.f32.mrf.mxu0
    %v1728 = vadd.f32 %v1584, %v1727
    %v1729 = vpop.f32.mrf.mxu0
    %v1730 = vadd.f32 %v1584, %v1729
    %1731 = vdwg.mxu0
    %1732 = vmatpush.bf16.msra.mxu0 %v1692
    %1733 = vmatpush.bf16.msra.mxu0 %v1689
    %1734 = vmatpush.bf16.msra.mxu0 %v1686
    %1735 = vmatpush.bf16.msra.mxu0 %v1683
    %1736 = vmatpush.bf16.msra.mxu0 %v1680
    %1737 = vmatpush.bf16.msra.mxu0 %v1677
    %1738 = vmatpush.bf16.msra.mxu0 %v1674
    %1739 = vmatpush.bf16.msra.mxu0 %v1671
    %1740 = vmatmul.bf16.gmra.mxu0 %v1580
    %v1741 = vpop.f32.mrf.mxu0
    %v1742 = vadd.f32 %v1585, %v1741
    %v1743 = vpop.f32.mrf.mxu0
    %v1744 = vadd.f32 %v1585, %v1743
    %1745 = vdwg.mxu0
    %1746 = vmatpush.bf16.msra.mxu0 %v1693
    %1747 = vmatpush.bf16.msra.mxu0 %v1690
    %1748 = vmatpush.bf16.msra.mxu0 %v1687
    %1749 = vmatpush.bf16.msra.mxu0 %v1684
    %1750 = vmatpush.bf16.msra.mxu0 %v1681
    %1751 = vmatpush.bf16.msra.mxu0 %v1678
    %1752 = vmatpush.bf16.msra.mxu0 %v1675
    %1753 = vmatpush.bf16.msra.mxu0 %v1672
    %1754 = vmatmul.bf16.gmra.mxu0 %v1580
    %v1755 = vpop.f32.mrf.mxu0
    %v1756 = vadd.f32 %v1586, %v1755
    %v1757 = vpop.f32.mrf.mxu0
    %v1758 = vadd.f32 %v1586, %v1757
    %1759 = vdwg.mxu0
    %s1760 = scalar_lea.vmem [#allocation10], 64
    %v1761 = vld [vmem:[%s1760] sm:$0xf]
    %v1762 = vld [vmem:[%s1760 + $0x4] sm:$0xf]
    %v1763 = vld [vmem:[%s1760 + $0x8] sm:$0xf]
    %v1764 = vld [vmem:[%s1760 + $0xc] sm:$0xf]
    %v1765 = vld [vmem:[%s1760 + $0x10] sm:$0xf]
    %v1766 = vld [vmem:[%s1760 + $0x14] sm:$0xf]
    %v1767 = vld [vmem:[%s1760 + $0x18] sm:$0xf]
    %v1768 = vld [vmem:[%s1760 + $0x1c] sm:$0xf]
    %v1769 = vld [vmem:[%s1760 + $0x20] sm:$0xf]
    %v1770 = vld [vmem:[%s1760 + $0x24] sm:$0xf]
    %v1771 = vld [vmem:[%s1760 + $0x28] sm:$0xf]
    %v1772 = vld [vmem:[%s1760 + $0x2c] sm:$0xf]
    %v1773 = vld [vmem:[%s1760 + $0x30] sm:$0xf]
    %v1774 = vld [vmem:[%s1760 + $0x34] sm:$0xf]
    %v1775 = vld [vmem:[%s1760 + $0x38] sm:$0xf]
    %v1776 = vld [vmem:[%s1760 + $0x3c] sm:$0xf]
    %v1777 = vpack.c.bf16 %v1728, %v1728
    %v1778 = vpack.c.bf16 %v1730, %v1730
    %v1779 = vpack.c.bf16 %v1742, %v1742
    %v1780 = vpack.c.bf16 %v1744, %v1744
    %v1781 = vpack.c.bf16 %v1756, %v1756
    %v1782 = vpack.c.bf16 %v1758, %v1758
    %v1784 = vsel %vm548, %v1777, 0
    %v1787 = vsel %vm548, %v1779, 0
    %1789 = vmatpush.bf16.xpose.msra.mxu0 0
    %1790 = vmatpush.bf16.xpose.msra.mxu0 0
    %1791 = vmatpush.bf16.xpose.msra.mxu0 0
    %1792 = vmatpush.bf16.xpose.msra.mxu0 0
    %1793 = vmatpush.bf16.xpose.msra.mxu0 0
    %1794 = vmatpush.bf16.xpose.msra.mxu0 0
    %1795 = vmatpush.bf16.xpose.msra.mxu0 0
    %1796 = vmatpush.bf16.xpose.msra.mxu0 %v1787
    %1797 = vmatmul.bf16.gmra.mxu0 %v1784
    %v1798 = vpop.f32.mrf.mxu0
    %v1799 = vadd.f32 0.0, %v1798
    %v1800 = vpop.f32.mrf.mxu0
    %1801 = vdwg.mxu0
    %v1803 = vsel %vm548, %v1778, 0
    %v1806 = vsel %vm548, %v1780, 0
    %1808 = vmatpush.bf16.xpose.msra.mxu0 0
    %1809 = vmatpush.bf16.xpose.msra.mxu0 0
    %1810 = vmatpush.bf16.xpose.msra.mxu0 0
    %1811 = vmatpush.bf16.xpose.msra.mxu0 0
    %1812 = vmatpush.bf16.xpose.msra.mxu0 0
    %1813 = vmatpush.bf16.xpose.msra.mxu0 0
    %1814 = vmatpush.bf16.xpose.msra.mxu0 0
    %1815 = vmatpush.bf16.xpose.msra.mxu0 %v1806
    %1816 = vmatmul.bf16.gmra.mxu0 %v1803
    %v1817 = vpop.f32.mrf.mxu0
    %v1818 = vadd.f32 0.0, %v1817
    %v1819 = vpop.f32.mrf.mxu0
    %1820 = vdwg.mxu0
    %v1821 = vsel %vm587, %v1799, -inf
    %1822 = vmax.xlane.f32.xlu0 %v1821
    %v1823 = vpop.xlane.xlu0 %1822
    %v1824 = vsel %vm587, %v1818, -inf
    %1825 = vmax.xlane.f32.xlu0 %v1824
    %v1826 = vpop.xlane.xlu0 %1825
    %v1827 = vsub.f32 %v1799, %v1823
    %v1828 = vsub.f32 %v1818, %v1826
    %v1829 = vmul.f32 %v1827, 1.442695
    %v1830 = vpow.pop %v1829
    %v1831 = vmul.f32 %v1828, 1.442695
    %v1832 = vpow.pop %v1831
    %v1833 = vsel %vm587, %v1830, 0.0
    %1834 = vadd.xlane.f32.xlu0 %v1833
    %v1835 = vpop.xlane.xlu0 %1834
    %v1836 = vsel %vm587, %v1832, 0.0
    %1837 = vadd.xlane.f32.xlu0 %v1836
    %v1838 = vpop.xlane.xlu0 %1837
    %v1839 = vrcp.pop %v1835
    %v1840 = vrcp.pop %v1838
    %v1841 = vmul.f32 %v1830, %v1839
    %v1842 = vmul.f32 %v1832, %v1840
    %v1843 = vpack.c.bf16 %v1841, %v1841
    %v1844 = vpack.c.bf16 %v1842, %v1842
    %v1846 = vsel %vm587, %v1843, 0
    %v1849 = vsel %vm615, %v1781, 0
    %1851 = vmatpush.bf16.msra.mxu0 0
    %1852 = vmatpush.bf16.msra.mxu0 0
    %1853 = vmatpush.bf16.msra.mxu0 0
    %1854 = vmatpush.bf16.msra.mxu0 0
    %1855 = vmatpush.bf16.msra.mxu0 0
    %1856 = vmatpush.bf16.msra.mxu0 0
    %1857 = vmatpush.bf16.msra.mxu0 0
    %1858 = vmatpush.bf16.msra.mxu0 %v1849
    %1859 = vmatmul.bf16.gmra.mxu0 %v1846
    %v1860 = vpop.f32.mrf.mxu0
    %v1861 = vadd.f32 0.0, %v1860
    %v1862 = vpop.f32.mrf.mxu0
    %1863 = vdwg.mxu0
    %v1865 = vsel %vm587, %v1844, 0
    %v1868 = vsel %vm615, %v1782, 0
    %1870 = vmatpush.bf16.msra.mxu0 0
    %1871 = vmatpush.bf16.msra.mxu0 0
    %1872 = vmatpush.bf16.msra.mxu0 0
    %1873 = vmatpush.bf16.msra.mxu0 0
    %1874 = vmatpush.bf16.msra.mxu0 0
    %1875 = vmatpush.bf16.msra.mxu0 0
    %1876 = vmatpush.bf16.msra.mxu0 0
    %1877 = vmatpush.bf16.msra.mxu0 %v1868
    %1878 = vmatmul.bf16.gmra.mxu0 %v1865
    %v1879 = vpop.f32.mrf.mxu0
    %v1880 = vadd.f32 0.0, %v1879
    %v1881 = vpop.f32.mrf.mxu0
    %1882 = vdwg.mxu0
    %v1883 = vpack.c.bf16 %v1880, %v1861
    %v1885 = vunpack.c.l.b16 %v1777
    %v1886 = vpack.c.b16 %v1885, %v1885
    %1887 = vrot.lane.b32.xlu0 %v1886, 96
    %v1888 = vpop.permute.xlu0 %1887
    %v1890 = vunpack.c.l.b16 %v1779
    %v1891 = vpack.c.b16 %v1890, %v1890
    %1892 = vrot.lane.b32.xlu0 %v1891, 96
    %v1893 = vpop.permute.xlu0 %1892
    %v1895 = vsel %vm548, %v1888, 0
    %v1898 = vsel %vm548, %v1893, 0
    %1900 = vmatpush.bf16.xpose.msra.mxu0 0
    %1901 = vmatpush.bf16.xpose.msra.mxu0 0
    %1902 = vmatpush.bf16.xpose.msra.mxu0 0
    %1903 = vmatpush.bf16.xpose.msra.mxu0 0
    %1904 = vmatpush.bf16.xpose.msra.mxu0 0
    %1905 = vmatpush.bf16.xpose.msra.mxu0 0
    %1906 = vmatpush.bf16.xpose.msra.mxu0 0
    %1907 = vmatpush.bf16.xpose.msra.mxu0 %v1898
    %1908 = vmatmul.bf16.gmra.mxu0 %v1895
    %v1909 = vpop.f32.mrf.mxu0
    %v1910 = vadd.f32 0.0, %v1909
    %v1911 = vpop.f32.mrf.mxu0
    %1912 = vdwg.mxu0
    %v1914 = vunpack.c.l.b16 %v1778
    %v1915 = vpack.c.b16 %v1914, %v1914
    %1916 = vrot.lane.b32.xlu0 %v1915, 96
    %v1917 = vpop.permute.xlu0 %1916
    %v1919 = vunpack.c.l.b16 %v1780
    %v1920 = vpack.c.b16 %v1919, %v1919
    %1921 = vrot.lane.b32.xlu0 %v1920, 96
    %v1922 = vpop.permute.xlu0 %1921
    %v1924 = vsel %vm548, %v1917, 0
    %v1927 = vsel %vm548, %v1922, 0
    %1929 = vmatpush.bf16.xpose.msra.mxu0 0
    %1930 = vmatpush.bf16.xpose.msra.mxu0 0
    %1931 = vmatpush.bf16.xpose.msra.mxu0 0
    %1932 = vmatpush.bf16.xpose.msra.mxu0 0
    %1933 = vmatpush.bf16.xpose.msra.mxu0 0
    %1934 = vmatpush.bf16.xpose.msra.mxu0 0
    %1935 = vmatpush.bf16.xpose.msra.mxu0 0
    %1936 = vmatpush.bf16.xpose.msra.mxu0 %v1927
    %1937 = vmatmul.bf16.gmra.mxu0 %v1924
    %v1938 = vpop.f32.mrf.mxu0
    %v1939 = vadd.f32 0.0, %v1938
    %v1940 = vpop.f32.mrf.mxu0
    %1941 = vdwg.mxu0
    %v1942 = vsel %vm587, %v1910, -inf
    %1943 = vmax.xlane.f32.xlu0 %v1942
    %v1944 = vpop.xlane.xlu0 %1943
    %v1945 = vsel %vm587, %v1939, -inf
    %1946 = vmax.xlane.f32.xlu0 %v1945
    %v1947 = vpop.xlane.xlu0 %1946
    %v1948 = vsub.f32 %v1910, %v1944
    %v1949 = vsub.f32 %v1939, %v1947
    %v1950 = vmul.f32 %v1948, 1.442695
    %v1951 = vpow.pop %v1950
    %v1952 = vmul.f32 %v1949, 1.442695
    %v1953 = vpow.pop %v1952
    %v1954 = vsel %vm587, %v1951, 0.0
    %1955 = vadd.xlane.f32.xlu0 %v1954
    %v1956 = vpop.xlane.xlu0 %1955
    %v1957 = vsel %vm587, %v1953, 0.0
    %1958 = vadd.xlane.f32.xlu0 %v1957
    %v1959 = vpop.xlane.xlu0 %1958
    %v1960 = vrcp.pop %v1956
    %v1961 = vrcp.pop %v1959
    %v1962 = vmul.f32 %v1951, %v1960
    %v1963 = vmul.f32 %v1953, %v1961
    %v1964 = vpack.c.bf16 %v1962, %v1962
    %v1965 = vpack.c.bf16 %v1963, %v1963
    %v1967 = vunpack.c.l.b16 %v1781
    %v1968 = vpack.c.b16 %v1967, %v1967
    %1969 = vrot.lane.b32.xlu0 %v1968, 96
    %v1970 = vpop.permute.xlu0 %1969
    %v1972 = vsel %vm587, %v1964, 0
    %v1975 = vsel %vm615, %v1970, 0
    %1977 = vmatpush.bf16.msra.mxu0 0
    %1978 = vmatpush.bf16.msra.mxu0 0
    %1979 = vmatpush.bf16.msra.mxu0 0
    %1980 = vmatpush.bf16.msra.mxu0 0
    %1981 = vmatpush.bf16.msra.mxu0 0
    %1982 = vmatpush.bf16.msra.mxu0 0
    %1983 = vmatpush.bf16.msra.mxu0 0
    %1984 = vmatpush.bf16.msra.mxu0 %v1975
    %1985 = vmatmul.bf16.gmra.mxu0 %v1972
    %v1986 = vpop.f32.mrf.mxu0
    %v1987 = vadd.f32 0.0, %v1986
    %v1988 = vpop.f32.mrf.mxu0
    %1989 = vdwg.mxu0
    %v1991 = vunpack.c.l.b16 %v1782
    %v1992 = vpack.c.b16 %v1991, %v1991
    %1993 = vrot.lane.b32.xlu0 %v1992, 96
    %v1994 = vpop.permute.xlu0 %1993
    %v1996 = vsel %vm587, %v1965, 0
    %v1999 = vsel %vm615, %v1994, 0
    %2001 = vmatpush.bf16.msra.mxu0 0
    %2002 = vmatpush.bf16.msra.mxu0 0
    %2003 = vmatpush.bf16.msra.mxu0 0
    %2004 = vmatpush.bf16.msra.mxu0 0
    %2005 = vmatpush.bf16.msra.mxu0 0
    %2006 = vmatpush.bf16.msra.mxu0 0
    %2007 = vmatpush.bf16.msra.mxu0 0
    %2008 = vmatpush.bf16.msra.mxu0 %v1999
    %2009 = vmatmul.bf16.gmra.mxu0 %v1996
    %v2010 = vpop.f32.mrf.mxu0
    %v2011 = vadd.f32 0.0, %v2010
    %v2012 = vpop.f32.mrf.mxu0
    %2013 = vdwg.mxu0
    %v2014 = vpack.c.bf16 %v2011, %v1987
    %v2019 = vunpack.c.l.b16 %v1765
    %v2020 = vunpack.c.l.b16 %v1766
    %v2021 = vunpack.c.l.b16 %v1767
    %v2022 = vunpack.c.l.b16 %v1768
    %v2023 = vpack.c.b16 %v2020, %v2019
    %v2024 = vpack.c.b16 %v2022, %v2021
    %v2028 = vsel %vm548, %v2014, 0
    %2030 = vmatpush.bf16.msra.mxu0 0
    %2031 = vmatpush.bf16.msra.mxu0 0
    %2032 = vmatpush.bf16.msra.mxu0 0
    %2033 = vmatpush.bf16.msra.mxu0 0
    %2034 = vmatpush.bf16.msra.mxu0 0
    %2035 = vmatpush.bf16.msra.mxu0 0
    %2036 = vmatpush.bf16.msra.mxu0 %v2024
    %2037 = vmatpush.bf16.msra.mxu0 %v2023
    %2038 = vmatmul.bf16.gmra.mxu0 %v2028
    %v2039 = vpop.f32.mrf.mxu0
    %v2040 = vadd.f32 0.0, %v2039
    %v2041 = vpop.f32.mrf.mxu0
    %v2042 = vadd.f32 0.0, %v2041
    %2043 = vdwg.mxu0
    %v2048 = vunpack.c.l.b16 %v1761
    %v2049 = vunpack.c.l.b16 %v1762
    %v2050 = vunpack.c.l.b16 %v1763
    %v2051 = vunpack.c.l.b16 %v1764
    %v2052 = vpack.c.b16 %v2049, %v2048
    %v2053 = vpack.c.b16 %v2051, %v2050
    %v2057 = vsel %vm548, %v1883, 0
    %2059 = vmatpush.bf16.msra.mxu0 0
    %2060 = vmatpush.bf16.msra.mxu0 0
    %2061 = vmatpush.bf16.msra.mxu0 0
    %2062 = vmatpush.bf16.msra.mxu0 0
    %2063 = vmatpush.bf16.msra.mxu0 0
    %2064 = vmatpush.bf16.msra.mxu0 0
    %2065 = vmatpush.bf16.msra.mxu0 %v2053
    %2066 = vmatpush.bf16.msra.mxu0 %v2052
    %2067 = vmatmul.bf16.gmra.mxu0 %v2057
    %v2068 = vpop.f32.mrf.mxu0
    %v2069 = vadd.f32 %v2040, %v2068
    %v2070 = vpop.f32.mrf.mxu0
    %v2071 = vadd.f32 %v2042, %v2070
    %2072 = vdwg.mxu0
    %2073 = vrot.lane.b32.xlu0 %v1886, 64
    %v2074 = vpop.permute.xlu0 %2073
    %2075 = vrot.lane.b32.xlu0 %v1891, 64
    %v2076 = vpop.permute.xlu0 %2075
    %v2078 = vsel %vm548, %v2074, 0
    %v2081 = vsel %vm548, %v2076, 0
    %2083 = vmatpush.bf16.xpose.msra.mxu0 0
    %2084 = vmatpush.bf16.xpose.msra.mxu0 0
    %2085 = vmatpush.bf16.xpose.msra.mxu0 0
    %2086 = vmatpush.bf16.xpose.msra.mxu0 0
    %2087 = vmatpush.bf16.xpose.msra.mxu0 0
    %2088 = vmatpush.bf16.xpose.msra.mxu0 0
    %2089 = vmatpush.bf16.xpose.msra.mxu0 0
    %2090 = vmatpush.bf16.xpose.msra.mxu0 %v2081
    %2091 = vmatmul.bf16.gmra.mxu0 %v2078
    %v2092 = vpop.f32.mrf.mxu0
    %v2093 = vadd.f32 0.0, %v2092
    %v2094 = vpop.f32.mrf.mxu0
    %2095 = vdwg.mxu0
    %2096 = vrot.lane.b32.xlu0 %v1915, 64
    %v2097 = vpop.permute.xlu0 %2096
    %2098 = vrot.lane.b32.xlu0 %v1920, 64
    %v2099 = vpop.permute.xlu0 %2098
    %v2101 = vsel %vm548, %v2097, 0
    %v2104 = vsel %vm548, %v2099, 0
    %2106 = vmatpush.bf16.xpose.msra.mxu0 0
    %2107 = vmatpush.bf16.xpose.msra.mxu0 0
    %2108 = vmatpush.bf16.xpose.msra.mxu0 0
    %2109 = vmatpush.bf16.xpose.msra.mxu0 0
    %2110 = vmatpush.bf16.xpose.msra.mxu0 0
    %2111 = vmatpush.bf16.xpose.msra.mxu0 0
    %2112 = vmatpush.bf16.xpose.msra.mxu0 0
    %2113 = vmatpush.bf16.xpose.msra.mxu0 %v2104
    %2114 = vmatmul.bf16.gmra.mxu0 %v2101
    %v2115 = vpop.f32.mrf.mxu0
    %v2116 = vadd.f32 0.0, %v2115
    %v2117 = vpop.f32.mrf.mxu0
    %2118 = vdwg.mxu0
    %v2119 = vsel %vm587, %v2093, -inf
    %2120 = vmax.xlane.f32.xlu0 %v2119
    %v2121 = vpop.xlane.xlu0 %2120
    %v2122 = vsel %vm587, %v2116, -inf
    %2123 = vmax.xlane.f32.xlu0 %v2122
    %v2124 = vpop.xlane.xlu0 %2123
    %v2125 = vsub.f32 %v2093, %v2121
    %v2126 = vsub.f32 %v2116, %v2124
    %v2127 = vmul.f32 %v2125, 1.442695
    %v2128 = vpow.pop %v2127
    %v2129 = vmul.f32 %v2126, 1.442695
    %v2130 = vpow.pop %v2129
    %v2131 = vsel %vm587, %v2128, 0.0
    %2132 = vadd.xlane.f32.xlu0 %v2131
    %v2133 = vpop.xlane.xlu0 %2132
    %v2134 = vsel %vm587, %v2130, 0.0
    %2135 = vadd.xlane.f32.xlu0 %v2134
    %v2136 = vpop.xlane.xlu0 %2135
    %v2137 = vrcp.pop %v2133
    %v2138 = vrcp.pop %v2136
    %v2139 = vmul.f32 %v2128, %v2137
    %v2140 = vmul.f32 %v2130, %v2138
    %v2141 = vpack.c.bf16 %v2139, %v2139
    %v2142 = vpack.c.bf16 %v2140, %v2140
    %2143 = vrot.lane.b32.xlu0 %v1968, 64
    %v2144 = vpop.permute.xlu0 %2143
    %v2146 = vsel %vm587, %v2141, 0
    %v2149 = vsel %vm615, %v2144, 0
    %2151 = vmatpush.bf16.msra.mxu0 0
    %2152 = vmatpush.bf16.msra.mxu0 0
    %2153 = vmatpush.bf16.msra.mxu0 0
    %2154 = vmatpush.bf16.msra.mxu0 0
    %2155 = vmatpush.bf16.msra.mxu0 0
    %2156 = vmatpush.bf16.msra.mxu0 0
    %2157 = vmatpush.bf16.msra.mxu0 0
    %2158 = vmatpush.bf16.msra.mxu0 %v2149
    %2159 = vmatmul.bf16.gmra.mxu0 %v2146
    %v2160 = vpop.f32.mrf.mxu0
    %v2161 = vadd.f32 0.0, %v2160
    %v2162 = vpop.f32.mrf.mxu0
    %2163 = vdwg.mxu0
    %2164 = vrot.lane.b32.xlu0 %v1992, 64
    %v2165 = vpop.permute.xlu0 %2164
    %v2167 = vsel %vm587, %v2142, 0
    %v2170 = vsel %vm615, %v2165, 0
    %2172 = vmatpush.bf16.msra.mxu0 0
    %2173 = vmatpush.bf16.msra.mxu0 0
    %2174 = vmatpush.bf16.msra.mxu0 0
    %2175 = vmatpush.bf16.msra.mxu0 0
    %2176 = vmatpush.bf16.msra.mxu0 0
    %2177 = vmatpush.bf16.msra.mxu0 0
    %2178 = vmatpush.bf16.msra.mxu0 0
    %2179 = vmatpush.bf16.msra.mxu0 %v2170
    %2180 = vmatmul.bf16.gmra.mxu0 %v2167
    %v2181 = vpop.f32.mrf.mxu0
    %v2182 = vadd.f32 0.0, %v2181
    %v2183 = vpop.f32.mrf.mxu0
    %2184 = vdwg.mxu0
    %v2185 = vpack.c.bf16 %v2182, %v2161
    %v2190 = vunpack.c.l.b16 %v1769
    %v2191 = vunpack.c.l.b16 %v1770
    %v2192 = vunpack.c.l.b16 %v1771
    %v2193 = vunpack.c.l.b16 %v1772
    %v2194 = vpack.c.b16 %v2191, %v2190
    %v2195 = vpack.c.b16 %v2193, %v2192
    %v2199 = vsel %vm548, %v2185, 0
    %2201 = vmatpush.bf16.msra.mxu0 0
    %2202 = vmatpush.bf16.msra.mxu0 0
    %2203 = vmatpush.bf16.msra.mxu0 0
    %2204 = vmatpush.bf16.msra.mxu0 0
    %2205 = vmatpush.bf16.msra.mxu0 0
    %2206 = vmatpush.bf16.msra.mxu0 0
    %2207 = vmatpush.bf16.msra.mxu0 %v2195
    %2208 = vmatpush.bf16.msra.mxu0 %v2194
    %2209 = vmatmul.bf16.gmra.mxu0 %v2199
    %v2210 = vpop.f32.mrf.mxu0
    %v2211 = vadd.f32 0.0, %v2210
    %v2212 = vpop.f32.mrf.mxu0
    %v2213 = vadd.f32 0.0, %v2212
    %2214 = vdwg.mxu0
    %v2215 = vadd.f32 %v2069, %v2211
    %v2216 = vadd.f32 %v2071, %v2213
    %2217 = vrot.lane.b32.xlu0 %v1886, 32
    %v2218 = vpop.permute.xlu0 %2217
    %2219 = vrot.lane.b32.xlu0 %v1891, 32
    %v2220 = vpop.permute.xlu0 %2219
    %v2222 = vsel %vm548, %v2218, 0
    %v2225 = vsel %vm548, %v2220, 0
    %2227 = vmatpush.bf16.xpose.msra.mxu0 0
    %2228 = vmatpush.bf16.xpose.msra.mxu0 0
    %2229 = vmatpush.bf16.xpose.msra.mxu0 0
    %2230 = vmatpush.bf16.xpose.msra.mxu0 0
    %2231 = vmatpush.bf16.xpose.msra.mxu0 0
    %2232 = vmatpush.bf16.xpose.msra.mxu0 0
    %2233 = vmatpush.bf16.xpose.msra.mxu0 0
    %2234 = vmatpush.bf16.xpose.msra.mxu0 %v2225
    %2235 = vmatmul.bf16.gmra.mxu0 %v2222
    %v2236 = vpop.f32.mrf.mxu0
    %v2237 = vadd.f32 0.0, %v2236
    %v2238 = vpop.f32.mrf.mxu0
    %2239 = vdwg.mxu0
    %2240 = vrot.lane.b32.xlu0 %v1915, 32
    %v2241 = vpop.permute.xlu0 %2240
    %2242 = vrot.lane.b32.xlu0 %v1920, 32
    %v2243 = vpop.permute.xlu0 %2242
    %v2245 = vsel %vm548, %v2241, 0
    %v2248 = vsel %vm548, %v2243, 0
    %2250 = vmatpush.bf16.xpose.msra.mxu0 0
    %2251 = vmatpush.bf16.xpose.msra.mxu0 0
    %2252 = vmatpush.bf16.xpose.msra.mxu0 0
    %2253 = vmatpush.bf16.xpose.msra.mxu0 0
    %2254 = vmatpush.bf16.xpose.msra.mxu0 0
    %2255 = vmatpush.bf16.xpose.msra.mxu0 0
    %2256 = vmatpush.bf16.xpose.msra.mxu0 0
    %2257 = vmatpush.bf16.xpose.msra.mxu0 %v2248
    %2258 = vmatmul.bf16.gmra.mxu0 %v2245
    %v2259 = vpop.f32.mrf.mxu0
    %v2260 = vadd.f32 0.0, %v2259
    %v2261 = vpop.f32.mrf.mxu0
    %2262 = vdwg.mxu0
    %v2263 = vsel %vm587, %v2237, -inf
    %2264 = vmax.xlane.f32.xlu0 %v2263
    %v2265 = vpop.xlane.xlu0 %2264
    %v2266 = vsel %vm587, %v2260, -inf
    %2267 = vmax.xlane.f32.xlu0 %v2266
    %v2268 = vpop.xlane.xlu0 %2267
    %v2269 = vsub.f32 %v2237, %v2265
    %v2270 = vsub.f32 %v2260, %v2268
    %v2271 = vmul.f32 %v2269, 1.442695
    %v2272 = vpow.pop %v2271
    %v2273 = vmul.f32 %v2270, 1.442695
    %v2274 = vpow.pop %v2273
    %v2275 = vsel %vm587, %v2272, 0.0
    %2276 = vadd.xlane.f32.xlu0 %v2275
    %v2277 = vpop.xlane.xlu0 %2276
    %v2278 = vsel %vm587, %v2274, 0.0
    %2279 = vadd.xlane.f32.xlu0 %v2278
    %v2280 = vpop.xlane.xlu0 %2279
    %v2281 = vrcp.pop %v2277
    %v2282 = vrcp.pop %v2280
    %v2283 = vmul.f32 %v2272, %v2281
    %v2284 = vmul.f32 %v2274, %v2282
    %v2285 = vpack.c.bf16 %v2283, %v2283
    %v2286 = vpack.c.bf16 %v2284, %v2284
    %2287 = vrot.lane.b32.xlu0 %v1968, 32
    %v2288 = vpop.permute.xlu0 %2287
    %v2290 = vsel %vm587, %v2285, 0
    %v2293 = vsel %vm615, %v2288, 0
    %2295 = vmatpush.bf16.msra.mxu0 0
    %2296 = vmatpush.bf16.msra.mxu0 0
    %2297 = vmatpush.bf16.msra.mxu0 0
    %2298 = vmatpush.bf16.msra.mxu0 0
    %2299 = vmatpush.bf16.msra.mxu0 0
    %2300 = vmatpush.bf16.msra.mxu0 0
    %2301 = vmatpush.bf16.msra.mxu0 0
    %2302 = vmatpush.bf16.msra.mxu0 %v2293
    %2303 = vmatmul.bf16.gmra.mxu0 %v2290
    %v2304 = vpop.f32.mrf.mxu0
    %v2305 = vadd.f32 0.0, %v2304
    %v2306 = vpop.f32.mrf.mxu0
    %2307 = vdwg.mxu0
    %2308 = vrot.lane.b32.xlu0 %v1992, 32
    %v2309 = vpop.permute.xlu0 %2308
    %v2311 = vsel %vm587, %v2286, 0
    %v2314 = vsel %vm615, %v2309, 0
    %2316 = vmatpush.bf16.msra.mxu0 0
    %2317 = vmatpush.bf16.msra.mxu0 0
    %2318 = vmatpush.bf16.msra.mxu0 0
    %2319 = vmatpush.bf16.msra.mxu0 0
    %2320 = vmatpush.bf16.msra.mxu0 0
    %2321 = vmatpush.bf16.msra.mxu0 0
    %2322 = vmatpush.bf16.msra.mxu0 0
    %2323 = vmatpush.bf16.msra.mxu0 %v2314
    %2324 = vmatmul.bf16.gmra.mxu0 %v2311
    %v2325 = vpop.f32.mrf.mxu0
    %v2326 = vadd.f32 0.0, %v2325
    %v2327 = vpop.f32.mrf.mxu0
    %2328 = vdwg.mxu0
    %v2329 = vpack.c.bf16 %v2326, %v2305
    %v2334 = vunpack.c.l.b16 %v1773
    %v2335 = vunpack.c.l.b16 %v1774
    %v2336 = vunpack.c.l.b16 %v1775
    %v2337 = vunpack.c.l.b16 %v1776
    %v2338 = vpack.c.b16 %v2335, %v2334
    %v2339 = vpack.c.b16 %v2337, %v2336
    %v2343 = vsel %vm548, %v2329, 0
    %2345 = vmatpush.bf16.msra.mxu0 0
    %2346 = vmatpush.bf16.msra.mxu0 0
    %2347 = vmatpush.bf16.msra.mxu0 0
    %2348 = vmatpush.bf16.msra.mxu0 0
    %2349 = vmatpush.bf16.msra.mxu0 0
    %2350 = vmatpush.bf16.msra.mxu0 0
    %2351 = vmatpush.bf16.msra.mxu0 %v2339
    %2352 = vmatpush.bf16.msra.mxu0 %v2338
    %2353 = vmatmul.bf16.gmra.mxu0 %v2343
    %v2354 = vpop.f32.mrf.mxu0
    %v2355 = vadd.f32 0.0, %v2354
    %v2356 = vpop.f32.mrf.mxu0
    %v2357 = vadd.f32 0.0, %v2356
    %2358 = vdwg.mxu0
    %v2359 = vadd.f32 %v2215, %v2355
    %v2360 = vadd.f32 %v2216, %v2357
    %s2361 = scalar_lea.vmem [#allocation12], 1
    %v2362 = vld [vmem:[%s2361] sm:$0x1]
    %v2364 = vperm.slane %v2362, 0
    %v2366 = vadd.f32 %v2359, %v2364
    %v2367 = vadd.f32 %v2360, %v2364
    %v2368 = vadd.f32 %v1545, %v2366
    %v2369 = vadd.f32 %v1546, %v2367
    %s2370 = scalar_lea.vmem %s7, 1
    %v2371 = vld [vmem:[%s2370] sm:$0x1]
    %s2372 = scalar_lea.vmem %s8, 1
    %v2373 = vld [vmem:[%s2372] sm:$0x1]
    %2374 = vadd.xlane.f32.xlu0 %v2368
    %v2375 = vpop.xlane.xlu0 %2374
    %2376 = vadd.xlane.f32.xlu0 %v2369
    %v2377 = vpop.xlane.xlu0 %2376
    %v2378 = vmul.f32 %v2375, %v1149
    %v2379 = vmul.f32 %v2377, %v1149
    %v2380 = vsub.f32 %v2368, %v2378
    %v2381 = vsub.f32 %v2369, %v2379
    %v2382 = vmul.f32 %v2380, %v2380
    %v2383 = vmul.f32 %v2381, %v2381
    %2384 = vadd.xlane.f32.xlu0 %v2382
    %v2385 = vpop.xlane.xlu0 %2384
    %2386 = vadd.xlane.f32.xlu0 %v2383
    %v2387 = vpop.xlane.xlu0 %2386
    %v2388 = vmul.f32 %v2385, %v1149
    %v2389 = vmul.f32 %v2387, %v1149
    %v2390 = vadd.f32 %v2388, 1e-05
    %v2391 = vadd.f32 %v2389, 1e-05
    %v2392 = vrsqrt.pop %v2390
    %v2393 = vmul.f32 %v2392, %v2390
    %v2394 = vmul.f32 %v2393, %v2392
    %v2395 = vmul.f32 0.5, %v2394
    %v2396 = vsub.f32 1.5, %v2395
    %v2397 = vmul.f32 %v2392, %v2396
    %vm2398 = vweird.f32 %v2390
    %vm2399 = vweird.f32 %v2392
    %vm2400 = vmor %vm2398, %vm2399
    %v2401 = vsel %vm2400, %v2392, %v2397
    %v2402 = vrsqrt.pop %v2391
    %v2403 = vmul.f32 %v2402, %v2391
    %v2404 = vmul.f32 %v2403, %v2402
    %v2405 = vmul.f32 0.5, %v2404
    %v2406 = vsub.f32 1.5, %v2405
    %v2407 = vmul.f32 %v2402, %v2406
    %vm2408 = vweird.f32 %v2391
    %vm2409 = vweird.f32 %v2402
    %vm2410 = vmor %vm2408, %vm2409
    %v2411 = vsel %vm2410, %v2402, %v2407
    %v2412 = vmul.f32 %v2380, %v2401
    %v2413 = vmul.f32 %v2381, %v2411
    %v2415 = vperm.slane %v2371, 0
    %v2417 = vmul.f32 %v2412, %v2415
    %v2418 = vmul.f32 %v2413, %v2415
    %v2420 = vperm.slane %v2373, 0
    %v2422 = vadd.f32 %v2417, %v2420
    %v2423 = vadd.f32 %v2418, %v2420
    %s2424 = scalar_lea.vmem [#allocation13], 128
    %v2425 = vld [vmem:[%s2424] sm:$0xff]
    %v2426 = vld [vmem:[%s2424 + $0x8] sm:$0xff]
    %v2427 = vld [vmem:[%s2424 + $0x10] sm:$0xff]
    %v2428 = vld [vmem:[%s2424 + $0x18] sm:$0xff]
    %v2429 = vld [vmem:[%s2424 + $0x20] sm:$0xff]
    %v2430 = vld [vmem:[%s2424 + $0x28] sm:$0xff]
    %v2431 = vld [vmem:[%s2424 + $0x30] sm:$0xff]
    %v2432 = vld [vmem:[%s2424 + $0x38] sm:$0xff]
    %v2433 = vld [vmem:[%s2424 + $0x40] sm:$0xff]
    %v2434 = vld [vmem:[%s2424 + $0x48] sm:$0xff]
    %v2435 = vld [vmem:[%s2424 + $0x50] sm:$0xff]
    %v2436 = vld [vmem:[%s2424 + $0x58] sm:$0xff]
    %v2437 = vld [vmem:[%s2424 + $0x60] sm:$0xff]
    %v2438 = vld [vmem:[%s2424 + $0x68] sm:$0xff]
    %v2439 = vld [vmem:[%s2424 + $0x70] sm:$0xff]
    %v2440 = vld [vmem:[%s2424 + $0x78] sm:$0xff]
    %v2441 = vpack.c.bf16 %v2423, %v2422
    %s2442 = scalar_lea.vmem %s10, 2
    %v2443 = vld [vmem:[%s2442] sm:$0x3]
    %v2445 = vperm.slane %v2443, 0
    %v2446 = vperm.slane %v2443, 1
    %v2465 = vunpack.c.l.b16 %v2425
    %v2466 = vunpack.c.h.b16 %v2425
    %v2467 = vunpack.c.l.b16 %v2426
    %v2468 = vunpack.c.h.b16 %v2426
    %v2469 = vunpack.c.l.b16 %v2427
    %v2470 = vunpack.c.h.b16 %v2427
    %v2471 = vunpack.c.l.b16 %v2428
    %v2472 = vunpack.c.h.b16 %v2428
    %v2473 = vunpack.c.l.b16 %v2429
    %v2474 = vunpack.c.h.b16 %v2429
    %v2475 = vunpack.c.l.b16 %v2430
    %v2476 = vunpack.c.h.b16 %v2430
    %v2477 = vunpack.c.l.b16 %v2431
    %v2478 = vunpack.c.h.b16 %v2431
    %v2479 = vunpack.c.l.b16 %v2432
    %v2480 = vunpack.c.h.b16 %v2432
    %v2481 = vunpack.c.l.b16 %v2433
    %v2482 = vunpack.c.h.b16 %v2433
    %v2483 = vunpack.c.l.b16 %v2434
    %v2484 = vunpack.c.h.b16 %v2434
    %v2485 = vunpack.c.l.b16 %v2435
    %v2486 = vunpack.c.h.b16 %v2435
    %v2487 = vunpack.c.l.b16 %v2436
    %v2488 = vunpack.c.h.b16 %v2436
    %v2489 = vunpack.c.l.b16 %v2437
    %v2490 = vunpack.c.h.b16 %v2437
    %v2491 = vunpack.c.l.b16 %v2438
    %v2492 = vunpack.c.h.b16 %v2438
    %v2493 = vunpack.c.l.b16 %v2439
    %v2494 = vunpack.c.h.b16 %v2439
    %v2495 = vunpack.c.l.b16 %v2440
    %v2496 = vunpack.c.h.b16 %v2440
    %v2497 = vpack.c.b16 %v2467, %v2465
    %v2498 = vpack.c.b16 %v2468, %v2466
    %v2499 = vpack.c.b16 %v2471, %v2469
    %v2500 = vpack.c.b16 %v2472, %v2470
    %v2501 = vpack.c.b16 %v2475, %v2473
    %v2502 = vpack.c.b16 %v2476, %v2474
    %v2503 = vpack.c.b16 %v2479, %v2477
    %v2504 = vpack.c.b16 %v2480, %v2478
    %v2505 = vpack.c.b16 %v2483, %v2481
    %v2506 = vpack.c.b16 %v2484, %v2482
    %v2507 = vpack.c.b16 %v2487, %v2485
    %v2508 = vpack.c.b16 %v2488, %v2486
    %v2509 = vpack.c.b16 %v2491, %v2489
    %v2510 = vpack.c.b16 %v2492, %v2490
    %v2511 = vpack.c.b16 %v2495, %v2493
    %v2512 = vpack.c.b16 %v2496, %v2494
    %2529 = vmatpush.bf16.msra.mxu0 %v2511
    %2530 = vmatpush.bf16.msra.mxu0 %v2509
    %2531 = vmatpush.bf16.msra.mxu0 %v2507
    %2532 = vmatpush.bf16.msra.mxu0 %v2505
    %2533 = vmatpush.bf16.msra.mxu0 %v2503
    %2534 = vmatpush.bf16.msra.mxu0 %v2501
    %2535 = vmatpush.bf16.msra.mxu0 %v2499
    %2536 = vmatpush.bf16.msra.mxu0 %v2497
    %2537 = vmatmul.bf16.gmra.mxu0 %v2441
    %v2538 = vpop.f32.mrf.mxu0
    %v2539 = vadd.f32 %v2445, %v2538
    %v2540 = vpop.f32.mrf.mxu0
    %v2541 = vadd.f32 %v2445, %v2540
    %2542 = vdwg.mxu0
    %2543 = vmatpush.bf16.msra.mxu0 %v2512
    %2544 = vmatpush.bf16.msra.mxu0 %v2510
    %2545 = vmatpush.bf16.msra.mxu0 %v2508
    %2546 = vmatpush.bf16.msra.mxu0 %v2506
    %2547 = vmatpush.bf16.msra.mxu0 %v2504
    %2548 = vmatpush.bf16.msra.mxu0 %v2502
    %2549 = vmatpush.bf16.msra.mxu0 %v2500
    %2550 = vmatpush.bf16.msra.mxu0 %v2498
    %2551 = vmatmul.bf16.gmra.mxu0 %v2441
    %v2552 = vpop.f32.mrf.mxu0
    %v2553 = vadd.f32 %v2446, %v2552
    %v2554 = vpop.f32.mrf.mxu0
    %v2555 = vadd.f32 %v2446, %v2554
    %2556 = vdwg.mxu0
    %v2557 = vmax.f32 %v2539, 0.0
    %v2558 = vmax.f32 %v2553, 0.0
    %v2559 = vmax.f32 %v2541, 0.0
    %v2560 = vmax.f32 %v2555, 0.0
    %s2561 = scalar_lea.vmem [#allocation15], 128
    %v2562 = vld [vmem:[%s2561] sm:$0xf]
    %v2563 = vld [vmem:[%s2561 + $0x4] sm:$0xf]
    %v2564 = vld [vmem:[%s2561 + $0x8] sm:$0xf]
    %v2565 = vld [vmem:[%s2561 + $0xc] sm:$0xf]
    %v2566 = vld [vmem:[%s2561 + $0x10] sm:$0xf]
    %v2567 = vld [vmem:[%s2561 + $0x14] sm:$0xf]
    %v2568 = vld [vmem:[%s2561 + $0x18] sm:$0xf]
    %v2569 = vld [vmem:[%s2561 + $0x1c] sm:$0xf]
    %v2570 = vld [vmem:[%s2561 + $0x20] sm:$0xf]
    %v2571 = vld [vmem:[%s2561 + $0x24] sm:$0xf]
    %v2572 = vld [vmem:[%s2561 + $0x28] sm:$0xf]
    %v2573 = vld [vmem:[%s2561 + $0x2c] sm:$0xf]
    %v2574 = vld [vmem:[%s2561 + $0x30] sm:$0xf]
    %v2575 = vld [vmem:[%s2561 + $0x34] sm:$0xf]
    %v2576 = vld [vmem:[%s2561 + $0x38] sm:$0xf]
    %v2577 = vld [vmem:[%s2561 + $0x3c] sm:$0xf]
    %v2578 = vld [vmem:[%s2561 + $0x40] sm:$0xf]
    %v2579 = vld [vmem:[%s2561 + $0x44] sm:$0xf]
    %v2580 = vld [vmem:[%s2561 + $0x48] sm:$0xf]
    %v2581 = vld [vmem:[%s2561 + $0x4c] sm:$0xf]
    %v2582 = vld [vmem:[%s2561 + $0x50] sm:$0xf]
    %v2583 = vld [vmem:[%s2561 + $0x54] sm:$0xf]
    %v2584 = vld [vmem:[%s2561 + $0x58] sm:$0xf]
    %v2585 = vld [vmem:[%s2561 + $0x5c] sm:$0xf]
    %v2586 = vld [vmem:[%s2561 + $0x60] sm:$0xf]
    %v2587 = vld [vmem:[%s2561 + $0x64] sm:$0xf]
    %v2588 = vld [vmem:[%s2561 + $0x68] sm:$0xf]
    %v2589 = vld [vmem:[%s2561 + $0x6c] sm:$0xf]
    %v2590 = vld [vmem:[%s2561 + $0x70] sm:$0xf]
    %v2591 = vld [vmem:[%s2561 + $0x74] sm:$0xf]
    %v2592 = vld [vmem:[%s2561 + $0x78] sm:$0xf]
    %v2593 = vld [vmem:[%s2561 + $0x7c] sm:$0xf]
    %v2594 = vpack.c.bf16 %v2559, %v2557
    %v2595 = vpack.c.bf16 %v2560, %v2558
    %s2596 = scalar_lea.vmem [#allocation16], 1
    %v2597 = vld [vmem:[%s2596] sm:$0x1]
    %v2599 = vperm.slane %v2597, 0
    %v2633 = vunpack.c.l.b16 %v2562
    %v2634 = vunpack.c.l.b16 %v2563
    %v2635 = vunpack.c.l.b16 %v2564
    %v2636 = vunpack.c.l.b16 %v2565
    %v2637 = vunpack.c.l.b16 %v2566
    %v2638 = vunpack.c.l.b16 %v2567
    %v2639 = vunpack.c.l.b16 %v2568
    %v2640 = vunpack.c.l.b16 %v2569
    %v2641 = vunpack.c.l.b16 %v2570
    %v2642 = vunpack.c.l.b16 %v2571
    %v2643 = vunpack.c.l.b16 %v2572
    %v2644 = vunpack.c.l.b16 %v2573
    %v2645 = vunpack.c.l.b16 %v2574
    %v2646 = vunpack.c.l.b16 %v2575
    %v2647 = vunpack.c.l.b16 %v2576
    %v2648 = vunpack.c.l.b16 %v2577
    %v2649 = vunpack.c.l.b16 %v2578
    %v2650 = vunpack.c.l.b16 %v2579
    %v2651 = vunpack.c.l.b16 %v2580
    %v2652 = vunpack.c.l.b16 %v2581
    %v2653 = vunpack.c.l.b16 %v2582
    %v2654 = vunpack.c.l.b16 %v2583
    %v2655 = vunpack.c.l.b16 %v2584
    %v2656 = vunpack.c.l.b16 %v2585
    %v2657 = vunpack.c.l.b16 %v2586
    %v2658 = vunpack.c.l.b16 %v2587
    %v2659 = vunpack.c.l.b16 %v2588
    %v2660 = vunpack.c.l.b16 %v2589
    %v2661 = vunpack.c.l.b16 %v2590
    %v2662 = vunpack.c.l.b16 %v2591
    %v2663 = vunpack.c.l.b16 %v2592
    %v2664 = vunpack.c.l.b16 %v2593
    %v2665 = vpack.c.b16 %v2634, %v2633
    %v2666 = vpack.c.b16 %v2636, %v2635
    %v2667 = vpack.c.b16 %v2638, %v2637
    %v2668 = vpack.c.b16 %v2640, %v2639
    %v2669 = vpack.c.b16 %v2642, %v2641
    %v2670 = vpack.c.b16 %v2644, %v2643
    %v2671 = vpack.c.b16 %v2646, %v2645
    %v2672 = vpack.c.b16 %v2648, %v2647
    %v2673 = vpack.c.b16 %v2650, %v2649
    %v2674 = vpack.c.b16 %v2652, %v2651
    %v2675 = vpack.c.b16 %v2654, %v2653
    %v2676 = vpack.c.b16 %v2656, %v2655
    %v2677 = vpack.c.b16 %v2658, %v2657
    %v2678 = vpack.c.b16 %v2660, %v2659
    %v2679 = vpack.c.b16 %v2662, %v2661
    %v2680 = vpack.c.b16 %v2664, %v2663
    %2697 = vmatpush.bf16.msra.mxu0 %v2672
    %2698 = vmatpush.bf16.msra.mxu0 %v2671
    %2699 = vmatpush.bf16.msra.mxu0 %v2670
    %2700 = vmatpush.bf16.msra.mxu0 %v2669
    %2701 = vmatpush.bf16.msra.mxu0 %v2668
    %2702 = vmatpush.bf16.msra.mxu0 %v2667
    %2703 = vmatpush.bf16.msra.mxu0 %v2666
    %2704 = vmatpush.bf16.msra.mxu0 %v2665
    %2705 = vmatmul.bf16.gmra.mxu0 %v2594
    %v2706 = vpop.f32.mrf.mxu0
    %v2707 = vadd.f32 %v2599, %v2706
    %v2708 = vpop.f32.mrf.mxu0
    %v2709 = vadd.f32 %v2599, %v2708
    %2710 = vdwg.mxu0
    %2711 = vmatpush.bf16.msra.mxu0 %v2680
    %2712 = vmatpush.bf16.msra.mxu0 %v2679
    %2713 = vmatpush.bf16.msra.mxu0 %v2678
    %2714 = vmatpush.bf16.msra.mxu0 %v2677
    %2715 = vmatpush.bf16.msra.mxu0 %v2676
    %2716 = vmatpush.bf16.msra.mxu0 %v2675
    %2717 = vmatpush.bf16.msra.mxu0 %v2674
    %2718 = vmatpush.bf16.msra.mxu0 %v2673
    %2719 = vmatmul.bf16.gmra.mxu0 %v2595
    %v2720 = vpop.f32.mrf.mxu0
    %v2721 = vadd.f32 %v2707, %v2720
    %v2722 = vpop.f32.mrf.mxu0
    %v2723 = vadd.f32 %v2709, %v2722
    %2724 = vdwg.mxu0
    %v2725 = vadd.f32 %v2422, %v2721
    %v2726 = vadd.f32 %v2423, %v2723
    %s2727 = scalar_lea.vmem %s13, 1
    %v2728 = vld [vmem:[%s2727] sm:$0x1]
    %s2729 = scalar_lea.vmem %s14, 1
    %v2730 = vld [vmem:[%s2729] sm:$0x1]
    %2731 = vadd.xlane.f32.xlu0 %v2725
    %v2732 = vpop.xlane.xlu0 %2731
    %2733 = vadd.xlane.f32.xlu0 %v2726
    %v2734 = vpop.xlane.xlu0 %2733
    %v2735 = vmul.f32 %v2732, %v1149
    %v2736 = vmul.f32 %v2734, %v1149
    %v2737 = vsub.f32 %v2725, %v2735
    %v2738 = vsub.f32 %v2726, %v2736
    %v2739 = vmul.f32 %v2737, %v2737
    %v2740 = vmul.f32 %v2738, %v2738
    %2741 = vadd.xlane.f32.xlu0 %v2739
    %v2742 = vpop.xlane.xlu0 %2741
    %2743 = vadd.xlane.f32.xlu0 %v2740
    %v2744 = vpop.xlane.xlu0 %2743
    %v2745 = vmul.f32 %v2742, %v1149
    %v2746 = vmul.f32 %v2744, %v1149
    %v2747 = vadd.f32 %v2745, 1e-05
    %v2748 = vadd.f32 %v2746, 1e-05
    %v2749 = vrsqrt.pop %v2747
    %v2750 = vmul.f32 %v2749, %v2747
    %v2751 = vmul.f32 %v2750, %v2749
    %v2752 = vmul.f32 0.5, %v2751
    %v2753 = vsub.f32 1.5, %v2752
    %v2754 = vmul.f32 %v2749, %v2753
    %vm2755 = vweird.f32 %v2747
    %vm2756 = vweird.f32 %v2749
    %vm2757 = vmor %vm2755, %vm2756
    %v2758 = vsel %vm2757, %v2749, %v2754
    %v2759 = vrsqrt.pop %v2748
    %v2760 = vmul.f32 %v2759, %v2748
    %v2761 = vmul.f32 %v2760, %v2759
    %v2762 = vmul.f32 0.5, %v2761
    %v2763 = vsub.f32 1.5, %v2762
    %v2764 = vmul.f32 %v2759, %v2763
    %vm2765 = vweird.f32 %v2748
    %vm2766 = vweird.f32 %v2759
    %vm2767 = vmor %vm2765, %vm2766
    %v2768 = vsel %vm2767, %v2759, %v2764
    %v2769 = vmul.f32 %v2737, %v2758
    %v2770 = vmul.f32 %v2738, %v2768
    %v2772 = vperm.slane %v2728, 0
    %v2774 = vmul.f32 %v2769, %v2772
    %v2775 = vmul.f32 %v2770, %v2772
    %v2777 = vperm.slane %v2730, 0
    %v2779 = vadd.f32 %v2774, %v2777
    %v2780 = vadd.f32 %v2775, %v2777
    %v2781 = vld [vmem:[#allocation18] sm:$0xff]
    %v2782 = vld [vmem:[#allocation18 + $0x8] sm:$0xff]
    %v2783 = vld [vmem:[#allocation18 + $0x10] sm:$0xff]
    %v2784 = vld [vmem:[#allocation18 + $0x18] sm:$0xff]
    %v2785 = vld [vmem:[#allocation18 + $0x20] sm:$0xff]
    %v2786 = vld [vmem:[#allocation18 + $0x28] sm:$0xff]
    %v2787 = vld [vmem:[#allocation18 + $0x30] sm:$0xff]
    %v2788 = vld [vmem:[#allocation18 + $0x38] sm:$0xff]
    %v2789 = vld [vmem:[#allocation18 + $0x40] sm:$0xff]
    %v2790 = vld [vmem:[#allocation18 + $0x48] sm:$0xff]
    %v2791 = vld [vmem:[#allocation18 + $0x50] sm:$0xff]
    %v2792 = vld [vmem:[#allocation18 + $0x58] sm:$0xff]
    %v2793 = vld [vmem:[#allocation18 + $0x60] sm:$0xff]
    %v2794 = vld [vmem:[#allocation18 + $0x68] sm:$0xff]
    %v2795 = vld [vmem:[#allocation18 + $0x70] sm:$0xff]
    %v2796 = vld [vmem:[#allocation18 + $0x78] sm:$0xff]
    %v2797 = vld [vmem:[#allocation18 + $0x80] sm:$0xff]
    %v2798 = vld [vmem:[#allocation18 + $0x88] sm:$0xff]
    %v2799 = vld [vmem:[#allocation18 + $0x90] sm:$0xff]
    %v2800 = vld [vmem:[#allocation18 + $0x98] sm:$0xff]
    %v2801 = vld [vmem:[#allocation18 + $0xa0] sm:$0xff]
    %v2802 = vld [vmem:[#allocation18 + $0xa8] sm:$0xff]
    %v2803 = vld [vmem:[#allocation18 + $0xb0] sm:$0xff]
    %v2804 = vld [vmem:[#allocation18 + $0xb8] sm:$0xff]
    %v2805 = vld [vmem:[#allocation18 + $0xc0] sm:$0xff]
    %v2806 = vld [vmem:[#allocation18 + $0xc8] sm:$0xff]
    %v2807 = vld [vmem:[#allocation18 + $0xd0] sm:$0xff]
    %v2808 = vld [vmem:[#allocation18 + $0xd8] sm:$0xff]
    %v2809 = vld [vmem:[#allocation18 + $0xe0] sm:$0xff]
    %v2810 = vld [vmem:[#allocation18 + $0xe8] sm:$0xff]
    %v2811 = vld [vmem:[#allocation18 + $0xf0] sm:$0xff]
    %v2812 = vld [vmem:[#allocation18 + $0xf8] sm:$0xff]
    %v2813 = vpack.c.bf16 %v2780, %v2779
    %v2814 = vld [vmem:[#allocation19] sm:$0xf]
    %v2816 = vperm.slane %v2814, 0
    %v2817 = vperm.slane %v2814, 1
    %v2818 = vperm.slane %v2814, 2
    %v2819 = vperm.slane %v2814, 3
    %v2856 = vunpack.c.l.b16 %v2781
    %v2857 = vunpack.c.h.b16 %v2781
    %v2858 = vunpack.c.l.b16 %v2782
    %v2859 = vunpack.c.h.b16 %v2782
    %v2860 = vunpack.c.l.b16 %v2783
    %v2861 = vunpack.c.h.b16 %v2783
    %v2862 = vunpack.c.l.b16 %v2784
    %v2863 = vunpack.c.h.b16 %v2784
    %v2864 = vunpack.c.l.b16 %v2785
    %v2865 = vunpack.c.h.b16 %v2785
    %v2866 = vunpack.c.l.b16 %v2786
    %v2867 = vunpack.c.h.b16 %v2786
    %v2868 = vunpack.c.l.b16 %v2787
    %v2869 = vunpack.c.h.b16 %v2787
    %v2870 = vunpack.c.l.b16 %v2788
    %v2871 = vunpack.c.h.b16 %v2788
    %v2872 = vunpack.c.l.b16 %v2789
    %v2873 = vunpack.c.h.b16 %v2789
    %v2874 = vunpack.c.l.b16 %v2790
    %v2875 = vunpack.c.h.b16 %v2790
    %v2876 = vunpack.c.l.b16 %v2791
    %v2877 = vunpack.c.h.b16 %v2791
    %v2878 = vunpack.c.l.b16 %v2792
    %v2879 = vunpack.c.h.b16 %v2792
    %v2880 = vunpack.c.l.b16 %v2793
    %v2881 = vunpack.c.h.b16 %v2793
    %v2882 = vunpack.c.l.b16 %v2794
    %v2883 = vunpack.c.h.b16 %v2794
    %v2884 = vunpack.c.l.b16 %v2795
    %v2885 = vunpack.c.h.b16 %v2795
    %v2886 = vunpack.c.l.b16 %v2796
    %v2887 = vunpack.c.h.b16 %v2796
    %v2888 = vunpack.c.l.b16 %v2797
    %v2889 = vunpack.c.h.b16 %v2797
    %v2890 = vunpack.c.l.b16 %v2798
    %v2891 = vunpack.c.h.b16 %v2798
    %v2892 = vunpack.c.l.b16 %v2799
    %v2893 = vunpack.c.h.b16 %v2799
    %v2894 = vunpack.c.l.b16 %v2800
    %v2895 = vunpack.c.h.b16 %v2800
    %v2896 = vunpack.c.l.b16 %v2801
    %v2897 = vunpack.c.h.b16 %v2801
    %v2898 = vunpack.c.l.b16 %v2802
    %v2899 = vunpack.c.h.b16 %v2802
    %v2900 = vunpack.c.l.b16 %v2803
    %v2901 = vunpack.c.h.b16 %v2803
    %v2902 = vunpack.c.l.b16 %v2804
    %v2903 = vunpack.c.h.b16 %v2804
    %v2904 = vunpack.c.l.b16 %v2805
    %v2905 = vunpack.c.h.b16 %v2805
    %v2906 = vunpack.c.l.b16 %v2806
    %v2907 = vunpack.c.h.b16 %v2806
    %v2908 = vunpack.c.l.b16 %v2807
    %v2909 = vunpack.c.h.b16 %v2807
    %v2910 = vunpack.c.l.b16 %v2808
    %v2911 = vunpack.c.h.b16 %v2808
    %v2912 = vunpack.c.l.b16 %v2809
    %v2913 = vunpack.c.h.b16 %v2809
    %v2914 = vunpack.c.l.b16 %v2810
    %v2915 = vunpack.c.h.b16 %v2810
    %v2916 = vunpack.c.l.b16 %v2811
    %v2917 = vunpack.c.h.b16 %v2811
    %v2918 = vunpack.c.l.b16 %v2812
    %v2919 = vunpack.c.h.b16 %v2812
    %v2920 = vpack.c.b16 %v2860, %v2856
    %v2921 = vpack.c.b16 %v2861, %v2857
    %v2922 = vpack.c.b16 %v2862, %v2858
    %v2923 = vpack.c.b16 %v2863, %v2859
    %v2924 = vpack.c.b16 %v2868, %v2864
    %v2925 = vpack.c.b16 %v2869, %v2865
    %v2926 = vpack.c.b16 %v2870, %v2866
    %v2927 = vpack.c.b16 %v2871, %v2867
    %v2928 = vpack.c.b16 %v2876, %v2872
    %v2929 = vpack.c.b16 %v2877, %v2873
    %v2930 = vpack.c.b16 %v2878, %v2874
    %v2931 = vpack.c.b16 %v2879, %v2875
    %v2932 = vpack.c.b16 %v2884, %v2880
    %v2933 = vpack.c.b16 %v2885, %v2881
    %v2934 = vpack.c.b16 %v2886, %v2882
    %v2935 = vpack.c.b16 %v2887, %v2883
    %v2936 = vpack.c.b16 %v2892, %v2888
    %v2937 = vpack.c.b16 %v2893, %v2889
    %v2938 = vpack.c.b16 %v2894, %v2890
    %v2939 = vpack.c.b16 %v2895, %v2891
    %v2940 = vpack.c.b16 %v2900, %v2896
    %v2941 = vpack.c.b16 %v2901, %v2897
    %v2942 = vpack.c.b16 %v2902, %v2898
    %v2943 = vpack.c.b16 %v2903, %v2899
    %v2944 = vpack.c.b16 %v2908, %v2904
    %v2945 = vpack.c.b16 %v2909, %v2905
    %v2946 = vpack.c.b16 %v2910, %v2906
    %v2947 = vpack.c.b16 %v2911, %v2907
    %v2948 = vpack.c.b16 %v2916, %v2912
    %v2949 = vpack.c.b16 %v2917, %v2913
    %v2950 = vpack.c.b16 %v2918, %v2914
    %v2951 = vpack.c.b16 %v2919, %v2915
    %2984 = vmatpush.bf16.msra.mxu0 %v2948
    %2985 = vmatpush.bf16.msra.mxu0 %v2944
    %2986 = vmatpush.bf16.msra.mxu0 %v2940
    %2987 = vmatpush.bf16.msra.mxu0 %v2936
    %2988 = vmatpush.bf16.msra.mxu0 %v2932
    %2989 = vmatpush.bf16.msra.mxu0 %v2928
    %2990 = vmatpush.bf16.msra.mxu0 %v2924
    %2991 = vmatpush.bf16.msra.mxu0 %v2920
    %2992 = vmatmul.bf16.gmra.mxu0 %v2813
    %v2993 = vpop.f32.mrf.mxu0
    %v2994 = vadd.f32 %v2816, %v2993
    %v2995 = vpop.f32.mrf.mxu0
    %v2996 = vadd.f32 %v2816, %v2995
    %2997 = vdwg.mxu0
    %2998 = vmatpush.bf16.msra.mxu0 %v2949
    %2999 = vmatpush.bf16.msra.mxu0 %v2945
    %3000 = vmatpush.bf16.msra.mxu0 %v2941
    %3001 = vmatpush.bf16.msra.mxu0 %v2937
    %3002 = vmatpush.bf16.msra.mxu0 %v2933
    %3003 = vmatpush.bf16.msra.mxu0 %v2929
    %3004 = vmatpush.bf16.msra.mxu0 %v2925
    %3005 = vmatpush.bf16.msra.mxu0 %v2921
    %3006 = vmatmul.bf16.gmra.mxu0 %v2813
    %v3007 = vpop.f32.mrf.mxu0
    %v3008 = vadd.f32 %v2817, %v3007
    %v3009 = vpop.f32.mrf.mxu0
    %v3010 = vadd.f32 %v2817, %v3009
    %3011 = vdwg.mxu0
    %3012 = vmatpush.bf16.msra.mxu0 %v2950
    %3013 = vmatpush.bf16.msra.mxu0 %v2946
    %3014 = vmatpush.bf16.msra.mxu0 %v2942
    %3015 = vmatpush.bf16.msra.mxu0 %v2938
    %3016 = vmatpush.bf16.msra.mxu0 %v2934
    %3017 = vmatpush.bf16.msra.mxu0 %v2930
    %3018 = vmatpush.bf16.msra.mxu0 %v2926
    %3019 = vmatpush.bf16.msra.mxu0 %v2922
    %3020 = vmatmul.bf16.gmra.mxu0 %v2813
    %v3021 = vpop.f32.mrf.mxu0
    %v3022 = vadd.f32 %v2818, %v3021
    %v3023 = vpop.f32.mrf.mxu0
    %v3024 = vadd.f32 %v2818, %v3023
    %3025 = vdwg.mxu0
    %3026 = vmatpush.bf16.msra.mxu0 %v2951
    %3027 = vmatpush.bf16.msra.mxu0 %v2947
    %3028 = vmatpush.bf16.msra.mxu0 %v2943
    %3029 = vmatpush.bf16.msra.mxu0 %v2939
    %3030 = vmatpush.bf16.msra.mxu0 %v2935
    %3031 = vmatpush.bf16.msra.mxu0 %v2931
    %3032 = vmatpush.bf16.msra.mxu0 %v2927
    %3033 = vmatpush.bf16.msra.mxu0 %v2923
    %3034 = vmatmul.bf16.gmra.mxu0 %v2813
    %v3035 = vpop.f32.mrf.mxu0
    %v3036 = vadd.f32 %v2819, %v3035
    %v3037 = vpop.f32.mrf.mxu0
    %v3038 = vadd.f32 %v2819, %v3037
    %3039 = vdwg.mxu0
    %3040 = vst [vmem:[%s17] sm:$0xff] %v2994
    %3041 = vst [vmem:[%s17 + $0x8] sm:$0xff] %v3008
    %3042 = vst [vmem:[%s17 + $0x10] sm:$0xff] %v3022
    %3043 = vst [vmem:[%s17 + $0x18] sm:$0xff] %v3036
    %3044 = vst [vmem:[%s17 + $0x20] sm:$0xff] %v2996
    %3045 = vst [vmem:[%s17 + $0x28] sm:$0xff] %v3010
    %3046 = vst [vmem:[%s17 + $0x30] sm:$0xff] %v3024
    %3047 = vst [vmem:[%s17 + $0x38] sm:$0xff] %v3038
    // Predicated region
    $region106: #{transformer_forward.1} parent=1 // pred_check
      _
    $region107: #{transformer_forward.1} parent=1 // pred_check_branch
      %3049 = sbr.rel (0) target = $region109
    $region108: #{transformer_forward.1} parent=1 // pred_region
      _
    $region109: #{transformer_forward.1} parent=1 // pred_fallthru
      _
    // Predicated region
    $region110: #{transformer_forward.1} parent=1 // pred_check
      _
    $region111: #{transformer_forward.1} parent=1 // pred_check_branch
      %3051 = sbr.rel (0) target = $region113
    $region112: #{transformer_forward.1} parent=1 // pred_region
      _
    $region113: #{transformer_forward.1} parent=1 // pred_fallthru
      _
    %3052 = vsyncpa [#allocation6], 1
    %3053 = vsyncpa [#allocation8], 1
    %3054 = vsyncpa [#allocation11], 1
    %3055 = vsyncpa [#allocation14], 1
    %3056 = vsyncpa [#allocation17], 1
    %3057 = vsyncpa [#allocation20], 1

</llo_original>
